<compile_context>
chip_gen: v7x
topology: tpu7x:2x2x1
jax: 0.10.0
libtpu: 0.0.40
codegen_flags: <defaults>
</compile_context>

<pallas_src>
import functools
import math

import jax
import jax.numpy as jnp
from jax.experimental import pallas as pl
from jax.experimental.pallas import tpu as pltpu

_BF16 = jnp.bfloat16
_F32 = jnp.float32


# ----------------------------------------------------------------------------- tiling helpers

def _round_up(x, m):
    return (x + m - 1) // m * m


def _choose_row_tile(m, pref=512):
    """Row (second-minor) tile: multiple of 8, capped at `pref`, padding waste <= 8 rows/tile."""
    m8 = _round_up(m, 8)
    if m8 <= pref:
        return m8
    n_tiles = -(-m8 // pref)                   # ceil
    return _round_up(-(-m8 // n_tiles), 8)     # ceil(m8/n_tiles) rounded to 8


def _col_tile(n, pref=512):
    """Output-column (lane) tile: multiple of 128 (or full)."""
    if n <= pref:
        return n
    for c in (pref, 512, 256, 128):
        if c <= pref and n % c == 0:
            return c
    return n


def _entity_tiles(n, dh, h, r, budget=40 << 20):
    """(padded_N, row_tile, k_tile) for the entity/RGCN kernel under a v7x-safe VMEM budget."""
    if n <= 128:
        npad = _round_up(n, 16)     # 16: keeps the (R,tm,tk)->(R*tm,tk) merge layout-free for bf16
        return npad, npad, npad
    cap = _round_up(n, 128)

    def footprint(tm, tk):
        return (2 * r * tm * tk * 2          # A tile, double-buffered, bf16
                + 2 * (tm + tk) * dh * 2     # x row/contraction tiles
                + r * tm * dh * 4            # f32 accumulator scratch
                + 2 * tm * h * 2)            # bf16 output tile

    for tk in (512, 256, 128):               # big K feeds the 256-wide MXU on v6e/v7x
        if tk > cap:
            continue
        for tm in (256, 512, 128):           # tm=256 preferred (v7x 64 MiB VMEM)
            if tm > cap:
                continue
            if footprint(tm, tk) <= budget:
                return _round_up(n, max(tm, tk)), tm, tk
    return _round_up(n, 128), 128, 128


def _pad_rows(x, mp):
    m = x.shape[0]
    if mp == m:
        return x
    return jnp.pad(x, ((0, mp - m),) + ((0, 0),) * (x.ndim - 1))


# ----------------------------------------------------------------------------- generic wrappers

def _rowwise_call(kernel, x, weights, out_dims, tile=512, out_dtype=_BF16):
    """Row-tiled call over a 2-D input; weights are full resident blocks; outputs are [M, d]."""
    m, kdim = x.shape
    tm = _choose_row_tile(m, tile)
    mp = _round_up(m, tm)
    xp = _pad_rows(x, mp)
    in_specs = [pl.BlockSpec((tm, kdim), lambda i: (i, 0))]
    in_specs += [pl.BlockSpec(w.shape, lambda i, nd=w.ndim: (0,) * nd) for w in weights]
    out_shape = tuple(jax.ShapeDtypeStruct((mp, d), out_dtype) for d in out_dims)
    out_specs = tuple(pl.BlockSpec((tm, d), lambda i: (i, 0)) for d in out_dims)
    res = pl.pallas_call(
        kernel,
        grid=(mp // tm,),
        in_specs=in_specs,
        out_specs=out_specs,
        out_shape=out_shape,
        compiler_params=pltpu.CompilerParams(dimension_semantics=("parallel",)),
    )(xp, *weights)
    if not isinstance(res, (tuple, list)):
        res = (res,)
    res = tuple(r[:m] for r in res)
    return res[0] if len(res) == 1 else res


def _matmul_bias_kernel(x_ref, w_ref, b_ref, out_ref):
    out_ref[...] = (jnp.dot(x_ref[...].astype(_BF16), w_ref[...],
                            preferred_element_type=jnp.float32) + b_ref[...]).astype(out_ref.dtype)


def _matmul_bias(x, w, b, tile_m=1024, tile_n=512):
    """y = x @ w + b, tiled over (rows, output columns).  Large row tiles minimize how often the
    wide prompt_proj2 weight is re-streamed from HBM; stores are lane-dense."""
    m, kdim = x.shape
    n = w.shape[1]
    tm = _choose_row_tile(m, tile_m)
    mp = _round_up(m, tm)
    xp = _pad_rows(x, mp)
    tn = _col_tile(n, tile_n)
    out = pl.pallas_call(
        _matmul_bias_kernel,
        grid=(mp // tm, n // tn),
        in_specs=[pl.BlockSpec((tm, kdim), lambda i, j: (i, 0)),
                  pl.BlockSpec((kdim, tn), lambda i, j: (0, j)),
                  pl.BlockSpec((1, tn), lambda i, j: (0, j))],
        out_specs=pl.BlockSpec((tm, tn), lambda i, j: (i, j)),
        out_shape=jax.ShapeDtypeStruct((mp, n), _F32),
        compiler_params=pltpu.CompilerParams(dimension_semantics=("parallel", "parallel")),
    )(xp, w, b)
    return out[:m]


# ----------------------------------------------------------------------------- kernels

def _entity_kernel(num_relations, tm,
                   xr_ref, xk_ref, a_ref, rel_ref, root_ref, bias_ref,
                   w1, b1, w2, b2, wp, bp,
                   out_ref, acc_ref):
    """Row-tiled RGCN (dense adjacency) + residual + entity_proj1(+res) + entity_proj2.

    grid = (row tiles over N : parallel, contraction tiles over N : arbitrary)
    acc_ref : [R*tm, Dh] f32 scratch; ONE fused matmul + ONE accumulator RMW per k-step.
    """
    k = pl.program_id(1)

    @pl.when(k == 0)
    def _init():
        acc_ref[...] = jnp.zeros_like(acc_ref)

    # Fused message passing for all relations: (R*tm, tk) @ (tk, Dh) on the MXU.
    a_flat = a_ref[...].reshape(num_relations * tm, -1)            # leading-dim merge (layout-free)
    acc_ref[...] += jnp.dot(a_flat, xk_ref[...], preferred_element_type=jnp.float32)

    @pl.when(k == pl.num_programs(1) - 1)
    def _finalize():
        x = xr_ref[...]                                            # [tm, Dh] bf16
        xf = x.astype(jnp.float32)
        out = jnp.dot(x, root_ref[...], preferred_element_type=jnp.float32) + bias_ref[...]
        for r in range(num_relations):                             # small static unroll, once/row-tile
            out = out + jnp.dot(acc_ref[pl.ds(r * tm, tm), :].astype(_BF16), rel_ref[r],
                                preferred_element_type=jnp.float32)
        e = out + xf                                               # kg_encoder(x) + x
        h = jnp.maximum(jnp.dot(e.astype(_BF16), w1[...],
                                preferred_element_type=jnp.float32) + b1[...], 0.0)
        e = jnp.dot(h.astype(_BF16), w2[...], preferred_element_type=jnp.float32) + b2[...] + e
        out_ref[...] = (jnp.dot(e.astype(_BF16), wp[...],
                                preferred_element_type=jnp.float32) + bp[...]).astype(out_ref.dtype)


def _token_kernel(x_ref, w1, b1, w2, b2, wp, bp, wc, tokh_ref, q_ref):
    """token_proj1 (MLP + residual), token_proj2, and the hoisted cross-attn query (tok @ Wc).
    Batch is folded into the row (M) dimension by the wrapper.  Wc is pre-scaled by 1/hidden_size
    so no per-element score scaling is needed downstream."""
    t = x_ref[...]                                                 # [tm, Dt] bf16
    h = jnp.maximum(jnp.dot(t, w1[...], preferred_element_type=jnp.float32) + b1[...], 0.0)
    t2 = jnp.dot(h.astype(_BF16), w2[...], preferred_element_type=jnp.float32) + b2[...] \
        + t.astype(jnp.float32)
    th = jnp.dot(t2.astype(_BF16), wp[...], preferred_element_type=jnp.float32) + bp[...]
    tokh_ref[...] = th.astype(tokh_ref.dtype)
    q_ref[...] = jnp.dot(th.astype(_BF16), wc[...],
                         preferred_element_type=jnp.float32).astype(q_ref.dtype)


def _mlp_res_kernel(x_ref, w1, b1, w2, b2, out_ref):
    """y = Linear2(ReLU(Linear1(x))) + x   (prompt_proj1)."""
    x = x_ref[...]
    xb = x.astype(_BF16)
    h = jnp.maximum(jnp.dot(xb, w1[...], preferred_element_type=jnp.float32) + b1[...], 0.0)
    out_ref[...] = (jnp.dot(h.astype(_BF16), w2[...], preferred_element_type=jnp.float32)
                    + b2[...] + x.astype(jnp.float32)).astype(out_ref.dtype)


def _cross_kernel(rec_mode, tok_ref, q_ref, ent_ref, out_ref):
    """cross_attn scores + softmax + weighted sum + residual, several batch elements per step.
    q (= tok @ (Wc/hidden)) is precomputed in the token kernel; the softmax reduction axis is
    always the lane axis (no in-kernel transposes)."""
    tok = tok_ref[...]                                             # [Bb, T, H] bf16
    q = q_ref[...]                                                 # [Bb, T, H] bf16 (pre-scaled)
    ent = ent_ref[...]                                             # [Bb, E, H] bf16
    if rec_mode:
        # entity-major scores s[b,e,t] = attn[b,t,e]; softmax over tokens (lane axis).
        s = jnp.einsum('bed,btd->bet', ent, q, preferred_element_type=jnp.float32)
        m = jnp.max(s, axis=-1, keepdims=True)
        p = jnp.exp(s - m)
        w = p * pl.reciprocal(jnp.sum(p, axis=-1, keepdims=True), approx=True)
        out = jnp.einsum('bet,btd->bed', w.astype(_BF16), tok,
                         preferred_element_type=jnp.float32) + ent.astype(jnp.float32)
    else:
        s = jnp.einsum('btd,bed->bte', q, ent, preferred_element_type=jnp.float32)
        m = jnp.max(s, axis=-1, keepdims=True)
        p = jnp.exp(s - m)
        w = p * pl.reciprocal(jnp.sum(p, axis=-1, keepdims=True), approx=True)
        out = jnp.einsum('bte,bed->btd', w.astype(_BF16), ent,
                         preferred_element_type=jnp.float32) + tok.astype(jnp.float32)
    out_ref[...] = out.astype(out_ref.dtype)


# ----------------------------------------------------------------------------- module params

def init_params(key, *, hidden_size, token_hidden_size, n_head, n_layer, n_block,
                num_bases, num_entities, num_relations, num_edges,
                n_prefix_rec=None, n_prefix_conv=None):
    H, Dt = hidden_size, token_hidden_size
    Dh = H // 2
    keys = iter(jax.random.split(key, 64))

    def dense(i, o):
        w = (jax.random.normal(next(keys), (i, o), _F32) * (1.0 / math.sqrt(i))).astype(_BF16)
        b = jnp.zeros((1, o), _F32)
        return w, b

    npad, tm, tk = _entity_tiles(num_entities, Dh, H, num_relations)

    p = {"config": dict(hidden_size=H, token_hidden_size=Dt, n_head=n_head,
                        n_layer=n_layer, n_block=n_block,
                        num_entities=num_entities, num_relations=num_relations,
                        n_prefix_rec=n_prefix_rec, n_prefix_conv=n_prefix_conv,
                        entity_tiles=(npad, tm, tk))}

    # node embeddings, init as in the torch module; pre-padded to the kernel tile grid.
    stdv = math.sqrt(6.0 / (num_entities + Dh))
    node = jax.random.uniform(next(keys), (num_entities, Dh), _F32, -stdv, stdv)
    p["node_embeds"] = _pad_rows(node, npad).astype(_BF16)                  # [npad, Dh]

    # RGCN (basis decomposition) parameters + dense normalized adjacency from edges (pre-padded).
    bases = jax.random.normal(next(keys), (num_bases, Dh, Dh), _F32) * (1.0 / math.sqrt(Dh))
    comp = jax.random.normal(next(keys), (num_relations, num_bases), _F32) * (1.0 / math.sqrt(num_bases))
    p["rel_w"] = jnp.einsum("rb,bio->rio", comp, bases).astype(_BF16)       # [R, Dh, Dh]
    p["root_w"] = (jax.random.normal(next(keys), (Dh, Dh), _F32) * (1.0 / math.sqrt(Dh))).astype(_BF16)
    p["rgcn_bias"] = jnp.zeros((1, Dh), _F32)

    src = jax.random.randint(next(keys), (num_edges,), 0, num_entities)
    dst = jax.random.randint(next(keys), (num_edges,), 0, num_entities)
    etype = jax.random.randint(next(keys), (num_edges,), 0, num_relations)
    p["edge_index"] = jnp.stack([src, dst])                                 # kept for reference
    p["edge_type"] = etype
    A = jnp.zeros((num_relations, num_entities, num_entities), _F32)
    A = A.at[etype, dst, src].add(1.0)                                      # message src -> dst
    deg = A.sum(axis=2, keepdims=True)
    A = jnp.where(deg > 0, A / jnp.maximum(deg, 1.0), 0.0)                  # mean aggregation
    if npad != num_entities:
        A = jnp.pad(A, ((0, 0), (0, npad - num_entities), (0, npad - num_entities)))
    p["A"] = A.astype(_BF16)                                                # [R, npad, npad]

    # projections
    p["entity_proj1_w1"], p["entity_proj1_b1"] = dense(Dh, Dh // 2)
    p["entity_proj1_w2"], p["entity_proj1_b2"] = dense(Dh // 2, Dh)
    p["entity_proj2_w"], p["entity_proj2_b"] = dense(Dh, H)

    p["token_proj1_w1"], p["token_proj1_b1"] = dense(Dt, Dt // 2)
    p["token_proj1_w2"], p["token_proj1_b2"] = dense(Dt // 2, Dt)
    p["token_proj2_w"], p["token_proj2_b"] = dense(Dt, H)

    # cross_attn weight pre-scaled by 1/hidden_size: folds the attention score scale into the
    # q = tok @ Wc matmul for free.
    wc = jax.random.normal(next(keys), (H, H), _F32) * (1.0 / math.sqrt(H))
    p["cross_attn_w"] = (wc / float(H)).astype(_BF16)

    p["prompt_proj1_w1"], p["prompt_proj1_b1"] = dense(H, H // 2)
    p["prompt_proj1_w2"], p["prompt_proj1_b2"] = dense(H // 2, H)
    p["prompt_proj2_w"], p["prompt_proj2_b"] = dense(H, n_layer * n_block * H)

    if n_prefix_rec is not None:
        p["rec_prefix_embeds"] = jax.random.normal(next(keys), (n_prefix_rec, H), _F32)
        p["rec_prefix_w1"], p["rec_prefix_b1"] = dense(H, H // 2)
        p["rec_prefix_w2"], p["rec_prefix_b2"] = dense(H // 2, H)
    if n_prefix_conv is not None:
        p["conv_prefix_embeds"] = jax.random.normal(next(keys), (n_prefix_conv, H), _F32)
        p["conv_prefix_w1"], p["conv_prefix_b1"] = dense(H, H // 2)
        p["conv_prefix_w2"], p["conv_prefix_b2"] = dense(H // 2, H)
    return p


# ----------------------------------------------------------------------------- module forward

def get_entity_embeds(params):
    """RGCN + residual + entity_proj1(+res) + entity_proj2 over all entities.
    Depends only on params — cache/hoist the result for inference (see __main__)."""
    cfg = params["config"]
    N = cfg["num_entities"]
    npad, tm, tk = cfg["entity_tiles"]
    x = params["node_embeds"]                                  # [npad, Dh] bf16 (pre-padded)
    A = params["A"]                                            # [R, npad, npad] bf16 (pre-padded)
    R = A.shape[0]
    Dh = x.shape[1]
    H = params["entity_proj2_w"].shape[1]

    weights = (params["rel_w"], params["root_w"], params["rgcn_bias"],
               params["entity_proj1_w1"], params["entity_proj1_b1"],
               params["entity_proj1_w2"], params["entity_proj1_b2"],
               params["entity_proj2_w"], params["entity_proj2_b"])

    in_specs = [
        pl.BlockSpec((tm, Dh), lambda i, k: (i, 0)),           # residual / root rows
        pl.BlockSpec((tk, Dh), lambda i, k: (k, 0)),           # contraction rows
        pl.BlockSpec((R, tm, tk), lambda i, k: (0, i, k)),     # adjacency tile
    ] + [pl.BlockSpec(w.shape, lambda i, k, nd=w.ndim: (0,) * nd) for w in weights]

    # Explicit VMEM budget (review: required on v7x's 64 MiB VMEM with bigger tiles).
    wbytes = sum(int(w.size) * w.dtype.itemsize for w in weights) * 2
    need = (2 * R * tm * tk * 2 + 2 * (tm + tk) * Dh * 2 + R * tm * Dh * 4
            + 2 * tm * H * 2 + wbytes)
    vmem_limit = int(min(max(need * 1.5, 32 << 20), 60 << 20))

    out = pl.pallas_call(
        functools.partial(_entity_kernel, R, tm),
        grid=(npad // tm, npad // tk),
        in_specs=in_specs,
        out_specs=pl.BlockSpec((tm, H), lambda i, k: (i, 0)),
        out_shape=jax.ShapeDtypeStruct((npad, H), _BF16),
        scratch_shapes=[pltpu.VMEM((R * tm, Dh), jnp.float32)],
        compiler_params=pltpu.CompilerParams(
            dimension_semantics=("parallel", "arbitrary"),
            vmem_limit_bytes=vmem_limit),
    )(x, x, A, *weights)
    return out[:N]


def _cross_call(tokH, q, ent, rec_mode, batch_block=8):
    B, T, H = tokH.shape
    E = ent.shape[1]
    L = E if rec_mode else T
    Bb = min(B, batch_block)
    Bp = _round_up(B, Bb)
    if Bp != B:
        pad3 = lambda a: jnp.pad(a, ((0, Bp - B), (0, 0), (0, 0)))
        tokH, q, ent = pad3(tokH), pad3(q), pad3(ent)
    out = pl.pallas_call(
        functools.partial(_cross_kernel, rec_mode),
        grid=(Bp // Bb,),
        in_specs=[pl.BlockSpec((Bb, T, H), lambda b: (b, 0, 0)),
                  pl.BlockSpec((Bb, T, H), lambda b: (b, 0, 0)),
                  pl.BlockSpec((Bb, E, H), lambda b: (b, 0, 0))],
        out_specs=pl.BlockSpec((Bb, L, H), lambda b: (b, 0, 0)),
        out_shape=jax.ShapeDtypeStruct((Bp, L, H), _BF16),
        compiler_params=pltpu.CompilerParams(dimension_semantics=("parallel",)),
    )(tokH, q, ent)
    return out[:B]


def _prefix_jax(params, name, batch):
    """Tiny (<8 rows) prefix MLP + residual in plain JAX — a kernel launch here is pure overhead."""
    pe = params[f"{name}_embeds"]                              # [n_prefix, H] f32
    w1 = params[f"{name}_w1"].astype(_F32)
    w2 = params[f"{name}_w2"].astype(_F32)
    h = jax.nn.relu(pe @ w1 + params[f"{name}_b1"])
    out = (h @ w2 + params[f"{name}_b2"] + pe).astype(_BF16)
    return jnp.broadcast_to(out[None], (batch,) + out.shape)


def kg_prompt_forward(params, entity_ids=None, token_embeds=None, *, entity_table=None,
                      rec_mode=False, use_rec_prefix=False, use_conv_prefix=False,
                      proj2_col_tile=512, proj2_row_tile=1024):
    cfg = params["config"]
    H, n_layer, n_block, n_head = cfg["hidden_size"], cfg["n_layer"], cfg["n_block"], cfg["n_head"]
    head_dim = H // n_head

    entity_embeds = None
    if entity_ids is not None:
        if entity_table is None:                               # hoist/cache this for inference
            entity_table = get_entity_embeds(params)           # [N, H] bf16
        entity_embeds = entity_table[entity_ids]               # gather (JAX glue) -> [B, E, H]

    tokH = q = None
    if token_embeds is not None:
        B, T, Dt = token_embeds.shape
        flat = token_embeds.reshape(B * T, Dt).astype(_BF16)   # fold batch into the M dim
        tokH_flat, q_flat = _rowwise_call(
            _token_kernel, flat,
            (params["token_proj1_w1"], params["token_proj1_b1"],
             params["token_proj1_w2"], params["token_proj1_b2"],
             params["token_proj2_w"], params["token_proj2_b"],
             params["cross_attn_w"]),
            out_dims=(H, H))
        tokH = tokH_flat.reshape(B, T, H)
        q = q_flat.reshape(B, T, H)

    if entity_embeds is not None and tokH is not None:
        prompt_embeds = _cross_call(tokH, q, entity_embeds, rec_mode)
    elif entity_embeds is not None:
        prompt_embeds = entity_embeds
    else:
        prompt_embeds = tokH
    B = prompt_embeds.shape[0]

    if cfg["n_prefix_rec"] is not None and use_rec_prefix:
        prompt_embeds = jnp.concatenate([_prefix_jax(params, "rec_prefix", B), prompt_embeds], axis=1)
    if cfg["n_prefix_conv"] is not None and use_conv_prefix:
        prompt_embeds = jnp.concatenate([_prefix_jax(params, "conv_prefix", B), prompt_embeds], axis=1)

    Lp = prompt_embeds.shape[1]
    flat = prompt_embeds.reshape(B * Lp, H)

    # prompt_proj1 (MLP + residual), batch folded into M, row-tiled, bf16 staging.
    x2 = _rowwise_call(
        _mlp_res_kernel, flat,
        (params["prompt_proj1_w1"], params["prompt_proj1_b1"],
         params["prompt_proj1_w2"], params["prompt_proj1_b2"]),
        out_dims=(H,))

    # prompt_proj2 — wide output, tiled over (rows, output columns); lane-dense stores.
    out = _matmul_bias(x2, params["prompt_proj2_w"], params["prompt_proj2_b"],
                       tile_m=proj2_row_tile, tile_n=proj2_col_tile)  # [B*Lp, n_layer*n_block*H]

    out = out.reshape(B, Lp, n_layer, n_block, n_head, head_dim)
    out = jnp.transpose(out, (2, 3, 0, 4, 1, 5))               # (L, Bk, B, n_head, Lp, head_dim)
    if rec_mode:
        return out, entity_table
    return out


# ----------------------------------------------------------------------------- main

if __name__ == "__main__":
    key = jax.random.PRNGKey(0)
    cfg = dict(hidden_size=64, token_hidden_size=64, n_head=4, n_layer=2, n_block=2,
               num_bases=2, num_entities=256, num_relations=3, num_edges=512,
               n_prefix_rec=6, n_prefix_conv=4)
    params = init_params(key, **cfg)

    k_ent, k_tok = jax.random.split(jax.random.PRNGKey(0), 2)
    B, E, T = 2, 8, 16
    entity_ids = jax.random.randint(k_ent, (B, E), 0, cfg["num_entities"])
    token_embeds = jax.random.normal(k_tok, (B, T, cfg["token_hidden_size"]), jnp.float32)

    # Entity table depends only on params — compute the RGCN pass once and reuse it (per review).
    entity_table = get_entity_embeds(params)
    jax.block_until_ready(entity_table)
    assert entity_table.shape == (cfg["num_entities"], cfg["hidden_size"])
    assert bool(jnp.all(jnp.isfinite(entity_table.astype(jnp.float32))))

    # conv mode (rec_mode=False) with conv prefix; force 128-wide output tiles to exercise the
    # multi-column-tile path of prompt_proj2.
    out_conv = kg_prompt_forward(params, entity_ids, token_embeds, entity_table=entity_table,
                                 rec_mode=False, use_conv_prefix=True, proj2_col_tile=128)
    jax.block_until_ready(out_conv)
    assert out_conv.shape == (2, 2, B, 4, T + cfg["n_prefix_conv"], 16), out_conv.shape
    assert bool(jnp.all(jnp.isfinite(out_conv)))

    # rec mode with rec prefix (also returns the full entity table)
    out_rec, table = kg_prompt_forward(params, entity_ids, token_embeds, entity_table=entity_table,
                                       rec_mode=True, use_rec_prefix=True)
    jax.block_until_ready((out_rec, table))
    assert out_rec.shape == (2, 2, B, 4, E + cfg["n_prefix_rec"], 16), out_rec.shape
    assert table.shape == (cfg["num_entities"], cfg["hidden_size"])
    assert bool(jnp.all(jnp.isfinite(out_rec)))

    print("KERNEL_OK")
</pallas_src>

<mosaic_0001>
module attributes {stable_mosaic.version = 11 : i64} {
  func.func @_entity_kernel(%arg0: i32, %arg1: i32, %arg2: memref<256x32xbf16, #tpu.memory_space<vmem>>, %arg3: memref<256x32xbf16, #tpu.memory_space<vmem>>, %arg4: memref<3x256x256xbf16, #tpu.memory_space<vmem>>, %arg5: memref<3x32x32xbf16, #tpu.memory_space<vmem>>, %arg6: memref<32x32xbf16, #tpu.memory_space<vmem>>, %arg7: memref<1x32xf32, #tpu.memory_space<vmem>>, %arg8: memref<32x16xbf16, #tpu.memory_space<vmem>>, %arg9: memref<1x16xf32, #tpu.memory_space<vmem>>, %arg10: memref<16x32xbf16, #tpu.memory_space<vmem>>, %arg11: memref<1x32xf32, #tpu.memory_space<vmem>>, %arg12: memref<32x64xbf16, #tpu.memory_space<vmem>>, %arg13: memref<1x64xf32, #tpu.memory_space<vmem>>, %arg14: memref<256x64xbf16, #tpu.memory_space<vmem>>, %arg15: memref<768x32xf32, #tpu.memory_space<vmem>>) attributes {dimension_semantics = [#tpu.dimension_semantics<parallel>, #tpu.dimension_semantics<arbitrary>], iteration_bounds = array<i64: 1, 1>, scalar_prefetch = 0 : i64, scratch_operands = 1 : i64, tpu.core_type = #tpu.core_type<tc>, window_params = [{transform_indices = @transform_0, window_bounds = array<i64: 256, 32>}, {transform_indices = @transform_1, window_bounds = array<i64: 256, 32>}, {transform_indices = @transform_2, window_bounds = array<i64: 3, 256, 256>}, {pipeline_mode = #tpu.pipeline_mode<synchronous>, transform_indices = @transform_3, window_bounds = array<i64: 3, 32, 32>}, {pipeline_mode = #tpu.pipeline_mode<synchronous>, transform_indices = @transform_4, window_bounds = array<i64: 32, 32>}, {pipeline_mode = #tpu.pipeline_mode<synchronous>, transform_indices = @transform_5, window_bounds = array<i64: 1, 32>}, {pipeline_mode = #tpu.pipeline_mode<synchronous>, transform_indices = @transform_6, window_bounds = array<i64: 32, 16>}, {pipeline_mode = #tpu.pipeline_mode<synchronous>, transform_indices = @transform_7, window_bounds = array<i64: 1, 16>}, {pipeline_mode = #tpu.pipeline_mode<synchronous>, transform_indices = @transform_8, window_bounds = array<i64: 16, 32>}, {pipeline_mode = #tpu.pipeline_mode<synchronous>, transform_indices = @transform_9, window_bounds = array<i64: 1, 32>}, {pipeline_mode = #tpu.pipeline_mode<synchronous>, transform_indices = @transform_10, window_bounds = array<i64: 32, 64>}, {pipeline_mode = #tpu.pipeline_mode<synchronous>, transform_indices = @transform_11, window_bounds = array<i64: 1, 64>}, {transform_indices = @transform_12, window_bounds = array<i64: 256, 64>}]} {
    %c0_i32 = arith.constant 0 : i32
    %0 = arith.cmpi eq, %arg1, %c0_i32 : i32
    %1 = arith.extui %0 : i1 to i32
    %c0_i32_0 = arith.constant 0 : i32
    %2 = arith.cmpi ne, %1, %c0_i32_0 : i32
    scf.if %2 {
      %cst_11 = arith.constant 0.000000e+00 : f32
      %13 = vector.broadcast %cst_11 : f32 to vector<768x32xf32>
      %c0_12 = arith.constant 0 : index
      %c0_13 = arith.constant 0 : index
      %14 = vector.load %arg15[%c0_12, %c0_13] : memref<768x32xf32, #tpu.memory_space<vmem>>, vector<768x32xf32>
      tpu.vector_store %arg15[%c0_12, %c0_13], %13 {strides = array<i32>} : memref<768x32xf32, #tpu.memory_space<vmem>>, vector<768x32xf32>,
    } else {
    }
    %c0 = arith.constant 0 : index
    %c0_1 = arith.constant 0 : index
    %c0_2 = arith.constant 0 : index
    %3 = vector.load %arg4[%c0, %c0_1, %c0_2] : memref<3x256x256xbf16, #tpu.memory_space<vmem>>, vector<3x256x256xbf16>
    %4 = vector.shape_cast %3 : vector<3x256x256xbf16> to vector<768x256xbf16>
    %c0_3 = arith.constant 0 : index
    %c0_4 = arith.constant 0 : index
    %5 = vector.load %arg15[%c0_3, %c0_4] : memref<768x32xf32, #tpu.memory_space<vmem>>, vector<768x32xf32>
    %c0_5 = arith.constant 0 : index
    %c0_6 = arith.constant 0 : index
    %6 = vector.load %arg3[%c0_5, %c0_6] : memref<256x32xbf16, #tpu.memory_space<vmem>>, vector<256x32xbf16>
    %cst = arith.constant dense<0.000000e+00> : vector<768x32xf32>
    %7 = tpu.matmul %4, %6, %cst {dimension_numbers = #tpu.dot_dimension_numbers<[1], [0], [0], [1], [0, 0, 1, 1], [], []>} : vector<768x256xbf16>, vector<256x32xbf16>, vector<768x32xf32> -> vector<768x32xf32>
    %8 = arith.addf %5, %7 : vector<768x32xf32>
    %c0_7 = arith.constant 0 : index
    %c0_8 = arith.constant 0 : index
    %9 = vector.load %arg15[%c0_7, %c0_8] : memref<768x32xf32, #tpu.memory_space<vmem>>, vector<768x32xf32>
    tpu.vector_store %arg15[%c0_7, %c0_8], %8 {strides = array<i32>} : memref<768x32xf32, #tpu.memory_space<vmem>>, vector<768x32xf32>,
    %c0_i32_9 = arith.constant 0 : i32
    %10 = arith.cmpi eq, %arg1, %c0_i32_9 : i32
    %11 = arith.extui %10 : i1 to i32
    %c0_i32_10 = arith.constant 0 : i32
    %12 = arith.cmpi ne, %11, %c0_i32_10 : i32
    scf.if %12 {
      %c0_11 = arith.constant 0 : index
      %c0_12 = arith.constant 0 : index
      %13 = vector.load %arg2[%c0_11, %c0_12] : memref<256x32xbf16, #tpu.memory_space<vmem>>, vector<256x32xbf16>
      %14 = arith.extf %13 : vector<256x32xbf16> to vector<256x32xf32>
      %c0_13 = arith.constant 0 : index
      %c0_14 = arith.constant 0 : index
      %15 = vector.load %arg6[%c0_13, %c0_14] : memref<32x32xbf16, #tpu.memory_space<vmem>>, vector<32x32xbf16>
      %cst_15 = arith.constant dense<0.000000e+00> : vector<256x32xf32>
      %16 = tpu.matmul %13, %15, %cst_15 {dimension_numbers = #tpu.dot_dimension_numbers<[1], [0], [0], [1], [0, 0, 1, 1], [], []>} : vector<256x32xbf16>, vector<32x32xbf16>, vector<256x32xf32> -> vector<256x32xf32>
      %c0_16 = arith.constant 0 : index
      %c0_17 = arith.constant 0 : index
      %17 = vector.load %arg7[%c0_16, %c0_17] : memref<1x32xf32, #tpu.memory_space<vmem>>, vector<1x32xf32>
      %18 = vector.broadcast %17 : vector<1x32xf32> to vector<256x32xf32>
      %19 = arith.addf %16, %18 : vector<256x32xf32>
      %c0_18 = arith.constant 0 : index
      %c0_19 = arith.constant 0 : index
      %20 = vector.load %arg15[%c0_18, %c0_19] : memref<768x32xf32, #tpu.memory_space<vmem>>, vector<256x32xf32>
      %21 = arith.truncf %20 : vector<256x32xf32> to vector<256x32xbf16>
      %c0_20 = arith.constant 0 : index
      %c0_21 = arith.constant 0 : index
      %c0_22 = arith.constant 0 : index
      %22 = vector.load %arg5[%c0_20, %c0_21, %c0_22] : memref<3x32x32xbf16, #tpu.memory_space<vmem>>, vector<1x32x32xbf16>
      %23 = vector.shape_cast %22 : vector<1x32x32xbf16> to vector<32x32xbf16>
      %cst_23 = arith.constant dense<0.000000e+00> : vector<256x32xf32>
      %24 = tpu.matmul %21, %23, %cst_23 {dimension_numbers = #tpu.dot_dimension_numbers<[1], [0], [0], [1], [0, 0, 1, 1], [], []>} : vector<256x32xbf16>, vector<32x32xbf16>, vector<256x32xf32> -> vector<256x32xf32>
      %25 = arith.addf %19, %24 : vector<256x32xf32>
      %c256 = arith.constant 256 : index
      %c0_24 = arith.constant 0 : index
      %26 = vector.load %arg15[%c256, %c0_24] : memref<768x32xf32, #tpu.memory_space<vmem>>, vector<256x32xf32>
      %27 = arith.truncf %26 : vector<256x32xf32> to vector<256x32xbf16>
      %c1 = arith.constant 1 : index
      %c0_25 = arith.constant 0 : index
      %c0_26 = arith.constant 0 : index
      %28 = vector.load %arg5[%c1, %c0_25, %c0_26] : memref<3x32x32xbf16, #tpu.memory_space<vmem>>, vector<1x32x32xbf16>
      %29 = vector.shape_cast %28 : vector<1x32x32xbf16> to vector<32x32xbf16>
      %cst_27 = arith.constant dense<0.000000e+00> : vector<256x32xf32>
      %30 = tpu.matmul %27, %29, %cst_27 {dimension_numbers = #tpu.dot_dimension_numbers<[1], [0], [0], [1], [0, 0, 1, 1], [], []>} : vector<256x32xbf16>, vector<32x32xbf16>, vector<256x32xf32> -> vector<256x32xf32>
      %31 = arith.addf %25, %30 : vector<256x32xf32>
      %c512 = arith.constant 512 : index
      %c0_28 = arith.constant 0 : index
      %32 = vector.load %arg15[%c512, %c0_28] : memref<768x32xf32, #tpu.memory_space<vmem>>, vector<256x32xf32>
      %33 = arith.truncf %32 : vector<256x32xf32> to vector<256x32xbf16>
      %c2 = arith.constant 2 : index
      %c0_29 = arith.constant 0 : index
      %c0_30 = arith.constant 0 : index
      %34 = vector.load %arg5[%c2, %c0_29, %c0_30] : memref<3x32x32xbf16, #tpu.memory_space<vmem>>, vector<1x32x32xbf16>
      %35 = vector.shape_cast %34 : vector<1x32x32xbf16> to vector<32x32xbf16>
      %cst_31 = arith.constant dense<0.000000e+00> : vector<256x32xf32>
      %36 = tpu.matmul %33, %35, %cst_31 {dimension_numbers = #tpu.dot_dimension_numbers<[1], [0], [0], [1], [0, 0, 1, 1], [], []>} : vector<256x32xbf16>, vector<32x32xbf16>, vector<256x32xf32> -> vector<256x32xf32>
      %37 = arith.addf %31, %36 : vector<256x32xf32>
      %38 = arith.addf %37, %14 : vector<256x32xf32>
      %39 = arith.truncf %38 : vector<256x32xf32> to vector<256x32xbf16>
      %c0_32 = arith.constant 0 : index
      %c0_33 = arith.constant 0 : index
      %40 = vector.load %arg8[%c0_32, %c0_33] : memref<32x16xbf16, #tpu.memory_space<vmem>>, vector<32x16xbf16>
      %cst_34 = arith.constant dense<0.000000e+00> : vector<256x16xf32>
      %41 = tpu.matmul %39, %40, %cst_34 {dimension_numbers = #tpu.dot_dimension_numbers<[1], [0], [0], [1], [0, 0, 1, 1], [], []>} : vector<256x32xbf16>, vector<32x16xbf16>, vector<256x16xf32> -> vector<256x16xf32>
      %c0_35 = arith.constant 0 : index
      %c0_36 = arith.constant 0 : index
      %42 = vector.load %arg9[%c0_35, %c0_36] : memref<1x16xf32, #tpu.memory_space<vmem>>, vector<1x16xf32>
      %43 = vector.broadcast %42 : vector<1x16xf32> to vector<256x16xf32>
      %44 = arith.addf %41, %43 : vector<256x16xf32>
      %cst_37 = arith.constant 0.000000e+00 : f32
      %45 = vector.broadcast %cst_37 : f32 to vector<256x16xf32>
      %46 = arith.maximumf %44, %45 : vector<256x16xf32>
      %47 = arith.truncf %46 : vector<256x16xf32> to vector<256x16xbf16>
      %c0_38 = arith.constant 0 : index
      %c0_39 = arith.constant 0 : index
      %48 = vector.load %arg10[%c0_38, %c0_39] : memref<16x32xbf16, #tpu.memory_space<vmem>>, vector<16x32xbf16>
      %cst_40 = arith.constant dense<0.000000e+00> : vector<256x32xf32>
      %49 = tpu.matmul %47, %48, %cst_40 {dimension_numbers = #tpu.dot_dimension_numbers<[1], [0], [0], [1], [0, 0, 1, 1], [], []>} : vector<256x16xbf16>, vector<16x32xbf16>, vector<256x32xf32> -> vector<256x32xf32>
      %c0_41 = arith.constant 0 : index
      %c0_42 = arith.constant 0 : index
      %50 = vector.load %arg11[%c0_41, %c0_42] : memref<1x32xf32, #tpu.memory_space<vmem>>, vector<1x32xf32>
      %51 = vector.broadcast %50 : vector<1x32xf32> to vector<256x32xf32>
      %52 = arith.addf %49, %51 : vector<256x32xf32>
      %53 = arith.addf %52, %38 : vector<256x32xf32>
      %54 = arith.truncf %53 : vector<256x32xf32> to vector<256x32xbf16>
      %c0_43 = arith.constant 0 : index
      %c0_44 = arith.constant 0 : index
      %55 = vector.load %arg12[%c0_43, %c0_44] : memref<32x64xbf16, #tpu.memory_space<vmem>>, vector<32x64xbf16>
      %cst_45 = arith.constant dense<0.000000e+00> : vector<256x64xf32>
      %56 = tpu.matmul %54, %55, %cst_45 {dimension_numbers = #tpu.dot_dimension_numbers<[1], [0], [0], [1], [0, 0, 1, 1], [], []>} : vector<256x32xbf16>, vector<32x64xbf16>, vector<256x64xf32> -> vector<256x64xf32>
      %c0_46 = arith.constant 0 : index
      %c0_47 = arith.constant 0 : index
      %57 = vector.load %arg13[%c0_46, %c0_47] : memref<1x64xf32, #tpu.memory_space<vmem>>, vector<1x64xf32>
      %58 = vector.broadcast %57 : vector<1x64xf32> to vector<256x64xf32>
      %59 = arith.addf %56, %58 : vector<256x64xf32>
      %60 = arith.truncf %59 : vector<256x64xf32> to vector<256x64xbf16>
      %c0_48 = arith.constant 0 : index
      %c0_49 = arith.constant 0 : index
      %61 = vector.load %arg14[%c0_48, %c0_49] : memref<256x64xbf16, #tpu.memory_space<vmem>>, vector<256x64xbf16>
      tpu.vector_store %arg14[%c0_48, %c0_49], %60 {strides = array<i32>} : memref<256x64xbf16, #tpu.memory_space<vmem>>, vector<256x64xbf16>,
    } else {
    }
    return
  }
  func.func @transform_0(%arg0: i32, %arg1: i32) -> (i32, i32) {
    %c0_i32 = arith.constant 0 : i32
    %c0_i32_0 = arith.constant 0 : i32
    return %arg0, %c0_i32 : i32, i32
  }
  func.func @transform_1(%arg0: i32, %arg1: i32) -> (i32, i32) {
    %c0_i32 = arith.constant 0 : i32
    %c0_i32_0 = arith.constant 0 : i32
    return %arg1, %c0_i32 : i32, i32
  }
  func.func @transform_2(%arg0: i32, %arg1: i32) -> (i32, i32, i32) {
    %c0_i32 = arith.constant 0 : i32
    %c0_i32_0 = arith.constant 0 : i32
    return %c0_i32, %arg0, %arg1 : i32, i32, i32
  }
  func.func @transform_3(%arg0: i32, %arg1: i32) -> (i32, i32, i32) {
    %c0_i32 = arith.constant 0 : i32
    %c0_i32_0 = arith.constant 0 : i32
    %c0_i32_1 = arith.constant 0 : i32
    %c0_i32_2 = arith.constant 0 : i32
    return %c0_i32, %c0_i32_0, %c0_i32_1 : i32, i32, i32
  }
  func.func @transform_4(%arg0: i32, %arg1: i32) -> (i32, i32) {
    %c0_i32 = arith.constant 0 : i32
    %c0_i32_0 = arith.constant 0 : i32
    %c0_i32_1 = arith.constant 0 : i32
    return %c0_i32, %c0_i32_0 : i32, i32
  }
  func.func @transform_5(%arg0: i32, %arg1: i32) -> (i32, i32) {
    %c0_i32 = arith.constant 0 : i32
    %c0_i32_0 = arith.constant 0 : i32
    %c0_i32_1 = arith.constant 0 : i32
    return %c0_i32, %c0_i32_0 : i32, i32
  }
  func.func @transform_6(%arg0: i32, %arg1: i32) -> (i32, i32) {
    %c0_i32 = arith.constant 0 : i32
    %c0_i32_0 = arith.constant 0 : i32
    %c0_i32_1 = arith.constant 0 : i32
    return %c0_i32, %c0_i32_0 : i32, i32
  }
  func.func @transform_7(%arg0: i32, %arg1: i32) -> (i32, i32) {
    %c0_i32 = arith.constant 0 : i32
    %c0_i32_0 = arith.constant 0 : i32
    %c0_i32_1 = arith.constant 0 : i32
    return %c0_i32, %c0_i32_0 : i32, i32
  }
  func.func @transform_8(%arg0: i32, %arg1: i32) -> (i32, i32) {
    %c0_i32 = arith.constant 0 : i32
    %c0_i32_0 = arith.constant 0 : i32
    %c0_i32_1 = arith.constant 0 : i32
    return %c0_i32, %c0_i32_0 : i32, i32
  }
  func.func @transform_9(%arg0: i32, %arg1: i32) -> (i32, i32) {
    %c0_i32 = arith.constant 0 : i32
    %c0_i32_0 = arith.constant 0 : i32
    %c0_i32_1 = arith.constant 0 : i32
    return %c0_i32, %c0_i32_0 : i32, i32
  }
  func.func @transform_10(%arg0: i32, %arg1: i32) -> (i32, i32) {
    %c0_i32 = arith.constant 0 : i32
    %c0_i32_0 = arith.constant 0 : i32
    %c0_i32_1 = arith.constant 0 : i32
    return %c0_i32, %c0_i32_0 : i32, i32
  }
  func.func @transform_11(%arg0: i32, %arg1: i32) -> (i32, i32) {
    %c0_i32 = arith.constant 0 : i32
    %c0_i32_0 = arith.constant 0 : i32
    %c0_i32_1 = arith.constant 0 : i32
    return %c0_i32, %c0_i32_0 : i32, i32
  }
  func.func @transform_12(%arg0: i32, %arg1: i32) -> (i32, i32) {
    %c0_i32 = arith.constant 0 : i32
    %c0_i32_0 = arith.constant 0 : i32
    return %arg0, %c0_i32 : i32, i32
  }
}

</mosaic_0001>

<llo_original>
// kernel: tpu_custom_call.1
$region0: #{tpu_custom_call.1}
  #allocation0 [shape = 'u32[]', space=smem, size = 0x4, offset = 0x4, fixed_abs, tag = 'smem constant byte address 0x4 - core index']
  #allocation1 [shape = 'u32[144,128]{1,0:T(1,128)}', space=vmem, size = 0x12000, scoped, tag = 'internal scratch']
  #allocation2 [shape = 'f32[768,32]{1,0:T(8,128)}', space=vmem, size = 0x60000, scoped, tag = 'scratch operand']
  %s0 = inlined_call_operand.vmem [shape: bf16[256,32], index: 0, kind: input, shape index: {}]
  %s1 = inlined_call_operand.vmem [shape: bf16[256,32], index: 1, kind: input, shape index: {}]
  %s2 = inlined_call_operand.hbm [shape: bf16[3,256,256], index: 2, kind: input, shape index: {}]
  %s3 = inlined_call_operand.vmem [shape: bf16[3,32,32], index: 3, kind: input, shape index: {}]
  %s4 = inlined_call_operand.vmem [shape: bf16[32,32], index: 4, kind: input, shape index: {}]
  %s5 = inlined_call_operand.vmem [shape: f32[1,32], index: 5, kind: input, shape index: {}]
  %s6 = inlined_call_operand.vmem [shape: bf16[32,16], index: 6, kind: input, shape index: {}]
  %s7 = inlined_call_operand.vmem [shape: f32[1,16], index: 7, kind: input, shape index: {}]
  %s8 = inlined_call_operand.vmem [shape: bf16[16,32], index: 8, kind: input, shape index: {}]
  %s9 = inlined_call_operand.vmem [shape: f32[1,32], index: 9, kind: input, shape index: {}]
  %s10 = inlined_call_operand.vmem [shape: bf16[32,64], index: 10, kind: input, shape index: {}]
  %s11 = inlined_call_operand.vmem [shape: f32[1,64], index: 11, kind: input, shape index: {}]
  %s12 = inlined_call_operand.vmem [shape: bf16[256,64], index: 12, kind: output, shape index: {}]
  %s13 = sld [smem:[#allocation0]]
  $region70: #{tpu_custom_call.1} parent=0
    _
  %s15 = ssub.s32 1, %s13
  %s16 = scalar_select 0, %s15, %s13
  $region1: #{tpu_custom_call.1} parent=0
    #allocation3 [shape = 'u8[393216]{0}', space=vmem, size = 0x60000, scoped, tag = 'input window, operand 2, single buffered']
    #allocation4 [shape = 's32[1]{0}', space=sflag, size = 0x4, scoped, tag = 'scoped memory for tpu_custom_call.1']
    %17 = vsyncpa [#allocation4], 0
    // Predicated region
    $region2: #{tpu_custom_call.1} parent=1 // pred_check
      _
    $region3: #{tpu_custom_call.1} parent=1 // pred_check_branch
      %19 = sbr.rel (0) target = $region5
    $region4: #{tpu_custom_call.1} parent=1 // pred_region
      _
    $region5: #{tpu_custom_call.1} parent=1 // pred_fallthru
      _
    // Predicated region
    $region6: #{tpu_custom_call.1} parent=1 // pred_check
      _
    $region7: #{tpu_custom_call.1} parent=1 // pred_check_branch
      %21 = sbr.rel (0) target = $region9
    $region8: #{tpu_custom_call.1} parent=1 // pred_region
      _
    $region9: #{tpu_custom_call.1} parent=1 // pred_fallthru
      _
    // Predicated region
    $region10: #{tpu_custom_call.1} parent=1 // pred_check
      _
    $region11: #{tpu_custom_call.1} parent=1 // pred_check_branch
      %23 = sbr.rel (0) target = $region13
    $region12: #{tpu_custom_call.1} parent=1 // pred_region
      %s25 = ssub.s32 12288, 12288
      %26 = vsyncadd [#allocation4], %s25
      %s27 = sshll.u32 [#allocation3], 4
      %s28 = int_to_ptr.vmem [resolvable:$true] %s27
      %33 = dma.hbm_to_vmem [thread:$0]  %s2, 12288, %s28, [#allocation4], 128, 128, 8
    $region13: #{tpu_custom_call.1} parent=1 // pred_fallthru
      _
    // Predicated region
    $region14: #{tpu_custom_call.1} parent=1 // pred_check
      _
    $region15: #{tpu_custom_call.1} parent=1 // pred_check_branch
      %35 = sbr.rel (0) target = $region17
    $region16: #{tpu_custom_call.1} parent=1 // pred_region
      _
    $region17: #{tpu_custom_call.1} parent=1 // pred_fallthru
      _
    // Predicated region
    $region18: #{tpu_custom_call.1} parent=1 // pred_check
      _
    $region19: #{tpu_custom_call.1} parent=1 // pred_check_branch
      %37 = sbr.rel (0) target = $region21
    $region20: #{tpu_custom_call.1} parent=1 // pred_region
      _
    $region21: #{tpu_custom_call.1} parent=1 // pred_fallthru
      _
    // Predicated region
    $region22: #{tpu_custom_call.1} parent=1 // pred_check
      _
    $region23: #{tpu_custom_call.1} parent=1 // pred_check_branch
      %39 = sbr.rel (0) target = $region25
    $region24: #{tpu_custom_call.1} parent=1 // pred_region
      _
    $region25: #{tpu_custom_call.1} parent=1 // pred_fallthru
      _
    // Predicated region
    $region26: #{tpu_custom_call.1} parent=1 // pred_check
      _
    $region27: #{tpu_custom_call.1} parent=1 // pred_check_branch
      %41 = sbr.rel (0) target = $region29
    $region28: #{tpu_custom_call.1} parent=1 // pred_region
      _
    $region29: #{tpu_custom_call.1} parent=1 // pred_fallthru
      _
    // Predicated region
    $region30: #{tpu_custom_call.1} parent=1 // pred_check
      _
    $region31: #{tpu_custom_call.1} parent=1 // pred_check_branch
      %43 = sbr.rel (0) target = $region33
    $region32: #{tpu_custom_call.1} parent=1 // pred_region
      _
    $region33: #{tpu_custom_call.1} parent=1 // pred_fallthru
      _
    // Predicated region
    $region34: #{tpu_custom_call.1} parent=1 // pred_check
      _
    $region35: #{tpu_custom_call.1} parent=1 // pred_check_branch
      %45 = sbr.rel (0) target = $region37
    $region36: #{tpu_custom_call.1} parent=1 // pred_region
      _
    $region37: #{tpu_custom_call.1} parent=1 // pred_fallthru
      _
    // Predicated region
    $region38: #{tpu_custom_call.1} parent=1 // pred_check
      _
    $region39: #{tpu_custom_call.1} parent=1 // pred_check_branch
      %47 = sbr.rel (0) target = $region41
    $region40: #{tpu_custom_call.1} parent=1 // pred_region
      _
    $region41: #{tpu_custom_call.1} parent=1 // pred_fallthru
      _
    // Predicated region
    $region42: #{tpu_custom_call.1} parent=1 // pred_check
      _
    $region43: #{tpu_custom_call.1} parent=1 // pred_check_branch
      %49 = sbr.rel (0) target = $region45
    $region44: #{tpu_custom_call.1} parent=1 // pred_region
      _
    $region45: #{tpu_custom_call.1} parent=1 // pred_fallthru
      _
    // Predicated region
    $region46: #{tpu_custom_call.1} parent=1 // pred_check
      _
    $region47: #{tpu_custom_call.1} parent=1 // pred_check_branch
      %51 = sbr.rel (0) target = $region49
    $region48: #{tpu_custom_call.1} parent=1 // pred_region
      _
    $region49: #{tpu_custom_call.1} parent=1 // pred_fallthru
      _
    // Predicated region
    $region50: #{tpu_custom_call.1} parent=1 // pred_check
      _
    $region51: #{tpu_custom_call.1} parent=1 // pred_check_branch
      %53 = sbr.rel (0) target = $region53
    $region52: #{tpu_custom_call.1} parent=1 // pred_region
      %54 = dma.done [#allocation4], 12288
    $region53: #{tpu_custom_call.1} parent=1 // pred_fallthru
      _
    %p56 = scmp.eq.s32.totalorder 0, 0
    // Predicated region
    $region54: #{tpu_custom_call.1} parent=1 // pred_check
      %p57 = pneg %p56
    $region55: #{tpu_custom_call.1} parent=1 // pred_check_branch
      %59 = sbr.rel (%p57) target = $region57
    $region56: #{tpu_custom_call.1} parent=1 // pred_region
      %vm60 = vcmask 261120
      %61 = vst.msk [vmem:[#allocation2] sm:$0xff] %vm60, 0.0
      %62 = vst.msk [vmem:[#allocation2 + $0x8] sm:$0xff] %vm60, 0.0
      %63 = vst.msk [vmem:[#allocation2 + $0x10] sm:$0xff] %vm60, 0.0
      %64 = vst.msk [vmem:[#allocation2 + $0x18] sm:$0xff] %vm60, 0.0
      %65 = vst.msk [vmem:[#allocation2 + $0x20] sm:$0xff] %vm60, 0.0
      %66 = vst.msk [vmem:[#allocation2 + $0x28] sm:$0xff] %vm60, 0.0
      %67 = vst.msk [vmem:[#allocation2 + $0x30] sm:$0xff] %vm60, 0.0
      %68 = vst.msk [vmem:[#allocation2 + $0x38] sm:$0xff] %vm60, 0.0
      %69 = vst.msk [vmem:[#allocation2 + $0x40] sm:$0xff] %vm60, 0.0
      %70 = vst.msk [vmem:[#allocation2 + $0x48] sm:$0xff] %vm60, 0.0
      %71 = vst.msk [vmem:[#allocation2 + $0x50] sm:$0xff] %vm60, 0.0
      %72 = vst.msk [vmem:[#allocation2 + $0x58] sm:$0xff] %vm60, 0.0
      %73 = vst.msk [vmem:[#allocation2 + $0x60] sm:$0xff] %vm60, 0.0
      %74 = vst.msk [vmem:[#allocation2 + $0x68] sm:$0xff] %vm60, 0.0
      %75 = vst.msk [vmem:[#allocation2 + $0x70] sm:$0xff] %vm60, 0.0
      %76 = vst.msk [vmem:[#allocation2 + $0x78] sm:$0xff] %vm60, 0.0
      %77 = vst.msk [vmem:[#allocation2 + $0x80] sm:$0xff] %vm60, 0.0
      %78 = vst.msk [vmem:[#allocation2 + $0x88] sm:$0xff] %vm60, 0.0
      %79 = vst.msk [vmem:[#allocation2 + $0x90] sm:$0xff] %vm60, 0.0
      %80 = vst.msk [vmem:[#allocation2 + $0x98] sm:$0xff] %vm60, 0.0
      %81 = vst.msk [vmem:[#allocation2 + $0xa0] sm:$0xff] %vm60, 0.0
      %82 = vst.msk [vmem:[#allocation2 + $0xa8] sm:$0xff] %vm60, 0.0
      %83 = vst.msk [vmem:[#allocation2 + $0xb0] sm:$0xff] %vm60, 0.0
      %84 = vst.msk [vmem:[#allocation2 + $0xb8] sm:$0xff] %vm60, 0.0
      %85 = vst.msk [vmem:[#allocation2 + $0xc0] sm:$0xff] %vm60, 0.0
      %86 = vst.msk [vmem:[#allocation2 + $0xc8] sm:$0xff] %vm60, 0.0
      %87 = vst.msk [vmem:[#allocation2 + $0xd0] sm:$0xff] %vm60, 0.0
      %88 = vst.msk [vmem:[#allocation2 + $0xd8] sm:$0xff] %vm60, 0.0
      %89 = vst.msk [vmem:[#allocation2 + $0xe0] sm:$0xff] %vm60, 0.0
      %90 = vst.msk [vmem:[#allocation2 + $0xe8] sm:$0xff] %vm60, 0.0
      %91 = vst.msk [vmem:[#allocation2 + $0xf0] sm:$0xff] %vm60, 0.0
      %92 = vst.msk [vmem:[#allocation2 + $0xf8] sm:$0xff] %vm60, 0.0
      %93 = vst.msk [vmem:[#allocation2 + $0x100] sm:$0xff] %vm60, 0.0
      %94 = vst.msk [vmem:[#allocation2 + $0x108] sm:$0xff] %vm60, 0.0
      %95 = vst.msk [vmem:[#allocation2 + $0x110] sm:$0xff] %vm60, 0.0
      %96 = vst.msk [vmem:[#allocation2 + $0x118] sm:$0xff] %vm60, 0.0
      %97 = vst.msk [vmem:[#allocation2 + $0x120] sm:$0xff] %vm60, 0.0
      %98 = vst.msk [vmem:[#allocation2 + $0x128] sm:$0xff] %vm60, 0.0
      %99 = vst.msk [vmem:[#allocation2 + $0x130] sm:$0xff] %vm60, 0.0
      %100 = vst.msk [vmem:[#allocation2 + $0x138] sm:$0xff] %vm60, 0.0
      %101 = vst.msk [vmem:[#allocation2 + $0x140] sm:$0xff] %vm60, 0.0
      %102 = vst.msk [vmem:[#allocation2 + $0x148] sm:$0xff] %vm60, 0.0
      %103 = vst.msk [vmem:[#allocation2 + $0x150] sm:$0xff] %vm60, 0.0
      %104 = vst.msk [vmem:[#allocation2 + $0x158] sm:$0xff] %vm60, 0.0
      %105 = vst.msk [vmem:[#allocation2 + $0x160] sm:$0xff] %vm60, 0.0
      %106 = vst.msk [vmem:[#allocation2 + $0x168] sm:$0xff] %vm60, 0.0
      %107 = vst.msk [vmem:[#allocation2 + $0x170] sm:$0xff] %vm60, 0.0
      %108 = vst.msk [vmem:[#allocation2 + $0x178] sm:$0xff] %vm60, 0.0
      %109 = vst.msk [vmem:[#allocation2 + $0x180] sm:$0xff] %vm60, 0.0
      %110 = vst.msk [vmem:[#allocation2 + $0x188] sm:$0xff] %vm60, 0.0
      %111 = vst.msk [vmem:[#allocation2 + $0x190] sm:$0xff] %vm60, 0.0
      %112 = vst.msk [vmem:[#allocation2 + $0x198] sm:$0xff] %vm60, 0.0
      %113 = vst.msk [vmem:[#allocation2 + $0x1a0] sm:$0xff] %vm60, 0.0
      %114 = vst.msk [vmem:[#allocation2 + $0x1a8] sm:$0xff] %vm60, 0.0
      %115 = vst.msk [vmem:[#allocation2 + $0x1b0] sm:$0xff] %vm60, 0.0
      %116 = vst.msk [vmem:[#allocation2 + $0x1b8] sm:$0xff] %vm60, 0.0
      %117 = vst.msk [vmem:[#allocation2 + $0x1c0] sm:$0xff] %vm60, 0.0
      %118 = vst.msk [vmem:[#allocation2 + $0x1c8] sm:$0xff] %vm60, 0.0
      %119 = vst.msk [vmem:[#allocation2 + $0x1d0] sm:$0xff] %vm60, 0.0
      %120 = vst.msk [vmem:[#allocation2 + $0x1d8] sm:$0xff] %vm60, 0.0
      %121 = vst.msk [vmem:[#allocation2 + $0x1e0] sm:$0xff] %vm60, 0.0
      %122 = vst.msk [vmem:[#allocation2 + $0x1e8] sm:$0xff] %vm60, 0.0
      %123 = vst.msk [vmem:[#allocation2 + $0x1f0] sm:$0xff] %vm60, 0.0
      %124 = vst.msk [vmem:[#allocation2 + $0x1f8] sm:$0xff] %vm60, 0.0
      %125 = vst.msk [vmem:[#allocation2 + $0x200] sm:$0xff] %vm60, 0.0
      %126 = vst.msk [vmem:[#allocation2 + $0x208] sm:$0xff] %vm60, 0.0
      %127 = vst.msk [vmem:[#allocation2 + $0x210] sm:$0xff] %vm60, 0.0
      %128 = vst.msk [vmem:[#allocation2 + $0x218] sm:$0xff] %vm60, 0.0
      %129 = vst.msk [vmem:[#allocation2 + $0x220] sm:$0xff] %vm60, 0.0
      %130 = vst.msk [vmem:[#allocation2 + $0x228] sm:$0xff] %vm60, 0.0
      %131 = vst.msk [vmem:[#allocation2 + $0x230] sm:$0xff] %vm60, 0.0
      %132 = vst.msk [vmem:[#allocation2 + $0x238] sm:$0xff] %vm60, 0.0
      %133 = vst.msk [vmem:[#allocation2 + $0x240] sm:$0xff] %vm60, 0.0
      %134 = vst.msk [vmem:[#allocation2 + $0x248] sm:$0xff] %vm60, 0.0
      %135 = vst.msk [vmem:[#allocation2 + $0x250] sm:$0xff] %vm60, 0.0
      %136 = vst.msk [vmem:[#allocation2 + $0x258] sm:$0xff] %vm60, 0.0
      %137 = vst.msk [vmem:[#allocation2 + $0x260] sm:$0xff] %vm60, 0.0
      %138 = vst.msk [vmem:[#allocation2 + $0x268] sm:$0xff] %vm60, 0.0
      %139 = vst.msk [vmem:[#allocation2 + $0x270] sm:$0xff] %vm60, 0.0
      %140 = vst.msk [vmem:[#allocation2 + $0x278] sm:$0xff] %vm60, 0.0
      %141 = vst.msk [vmem:[#allocation2 + $0x280] sm:$0xff] %vm60, 0.0
      %142 = vst.msk [vmem:[#allocation2 + $0x288] sm:$0xff] %vm60, 0.0
      %143 = vst.msk [vmem:[#allocation2 + $0x290] sm:$0xff] %vm60, 0.0
      %144 = vst.msk [vmem:[#allocation2 + $0x298] sm:$0xff] %vm60, 0.0
      %145 = vst.msk [vmem:[#allocation2 + $0x2a0] sm:$0xff] %vm60, 0.0
      %146 = vst.msk [vmem:[#allocation2 + $0x2a8] sm:$0xff] %vm60, 0.0
      %147 = vst.msk [vmem:[#allocation2 + $0x2b0] sm:$0xff] %vm60, 0.0
      %148 = vst.msk [vmem:[#allocation2 + $0x2b8] sm:$0xff] %vm60, 0.0
      %149 = vst.msk [vmem:[#allocation2 + $0x2c0] sm:$0xff] %vm60, 0.0
      %150 = vst.msk [vmem:[#allocation2 + $0x2c8] sm:$0xff] %vm60, 0.0
      %151 = vst.msk [vmem:[#allocation2 + $0x2d0] sm:$0xff] %vm60, 0.0
      %152 = vst.msk [vmem:[#allocation2 + $0x2d8] sm:$0xff] %vm60, 0.0
      %153 = vst.msk [vmem:[#allocation2 + $0x2e0] sm:$0xff] %vm60, 0.0
      %154 = vst.msk [vmem:[#allocation2 + $0x2e8] sm:$0xff] %vm60, 0.0
      %155 = vst.msk [vmem:[#allocation2 + $0x2f0] sm:$0xff] %vm60, 0.0
      %156 = vst.msk [vmem:[#allocation2 + $0x2f8] sm:$0xff] %vm60, 0.0
    $region57: #{tpu_custom_call.1} parent=1 // pred_fallthru
      _
    %v157 = vld [vmem:[#allocation3] sm:$0xff]
    %v158 = vld [vmem:[#allocation3 + $0x8] sm:$0xff]
    %v159 = vld [vmem:[#allocation3 + $0x10] sm:$0xff]
    %v160 = vld [vmem:[#allocation3 + $0x18] sm:$0xff]
    %v161 = vld [vmem:[#allocation3 + $0x20] sm:$0xff]
    %v162 = vld [vmem:[#allocation3 + $0x28] sm:$0xff]
    %v163 = vld [vmem:[#allocation3 + $0x30] sm:$0xff]
    %v164 = vld [vmem:[#allocation3 + $0x38] sm:$0xff]
    %v165 = vld [vmem:[#allocation3 + $0x40] sm:$0xff]
    %v166 = vld [vmem:[#allocation3 + $0x48] sm:$0xff]
    %v167 = vld [vmem:[#allocation3 + $0x50] sm:$0xff]
    %v168 = vld [vmem:[#allocation3 + $0x58] sm:$0xff]
    %v169 = vld [vmem:[#allocation3 + $0x60] sm:$0xff]
    %v170 = vld [vmem:[#allocation3 + $0x68] sm:$0xff]
    %v171 = vld [vmem:[#allocation3 + $0x70] sm:$0xff]
    %v172 = vld [vmem:[#allocation3 + $0x78] sm:$0xff]
    %v173 = vld [vmem:[#allocation3 + $0x80] sm:$0xff]
    %v174 = vld [vmem:[#allocation3 + $0x88] sm:$0xff]
    %v175 = vld [vmem:[#allocation3 + $0x90] sm:$0xff]
    %v176 = vld [vmem:[#allocation3 + $0x98] sm:$0xff]
    %v177 = vld [vmem:[#allocation3 + $0xa0] sm:$0xff]
    %v178 = vld [vmem:[#allocation3 + $0xa8] sm:$0xff]
    %v179 = vld [vmem:[#allocation3 + $0xb0] sm:$0xff]
    %v180 = vld [vmem:[#allocation3 + $0xb8] sm:$0xff]
    %v181 = vld [vmem:[#allocation3 + $0xc0] sm:$0xff]
    %v182 = vld [vmem:[#allocation3 + $0xc8] sm:$0xff]
    %v183 = vld [vmem:[#allocation3 + $0xd0] sm:$0xff]
    %v184 = vld [vmem:[#allocation3 + $0xd8] sm:$0xff]
    %v185 = vld [vmem:[#allocation3 + $0xe0] sm:$0xff]
    %v186 = vld [vmem:[#allocation3 + $0xe8] sm:$0xff]
    %v187 = vld [vmem:[#allocation3 + $0xf0] sm:$0xff]
    %v188 = vld [vmem:[#allocation3 + $0xf8] sm:$0xff]
    %v189 = vld [vmem:[#allocation3 + $0x100] sm:$0xff]
    %v190 = vld [vmem:[#allocation3 + $0x108] sm:$0xff]
    %v191 = vld [vmem:[#allocation3 + $0x110] sm:$0xff]
    %v192 = vld [vmem:[#allocation3 + $0x118] sm:$0xff]
    %v193 = vld [vmem:[#allocation3 + $0x120] sm:$0xff]
    %v194 = vld [vmem:[#allocation3 + $0x128] sm:$0xff]
    %v195 = vld [vmem:[#allocation3 + $0x130] sm:$0xff]
    %v196 = vld [vmem:[#allocation3 + $0x138] sm:$0xff]
    %v197 = vld [vmem:[#allocation3 + $0x140] sm:$0xff]
    %v198 = vld [vmem:[#allocation3 + $0x148] sm:$0xff]
    %v199 = vld [vmem:[#allocation3 + $0x150] sm:$0xff]
    %v200 = vld [vmem:[#allocation3 + $0x158] sm:$0xff]
    %v201 = vld [vmem:[#allocation3 + $0x160] sm:$0xff]
    %v202 = vld [vmem:[#allocation3 + $0x168] sm:$0xff]
    %v203 = vld [vmem:[#allocation3 + $0x170] sm:$0xff]
    %v204 = vld [vmem:[#allocation3 + $0x178] sm:$0xff]
    %v205 = vld [vmem:[#allocation3 + $0x180] sm:$0xff]
    %v206 = vld [vmem:[#allocation3 + $0x188] sm:$0xff]
    %v207 = vld [vmem:[#allocation3 + $0x190] sm:$0xff]
    %v208 = vld [vmem:[#allocation3 + $0x198] sm:$0xff]
    %v209 = vld [vmem:[#allocation3 + $0x1a0] sm:$0xff]
    %v210 = vld [vmem:[#allocation3 + $0x1a8] sm:$0xff]
    %v211 = vld [vmem:[#allocation3 + $0x1b0] sm:$0xff]
    %v212 = vld [vmem:[#allocation3 + $0x1b8] sm:$0xff]
    %v213 = vld [vmem:[#allocation3 + $0x1c0] sm:$0xff]
    %v214 = vld [vmem:[#allocation3 + $0x1c8] sm:$0xff]
    %v215 = vld [vmem:[#allocation3 + $0x1d0] sm:$0xff]
    %v216 = vld [vmem:[#allocation3 + $0x1d8] sm:$0xff]
    %v217 = vld [vmem:[#allocation3 + $0x1e0] sm:$0xff]
    %v218 = vld [vmem:[#allocation3 + $0x1e8] sm:$0xff]
    %v219 = vld [vmem:[#allocation3 + $0x1f0] sm:$0xff]
    %v220 = vld [vmem:[#allocation3 + $0x1f8] sm:$0xff]
    %v221 = vld [vmem:[#allocation3 + $0x200] sm:$0xff]
    %v222 = vld [vmem:[#allocation3 + $0x208] sm:$0xff]
    %v223 = vld [vmem:[#allocation3 + $0x210] sm:$0xff]
    %v224 = vld [vmem:[#allocation3 + $0x218] sm:$0xff]
    %v225 = vld [vmem:[#allocation3 + $0x220] sm:$0xff]
    %v226 = vld [vmem:[#allocation3 + $0x228] sm:$0xff]
    %v227 = vld [vmem:[#allocation3 + $0x230] sm:$0xff]
    %v228 = vld [vmem:[#allocation3 + $0x238] sm:$0xff]
    %v229 = vld [vmem:[#allocation3 + $0x240] sm:$0xff]
    %v230 = vld [vmem:[#allocation3 + $0x248] sm:$0xff]
    %v231 = vld [vmem:[#allocation3 + $0x250] sm:$0xff]
    %v232 = vld [vmem:[#allocation3 + $0x258] sm:$0xff]
    %v233 = vld [vmem:[#allocation3 + $0x260] sm:$0xff]
    %v234 = vld [vmem:[#allocation3 + $0x268] sm:$0xff]
    %v235 = vld [vmem:[#allocation3 + $0x270] sm:$0xff]
    %v236 = vld [vmem:[#allocation3 + $0x278] sm:$0xff]
    %v237 = vld [vmem:[#allocation3 + $0x280] sm:$0xff]
    %v238 = vld [vmem:[#allocation3 + $0x288] sm:$0xff]
    %v239 = vld [vmem:[#allocation3 + $0x290] sm:$0xff]
    %v240 = vld [vmem:[#allocation3 + $0x298] sm:$0xff]
    %v241 = vld [vmem:[#allocation3 + $0x2a0] sm:$0xff]
    %v242 = vld [vmem:[#allocation3 + $0x2a8] sm:$0xff]
    %v243 = vld [vmem:[#allocation3 + $0x2b0] sm:$0xff]
    %v244 = vld [vmem:[#allocation3 + $0x2b8] sm:$0xff]
    %v245 = vld [vmem:[#allocation3 + $0x2c0] sm:$0xff]
    %v246 = vld [vmem:[#allocation3 + $0x2c8] sm:$0xff]
    %v247 = vld [vmem:[#allocation3 + $0x2d0] sm:$0xff]
    %v248 = vld [vmem:[#allocation3 + $0x2d8] sm:$0xff]
    %v249 = vld [vmem:[#allocation3 + $0x2e0] sm:$0xff]
    %v250 = vld [vmem:[#allocation3 + $0x2e8] sm:$0xff]
    %v251 = vld [vmem:[#allocation3 + $0x2f0] sm:$0xff]
    %v252 = vld [vmem:[#allocation3 + $0x2f8] sm:$0xff]
    %v253 = vld [vmem:[#allocation2] sm:$0xff]
    %v254 = vld [vmem:[#allocation2 + $0x8] sm:$0xff]
    %v255 = vld [vmem:[#allocation2 + $0x10] sm:$0xff]
    %v256 = vld [vmem:[#allocation2 + $0x18] sm:$0xff]
    %v257 = vld [vmem:[#allocation2 + $0x20] sm:$0xff]
    %v258 = vld [vmem:[#allocation2 + $0x28] sm:$0xff]
    %v259 = vld [vmem:[#allocation2 + $0x30] sm:$0xff]
    %v260 = vld [vmem:[#allocation2 + $0x38] sm:$0xff]
    %v261 = vld [vmem:[#allocation2 + $0x40] sm:$0xff]
    %v262 = vld [vmem:[#allocation2 + $0x48] sm:$0xff]
    %v263 = vld [vmem:[#allocation2 + $0x50] sm:$0xff]
    %v264 = vld [vmem:[#allocation2 + $0x58] sm:$0xff]
    %v265 = vld [vmem:[#allocation2 + $0x60] sm:$0xff]
    %v266 = vld [vmem:[#allocation2 + $0x68] sm:$0xff]
    %v267 = vld [vmem:[#allocation2 + $0x70] sm:$0xff]
    %v268 = vld [vmem:[#allocation2 + $0x78] sm:$0xff]
    %v269 = vld [vmem:[#allocation2 + $0x80] sm:$0xff]
    %v270 = vld [vmem:[#allocation2 + $0x88] sm:$0xff]
    %v271 = vld [vmem:[#allocation2 + $0x90] sm:$0xff]
    %v272 = vld [vmem:[#allocation2 + $0x98] sm:$0xff]
    %v273 = vld [vmem:[#allocation2 + $0xa0] sm:$0xff]
    %v274 = vld [vmem:[#allocation2 + $0xa8] sm:$0xff]
    %v275 = vld [vmem:[#allocation2 + $0xb0] sm:$0xff]
    %v276 = vld [vmem:[#allocation2 + $0xb8] sm:$0xff]
    %v277 = vld [vmem:[#allocation2 + $0xc0] sm:$0xff]
    %v278 = vld [vmem:[#allocation2 + $0xc8] sm:$0xff]
    %v279 = vld [vmem:[#allocation2 + $0xd0] sm:$0xff]
    %v280 = vld [vmem:[#allocation2 + $0xd8] sm:$0xff]
    %v281 = vld [vmem:[#allocation2 + $0xe0] sm:$0xff]
    %v282 = vld [vmem:[#allocation2 + $0xe8] sm:$0xff]
    %v283 = vld [vmem:[#allocation2 + $0xf0] sm:$0xff]
    %v284 = vld [vmem:[#allocation2 + $0xf8] sm:$0xff]
    %v285 = vld [vmem:[#allocation2 + $0x100] sm:$0xff]
    %v286 = vld [vmem:[#allocation2 + $0x108] sm:$0xff]
    %v287 = vld [vmem:[#allocation2 + $0x110] sm:$0xff]
    %v288 = vld [vmem:[#allocation2 + $0x118] sm:$0xff]
    %v289 = vld [vmem:[#allocation2 + $0x120] sm:$0xff]
    %v290 = vld [vmem:[#allocation2 + $0x128] sm:$0xff]
    %v291 = vld [vmem:[#allocation2 + $0x130] sm:$0xff]
    %v292 = vld [vmem:[#allocation2 + $0x138] sm:$0xff]
    %v293 = vld [vmem:[#allocation2 + $0x140] sm:$0xff]
    %v294 = vld [vmem:[#allocation2 + $0x148] sm:$0xff]
    %v295 = vld [vmem:[#allocation2 + $0x150] sm:$0xff]
    %v296 = vld [vmem:[#allocation2 + $0x158] sm:$0xff]
    %v297 = vld [vmem:[#allocation2 + $0x160] sm:$0xff]
    %v298 = vld [vmem:[#allocation2 + $0x168] sm:$0xff]
    %v299 = vld [vmem:[#allocation2 + $0x170] sm:$0xff]
    %v300 = vld [vmem:[#allocation2 + $0x178] sm:$0xff]
    %v301 = vld [vmem:[#allocation2 + $0x180] sm:$0xff]
    %v302 = vld [vmem:[#allocation2 + $0x188] sm:$0xff]
    %v303 = vld [vmem:[#allocation2 + $0x190] sm:$0xff]
    %v304 = vld [vmem:[#allocation2 + $0x198] sm:$0xff]
    %v305 = vld [vmem:[#allocation2 + $0x1a0] sm:$0xff]
    %v306 = vld [vmem:[#allocation2 + $0x1a8] sm:$0xff]
    %v307 = vld [vmem:[#allocation2 + $0x1b0] sm:$0xff]
    %v308 = vld [vmem:[#allocation2 + $0x1b8] sm:$0xff]
    %v309 = vld [vmem:[#allocation2 + $0x1c0] sm:$0xff]
    %v310 = vld [vmem:[#allocation2 + $0x1c8] sm:$0xff]
    %v311 = vld [vmem:[#allocation2 + $0x1d0] sm:$0xff]
    %v312 = vld [vmem:[#allocation2 + $0x1d8] sm:$0xff]
    %v313 = vld [vmem:[#allocation2 + $0x1e0] sm:$0xff]
    %v314 = vld [vmem:[#allocation2 + $0x1e8] sm:$0xff]
    %v315 = vld [vmem:[#allocation2 + $0x1f0] sm:$0xff]
    %v316 = vld [vmem:[#allocation2 + $0x1f8] sm:$0xff]
    %v317 = vld [vmem:[#allocation2 + $0x200] sm:$0xff]
    %v318 = vld [vmem:[#allocation2 + $0x208] sm:$0xff]
    %v319 = vld [vmem:[#allocation2 + $0x210] sm:$0xff]
    %v320 = vld [vmem:[#allocation2 + $0x218] sm:$0xff]
    %v321 = vld [vmem:[#allocation2 + $0x220] sm:$0xff]
    %v322 = vld [vmem:[#allocation2 + $0x228] sm:$0xff]
    %v323 = vld [vmem:[#allocation2 + $0x230] sm:$0xff]
    %v324 = vld [vmem:[#allocation2 + $0x238] sm:$0xff]
    %v325 = vld [vmem:[#allocation2 + $0x240] sm:$0xff]
    %v326 = vld [vmem:[#allocation2 + $0x248] sm:$0xff]
    %v327 = vld [vmem:[#allocation2 + $0x250] sm:$0xff]
    %v328 = vld [vmem:[#allocation2 + $0x258] sm:$0xff]
    %v329 = vld [vmem:[#allocation2 + $0x260] sm:$0xff]
    %v330 = vld [vmem:[#allocation2 + $0x268] sm:$0xff]
    %v331 = vld [vmem:[#allocation2 + $0x270] sm:$0xff]
    %v332 = vld [vmem:[#allocation2 + $0x278] sm:$0xff]
    %v333 = vld [vmem:[#allocation2 + $0x280] sm:$0xff]
    %v334 = vld [vmem:[#allocation2 + $0x288] sm:$0xff]
    %v335 = vld [vmem:[#allocation2 + $0x290] sm:$0xff]
    %v336 = vld [vmem:[#allocation2 + $0x298] sm:$0xff]
    %v337 = vld [vmem:[#allocation2 + $0x2a0] sm:$0xff]
    %v338 = vld [vmem:[#allocation2 + $0x2a8] sm:$0xff]
    %v339 = vld [vmem:[#allocation2 + $0x2b0] sm:$0xff]
    %v340 = vld [vmem:[#allocation2 + $0x2b8] sm:$0xff]
    %v341 = vld [vmem:[#allocation2 + $0x2c0] sm:$0xff]
    %v342 = vld [vmem:[#allocation2 + $0x2c8] sm:$0xff]
    %v343 = vld [vmem:[#allocation2 + $0x2d0] sm:$0xff]
    %v344 = vld [vmem:[#allocation2 + $0x2d8] sm:$0xff]
    %v345 = vld [vmem:[#allocation2 + $0x2e0] sm:$0xff]
    %v346 = vld [vmem:[#allocation2 + $0x2e8] sm:$0xff]
    %v347 = vld [vmem:[#allocation2 + $0x2f0] sm:$0xff]
    %v348 = vld [vmem:[#allocation2 + $0x2f8] sm:$0xff]
    %v349 = vld [vmem:[%s1] sm:$0xf]
    %v350 = vld [vmem:[%s1 + $0x4] sm:$0xf]
    %v351 = vld [vmem:[%s1 + $0x8] sm:$0xf]
    %v352 = vld [vmem:[%s1 + $0xc] sm:$0xf]
    %v353 = vld [vmem:[%s1 + $0x10] sm:$0xf]
    %v354 = vld [vmem:[%s1 + $0x14] sm:$0xf]
    %v355 = vld [vmem:[%s1 + $0x18] sm:$0xf]
    %v356 = vld [vmem:[%s1 + $0x1c] sm:$0xf]
    %v357 = vld [vmem:[%s1 + $0x20] sm:$0xf]
    %v358 = vld [vmem:[%s1 + $0x24] sm:$0xf]
    %v359 = vld [vmem:[%s1 + $0x28] sm:$0xf]
    %v360 = vld [vmem:[%s1 + $0x2c] sm:$0xf]
    %v361 = vld [vmem:[%s1 + $0x30] sm:$0xf]
    %v362 = vld [vmem:[%s1 + $0x34] sm:$0xf]
    %v363 = vld [vmem:[%s1 + $0x38] sm:$0xf]
    %v364 = vld [vmem:[%s1 + $0x3c] sm:$0xf]
    %v365 = vld [vmem:[%s1 + $0x40] sm:$0xf]
    %v366 = vld [vmem:[%s1 + $0x44] sm:$0xf]
    %v367 = vld [vmem:[%s1 + $0x48] sm:$0xf]
    %v368 = vld [vmem:[%s1 + $0x4c] sm:$0xf]
    %v369 = vld [vmem:[%s1 + $0x50] sm:$0xf]
    %v370 = vld [vmem:[%s1 + $0x54] sm:$0xf]
    %v371 = vld [vmem:[%s1 + $0x58] sm:$0xf]
    %v372 = vld [vmem:[%s1 + $0x5c] sm:$0xf]
    %v373 = vld [vmem:[%s1 + $0x60] sm:$0xf]
    %v374 = vld [vmem:[%s1 + $0x64] sm:$0xf]
    %v375 = vld [vmem:[%s1 + $0x68] sm:$0xf]
    %v376 = vld [vmem:[%s1 + $0x6c] sm:$0xf]
    %v377 = vld [vmem:[%s1 + $0x70] sm:$0xf]
    %v378 = vld [vmem:[%s1 + $0x74] sm:$0xf]
    %v379 = vld [vmem:[%s1 + $0x78] sm:$0xf]
    %v380 = vld [vmem:[%s1 + $0x7c] sm:$0xf]
    %v477 = vunpack.c.l.b16 %v157
    %v478 = vunpack.c.h.b16 %v157
    %v479 = vunpack.c.l.b16 %v158
    %v480 = vunpack.c.h.b16 %v158
    %v481 = vunpack.c.l.b16 %v159
    %v482 = vunpack.c.h.b16 %v159
    %v483 = vunpack.c.l.b16 %v160
    %v484 = vunpack.c.h.b16 %v160
    %v485 = vunpack.c.l.b16 %v161
    %v486 = vunpack.c.h.b16 %v161
    %v487 = vunpack.c.l.b16 %v162
    %v488 = vunpack.c.h.b16 %v162
    %v489 = vunpack.c.l.b16 %v163
    %v490 = vunpack.c.h.b16 %v163
    %v491 = vunpack.c.l.b16 %v164
    %v492 = vunpack.c.h.b16 %v164
    %v493 = vunpack.c.l.b16 %v165
    %v494 = vunpack.c.h.b16 %v165
    %v495 = vunpack.c.l.b16 %v166
    %v496 = vunpack.c.h.b16 %v166
    %v497 = vunpack.c.l.b16 %v167
    %v498 = vunpack.c.h.b16 %v167
    %v499 = vunpack.c.l.b16 %v168
    %v500 = vunpack.c.h.b16 %v168
    %v501 = vunpack.c.l.b16 %v169
    %v502 = vunpack.c.h.b16 %v169
    %v503 = vunpack.c.l.b16 %v170
    %v504 = vunpack.c.h.b16 %v170
    %v505 = vunpack.c.l.b16 %v171
    %v506 = vunpack.c.h.b16 %v171
    %v507 = vunpack.c.l.b16 %v172
    %v508 = vunpack.c.h.b16 %v172
    %v509 = vunpack.c.l.b16 %v173
    %v510 = vunpack.c.h.b16 %v173
    %v511 = vunpack.c.l.b16 %v174
    %v512 = vunpack.c.h.b16 %v174
    %v513 = vunpack.c.l.b16 %v175
    %v514 = vunpack.c.h.b16 %v175
    %v515 = vunpack.c.l.b16 %v176
    %v516 = vunpack.c.h.b16 %v176
    %v517 = vunpack.c.l.b16 %v177
    %v518 = vunpack.c.h.b16 %v177
    %v519 = vunpack.c.l.b16 %v178
    %v520 = vunpack.c.h.b16 %v178
    %v521 = vunpack.c.l.b16 %v179
    %v522 = vunpack.c.h.b16 %v179
    %v523 = vunpack.c.l.b16 %v180
    %v524 = vunpack.c.h.b16 %v180
    %v525 = vunpack.c.l.b16 %v181
    %v526 = vunpack.c.h.b16 %v181
    %v527 = vunpack.c.l.b16 %v182
    %v528 = vunpack.c.h.b16 %v182
    %v529 = vunpack.c.l.b16 %v183
    %v530 = vunpack.c.h.b16 %v183
    %v531 = vunpack.c.l.b16 %v184
    %v532 = vunpack.c.h.b16 %v184
    %v533 = vunpack.c.l.b16 %v185
    %v534 = vunpack.c.h.b16 %v185
    %v535 = vunpack.c.l.b16 %v186
    %v536 = vunpack.c.h.b16 %v186
    %v537 = vunpack.c.l.b16 %v187
    %v538 = vunpack.c.h.b16 %v187
    %v539 = vunpack.c.l.b16 %v188
    %v540 = vunpack.c.h.b16 %v188
    %v541 = vunpack.c.l.b16 %v189
    %v542 = vunpack.c.h.b16 %v189
    %v543 = vunpack.c.l.b16 %v190
    %v544 = vunpack.c.h.b16 %v190
    %v545 = vunpack.c.l.b16 %v191
    %v546 = vunpack.c.h.b16 %v191
    %v547 = vunpack.c.l.b16 %v192
    %v548 = vunpack.c.h.b16 %v192
    %v549 = vunpack.c.l.b16 %v193
    %v550 = vunpack.c.h.b16 %v193
    %v551 = vunpack.c.l.b16 %v194
    %v552 = vunpack.c.h.b16 %v194
    %v553 = vunpack.c.l.b16 %v195
    %v554 = vunpack.c.h.b16 %v195
    %v555 = vunpack.c.l.b16 %v196
    %v556 = vunpack.c.h.b16 %v196
    %v557 = vunpack.c.l.b16 %v197
    %v558 = vunpack.c.h.b16 %v197
    %v559 = vunpack.c.l.b16 %v198
    %v560 = vunpack.c.h.b16 %v198
    %v561 = vunpack.c.l.b16 %v199
    %v562 = vunpack.c.h.b16 %v199
    %v563 = vunpack.c.l.b16 %v200
    %v564 = vunpack.c.h.b16 %v200
    %v565 = vunpack.c.l.b16 %v201
    %v566 = vunpack.c.h.b16 %v201
    %v567 = vunpack.c.l.b16 %v202
    %v568 = vunpack.c.h.b16 %v202
    %v569 = vunpack.c.l.b16 %v203
    %v570 = vunpack.c.h.b16 %v203
    %v571 = vunpack.c.l.b16 %v204
    %v572 = vunpack.c.h.b16 %v204
    %v573 = vunpack.c.l.b16 %v205
    %v574 = vunpack.c.h.b16 %v205
    %v575 = vunpack.c.l.b16 %v206
    %v576 = vunpack.c.h.b16 %v206
    %v577 = vunpack.c.l.b16 %v207
    %v578 = vunpack.c.h.b16 %v207
    %v579 = vunpack.c.l.b16 %v208
    %v580 = vunpack.c.h.b16 %v208
    %v581 = vunpack.c.l.b16 %v209
    %v582 = vunpack.c.h.b16 %v209
    %v583 = vunpack.c.l.b16 %v210
    %v584 = vunpack.c.h.b16 %v210
    %v585 = vunpack.c.l.b16 %v211
    %v586 = vunpack.c.h.b16 %v211
    %v587 = vunpack.c.l.b16 %v212
    %v588 = vunpack.c.h.b16 %v212
    %v589 = vunpack.c.l.b16 %v213
    %v590 = vunpack.c.h.b16 %v213
    %v591 = vunpack.c.l.b16 %v214
    %v592 = vunpack.c.h.b16 %v214
    %v593 = vunpack.c.l.b16 %v215
    %v594 = vunpack.c.h.b16 %v215
    %v595 = vunpack.c.l.b16 %v216
    %v596 = vunpack.c.h.b16 %v216
    %v597 = vunpack.c.l.b16 %v217
    %v598 = vunpack.c.h.b16 %v217
    %v599 = vunpack.c.l.b16 %v218
    %v600 = vunpack.c.h.b16 %v218
    %v601 = vunpack.c.l.b16 %v219
    %v602 = vunpack.c.h.b16 %v219
    %v603 = vunpack.c.l.b16 %v220
    %v604 = vunpack.c.h.b16 %v220
    %v605 = vunpack.c.l.b16 %v221
    %v606 = vunpack.c.h.b16 %v221
    %v607 = vunpack.c.l.b16 %v222
    %v608 = vunpack.c.h.b16 %v222
    %v609 = vunpack.c.l.b16 %v223
    %v610 = vunpack.c.h.b16 %v223
    %v611 = vunpack.c.l.b16 %v224
    %v612 = vunpack.c.h.b16 %v224
    %v613 = vunpack.c.l.b16 %v225
    %v614 = vunpack.c.h.b16 %v225
    %v615 = vunpack.c.l.b16 %v226
    %v616 = vunpack.c.h.b16 %v226
    %v617 = vunpack.c.l.b16 %v227
    %v618 = vunpack.c.h.b16 %v227
    %v619 = vunpack.c.l.b16 %v228
    %v620 = vunpack.c.h.b16 %v228
    %v621 = vunpack.c.l.b16 %v229
    %v622 = vunpack.c.h.b16 %v229
    %v623 = vunpack.c.l.b16 %v230
    %v624 = vunpack.c.h.b16 %v230
    %v625 = vunpack.c.l.b16 %v231
    %v626 = vunpack.c.h.b16 %v231
    %v627 = vunpack.c.l.b16 %v232
    %v628 = vunpack.c.h.b16 %v232
    %v629 = vunpack.c.l.b16 %v233
    %v630 = vunpack.c.h.b16 %v233
    %v631 = vunpack.c.l.b16 %v234
    %v632 = vunpack.c.h.b16 %v234
    %v633 = vunpack.c.l.b16 %v235
    %v634 = vunpack.c.h.b16 %v235
    %v635 = vunpack.c.l.b16 %v236
    %v636 = vunpack.c.h.b16 %v236
    %v637 = vunpack.c.l.b16 %v237
    %v638 = vunpack.c.h.b16 %v237
    %v639 = vunpack.c.l.b16 %v238
    %v640 = vunpack.c.h.b16 %v238
    %v641 = vunpack.c.l.b16 %v239
    %v642 = vunpack.c.h.b16 %v239
    %v643 = vunpack.c.l.b16 %v240
    %v644 = vunpack.c.h.b16 %v240
    %v645 = vunpack.c.l.b16 %v241
    %v646 = vunpack.c.h.b16 %v241
    %v647 = vunpack.c.l.b16 %v242
    %v648 = vunpack.c.h.b16 %v242
    %v649 = vunpack.c.l.b16 %v243
    %v650 = vunpack.c.h.b16 %v243
    %v651 = vunpack.c.l.b16 %v244
    %v652 = vunpack.c.h.b16 %v244
    %v653 = vunpack.c.l.b16 %v245
    %v654 = vunpack.c.h.b16 %v245
    %v655 = vunpack.c.l.b16 %v246
    %v656 = vunpack.c.h.b16 %v246
    %v657 = vunpack.c.l.b16 %v247
    %v658 = vunpack.c.h.b16 %v247
    %v659 = vunpack.c.l.b16 %v248
    %v660 = vunpack.c.h.b16 %v248
    %v661 = vunpack.c.l.b16 %v249
    %v662 = vunpack.c.h.b16 %v249
    %v663 = vunpack.c.l.b16 %v250
    %v664 = vunpack.c.h.b16 %v250
    %v665 = vunpack.c.l.b16 %v251
    %v666 = vunpack.c.h.b16 %v251
    %v667 = vunpack.c.l.b16 %v252
    %v668 = vunpack.c.h.b16 %v252
    %v669 = vpack.c.b16 %v479, %v477
    %v670 = vpack.c.b16 %v480, %v478
    %v671 = vpack.c.b16 %v483, %v481
    %v672 = vpack.c.b16 %v484, %v482
    %v673 = vpack.c.b16 %v487, %v485
    %v674 = vpack.c.b16 %v488, %v486
    %v675 = vpack.c.b16 %v491, %v489
    %v676 = vpack.c.b16 %v492, %v490
    %v677 = vpack.c.b16 %v495, %v493
    %v678 = vpack.c.b16 %v496, %v494
    %v679 = vpack.c.b16 %v499, %v497
    %v680 = vpack.c.b16 %v500, %v498
    %v681 = vpack.c.b16 %v503, %v501
    %v682 = vpack.c.b16 %v504, %v502
    %v683 = vpack.c.b16 %v507, %v505
    %v684 = vpack.c.b16 %v508, %v506
    %v685 = vpack.c.b16 %v511, %v509
    %v686 = vpack.c.b16 %v512, %v510
    %v687 = vpack.c.b16 %v515, %v513
    %v688 = vpack.c.b16 %v516, %v514
    %v689 = vpack.c.b16 %v519, %v517
    %v690 = vpack.c.b16 %v520, %v518
    %v691 = vpack.c.b16 %v523, %v521
    %v692 = vpack.c.b16 %v524, %v522
    %v693 = vpack.c.b16 %v527, %v525
    %v694 = vpack.c.b16 %v528, %v526
    %v695 = vpack.c.b16 %v531, %v529
    %v696 = vpack.c.b16 %v532, %v530
    %v697 = vpack.c.b16 %v535, %v533
    %v698 = vpack.c.b16 %v536, %v534
    %v699 = vpack.c.b16 %v539, %v537
    %v700 = vpack.c.b16 %v540, %v538
    %v701 = vpack.c.b16 %v543, %v541
    %v702 = vpack.c.b16 %v544, %v542
    %v703 = vpack.c.b16 %v547, %v545
    %v704 = vpack.c.b16 %v548, %v546
    %v705 = vpack.c.b16 %v551, %v549
    %v706 = vpack.c.b16 %v552, %v550
    %v707 = vpack.c.b16 %v555, %v553
    %v708 = vpack.c.b16 %v556, %v554
    %v709 = vpack.c.b16 %v559, %v557
    %v710 = vpack.c.b16 %v560, %v558
    %v711 = vpack.c.b16 %v563, %v561
    %v712 = vpack.c.b16 %v564, %v562
    %v713 = vpack.c.b16 %v567, %v565
    %v714 = vpack.c.b16 %v568, %v566
    %v715 = vpack.c.b16 %v571, %v569
    %v716 = vpack.c.b16 %v572, %v570
    %v717 = vpack.c.b16 %v575, %v573
    %v718 = vpack.c.b16 %v576, %v574
    %v719 = vpack.c.b16 %v579, %v577
    %v720 = vpack.c.b16 %v580, %v578
    %v721 = vpack.c.b16 %v583, %v581
    %v722 = vpack.c.b16 %v584, %v582
    %v723 = vpack.c.b16 %v587, %v585
    %v724 = vpack.c.b16 %v588, %v586
    %v725 = vpack.c.b16 %v591, %v589
    %v726 = vpack.c.b16 %v592, %v590
    %v727 = vpack.c.b16 %v595, %v593
    %v728 = vpack.c.b16 %v596, %v594
    %v729 = vpack.c.b16 %v599, %v597
    %v730 = vpack.c.b16 %v600, %v598
    %v731 = vpack.c.b16 %v603, %v601
    %v732 = vpack.c.b16 %v604, %v602
    %v733 = vpack.c.b16 %v607, %v605
    %v734 = vpack.c.b16 %v608, %v606
    %v735 = vpack.c.b16 %v611, %v609
    %v736 = vpack.c.b16 %v612, %v610
    %v737 = vpack.c.b16 %v615, %v613
    %v738 = vpack.c.b16 %v616, %v614
    %v739 = vpack.c.b16 %v619, %v617
    %v740 = vpack.c.b16 %v620, %v618
    %v741 = vpack.c.b16 %v623, %v621
    %v742 = vpack.c.b16 %v624, %v622
    %v743 = vpack.c.b16 %v627, %v625
    %v744 = vpack.c.b16 %v628, %v626
    %v745 = vpack.c.b16 %v631, %v629
    %v746 = vpack.c.b16 %v632, %v630
    %v747 = vpack.c.b16 %v635, %v633
    %v748 = vpack.c.b16 %v636, %v634
    %v749 = vpack.c.b16 %v639, %v637
    %v750 = vpack.c.b16 %v640, %v638
    %v751 = vpack.c.b16 %v643, %v641
    %v752 = vpack.c.b16 %v644, %v642
    %v753 = vpack.c.b16 %v647, %v645
    %v754 = vpack.c.b16 %v648, %v646
    %v755 = vpack.c.b16 %v651, %v649
    %v756 = vpack.c.b16 %v652, %v650
    %v757 = vpack.c.b16 %v655, %v653
    %v758 = vpack.c.b16 %v656, %v654
    %v759 = vpack.c.b16 %v659, %v657
    %v760 = vpack.c.b16 %v660, %v658
    %v761 = vpack.c.b16 %v663, %v661
    %v762 = vpack.c.b16 %v664, %v662
    %v763 = vpack.c.b16 %v667, %v665
    %v764 = vpack.c.b16 %v668, %v666
    %v893 = vunpack.c.l.b16 %v349
    %v894 = vunpack.c.l.b16 %v350
    %v895 = vunpack.c.l.b16 %v351
    %v896 = vunpack.c.l.b16 %v352
    %v897 = vunpack.c.l.b16 %v353
    %v898 = vunpack.c.l.b16 %v354
    %v899 = vunpack.c.l.b16 %v355
    %v900 = vunpack.c.l.b16 %v356
    %v901 = vunpack.c.l.b16 %v357
    %v902 = vunpack.c.l.b16 %v358
    %v903 = vunpack.c.l.b16 %v359
    %v904 = vunpack.c.l.b16 %v360
    %v905 = vunpack.c.l.b16 %v361
    %v906 = vunpack.c.l.b16 %v362
    %v907 = vunpack.c.l.b16 %v363
    %v908 = vunpack.c.l.b16 %v364
    %v909 = vunpack.c.l.b16 %v365
    %v910 = vunpack.c.l.b16 %v366
    %v911 = vunpack.c.l.b16 %v367
    %v912 = vunpack.c.l.b16 %v368
    %v913 = vunpack.c.l.b16 %v369
    %v914 = vunpack.c.l.b16 %v370
    %v915 = vunpack.c.l.b16 %v371
    %v916 = vunpack.c.l.b16 %v372
    %v917 = vunpack.c.l.b16 %v373
    %v918 = vunpack.c.l.b16 %v374
    %v919 = vunpack.c.l.b16 %v375
    %v920 = vunpack.c.l.b16 %v376
    %v921 = vunpack.c.l.b16 %v377
    %v922 = vunpack.c.l.b16 %v378
    %v923 = vunpack.c.l.b16 %v379
    %v924 = vunpack.c.l.b16 %v380
    %v925 = vpack.c.b16 %v894, %v893
    %v926 = vpack.c.b16 %v896, %v895
    %v927 = vpack.c.b16 %v898, %v897
    %v928 = vpack.c.b16 %v900, %v899
    %v929 = vpack.c.b16 %v902, %v901
    %v930 = vpack.c.b16 %v904, %v903
    %v931 = vpack.c.b16 %v906, %v905
    %v932 = vpack.c.b16 %v908, %v907
    %v933 = vpack.c.b16 %v910, %v909
    %v934 = vpack.c.b16 %v912, %v911
    %v935 = vpack.c.b16 %v914, %v913
    %v936 = vpack.c.b16 %v916, %v915
    %v937 = vpack.c.b16 %v918, %v917
    %v938 = vpack.c.b16 %v920, %v919
    %v939 = vpack.c.b16 %v922, %v921
    %v940 = vpack.c.b16 %v924, %v923
    %957 = vmatprep.subr.bf16.mxu0 0
    %958 = vmatpush1.bf16.msra.mxu0 %v925
    %959 = vmatprep.subr.bf16.mxu0 0
    %960 = vmatpush1.bf16.msra.mxu0 %v926
    %961 = vmatprep.subr.bf16.mxu0 0
    %962 = vmatpush1.bf16.msra.mxu0 %v927
    %963 = vmatprep.subr.bf16.mxu0 0
    %964 = vmatpush1.bf16.msra.mxu0 %v928
    %965 = vmatprep.subr.bf16.mxu0 0
    %966 = vmatpush1.bf16.msra.mxu0 %v929
    %967 = vmatprep.subr.bf16.mxu0 0
    %968 = vmatpush1.bf16.msra.mxu0 %v930
    %969 = vmatprep.subr.bf16.mxu0 0
    %970 = vmatpush1.bf16.msra.mxu0 %v931
    %971 = vmatprep.subr.bf16.mxu0 0
    %972 = vmatpush1.bf16.msra.mxu0 %v932
    %973 = vmatprep.subr.bf16.mxu0 0
    %974 = vmatpush1.bf16.msra.mxu0 %v933
    %975 = vmatprep.subr.bf16.mxu0 0
    %976 = vmatpush1.bf16.msra.mxu0 %v934
    %977 = vmatprep.subr.bf16.mxu0 0
    %978 = vmatpush1.bf16.msra.mxu0 %v935
    %979 = vmatprep.subr.bf16.mxu0 0
    %980 = vmatpush1.bf16.msra.mxu0 %v936
    %981 = vmatprep.subr.bf16.mxu0 0
    %982 = vmatpush1.bf16.msra.mxu0 %v937
    %983 = vmatprep.subr.bf16.mxu0 0
    %984 = vmatpush1.bf16.msra.mxu0 %v938
    %985 = vmatprep.subr.bf16.mxu0 0
    %986 = vmatpush1.bf16.msra.mxu0 %v939
    %987 = vmatprep.subr.bf16.mxu0 0
    %988 = vmatpush1.bf16.msra.mxu0 %v940
    %989 = vmatprep.mubr.bf16.mxu0 %v670
    %990 = vmatmul.mubr.bf16.gmra.mrb[0].mxu0 %v669
    %v991 = vpop.f32.mrb[0].mxu0
    %v992 = vadd.f32 0.0, %v991
    %v993 = vpop.f32.mrb[0].mxu0
    %v994 = vpop.f32.mrb[0].mxu0
    %v995 = vadd.f32 0.0, %v994
    %v996 = vpop.f32.mrb[0].mxu0
    %997 = vmatprep.mubr.bf16.mxu0 %v672
    %998 = vmatmul.mubr.bf16.gmra.mrb[0].mxu0 %v671
    %v999 = vpop.f32.mrb[0].mxu0
    %v1000 = vadd.f32 0.0, %v999
    %v1001 = vpop.f32.mrb[0].mxu0
    %v1002 = vpop.f32.mrb[0].mxu0
    %v1003 = vadd.f32 0.0, %v1002
    %v1004 = vpop.f32.mrb[0].mxu0
    %1005 = vmatprep.mubr.bf16.mxu0 %v674
    %1006 = vmatmul.mubr.bf16.gmra.mrb[0].mxu0 %v673
    %v1007 = vpop.f32.mrb[0].mxu0
    %v1008 = vadd.f32 0.0, %v1007
    %v1009 = vpop.f32.mrb[0].mxu0
    %v1010 = vpop.f32.mrb[0].mxu0
    %v1011 = vadd.f32 0.0, %v1010
    %v1012 = vpop.f32.mrb[0].mxu0
    %1013 = vmatprep.mubr.bf16.mxu0 %v676
    %1014 = vmatmul.mubr.bf16.gmra.mrb[0].mxu0 %v675
    %v1015 = vpop.f32.mrb[0].mxu0
    %v1016 = vadd.f32 0.0, %v1015
    %v1017 = vpop.f32.mrb[0].mxu0
    %v1018 = vpop.f32.mrb[0].mxu0
    %v1019 = vadd.f32 0.0, %v1018
    %v1020 = vpop.f32.mrb[0].mxu0
    %1021 = vmatprep.mubr.bf16.mxu0 %v678
    %1022 = vmatmul.mubr.bf16.gmra.mrb[0].mxu0 %v677
    %v1023 = vpop.f32.mrb[0].mxu0
    %v1024 = vadd.f32 0.0, %v1023
    %v1025 = vpop.f32.mrb[0].mxu0
    %v1026 = vpop.f32.mrb[0].mxu0
    %v1027 = vadd.f32 0.0, %v1026
    %v1028 = vpop.f32.mrb[0].mxu0
    %1029 = vmatprep.mubr.bf16.mxu0 %v680
    %1030 = vmatmul.mubr.bf16.gmra.mrb[0].mxu0 %v679
    %v1031 = vpop.f32.mrb[0].mxu0
    %v1032 = vadd.f32 0.0, %v1031
    %v1033 = vpop.f32.mrb[0].mxu0
    %v1034 = vpop.f32.mrb[0].mxu0
    %v1035 = vadd.f32 0.0, %v1034
    %v1036 = vpop.f32.mrb[0].mxu0
    %1037 = vmatprep.mubr.bf16.mxu0 %v682
    %1038 = vmatmul.mubr.bf16.gmra.mrb[0].mxu0 %v681
    %v1039 = vpop.f32.mrb[0].mxu0
    %v1040 = vadd.f32 0.0, %v1039
    %v1041 = vpop.f32.mrb[0].mxu0
    %v1042 = vpop.f32.mrb[0].mxu0
    %v1043 = vadd.f32 0.0, %v1042
    %v1044 = vpop.f32.mrb[0].mxu0
    %1045 = vmatprep.mubr.bf16.mxu0 %v684
    %1046 = vmatmul.mubr.bf16.gmra.mrb[0].mxu0 %v683
    %v1047 = vpop.f32.mrb[0].mxu0
    %v1048 = vadd.f32 0.0, %v1047
    %v1049 = vpop.f32.mrb[0].mxu0
    %v1050 = vpop.f32.mrb[0].mxu0
    %v1051 = vadd.f32 0.0, %v1050
    %v1052 = vpop.f32.mrb[0].mxu0
    %1053 = vmatprep.mubr.bf16.mxu0 %v686
    %1054 = vmatmul.mubr.bf16.gmra.mrb[0].mxu0 %v685
    %v1055 = vpop.f32.mrb[0].mxu0
    %v1056 = vadd.f32 0.0, %v1055
    %v1057 = vpop.f32.mrb[0].mxu0
    %v1058 = vpop.f32.mrb[0].mxu0
    %v1059 = vadd.f32 0.0, %v1058
    %v1060 = vpop.f32.mrb[0].mxu0
    %1061 = vmatprep.mubr.bf16.mxu0 %v688
    %1062 = vmatmul.mubr.bf16.gmra.mrb[0].mxu0 %v687
    %v1063 = vpop.f32.mrb[0].mxu0
    %v1064 = vadd.f32 0.0, %v1063
    %v1065 = vpop.f32.mrb[0].mxu0
    %v1066 = vpop.f32.mrb[0].mxu0
    %v1067 = vadd.f32 0.0, %v1066
    %v1068 = vpop.f32.mrb[0].mxu0
    %1069 = vmatprep.mubr.bf16.mxu0 %v690
    %1070 = vmatmul.mubr.bf16.gmra.mrb[0].mxu0 %v689
    %v1071 = vpop.f32.mrb[0].mxu0
    %v1072 = vadd.f32 0.0, %v1071
    %v1073 = vpop.f32.mrb[0].mxu0
    %v1074 = vpop.f32.mrb[0].mxu0
    %v1075 = vadd.f32 0.0, %v1074
    %v1076 = vpop.f32.mrb[0].mxu0
    %1077 = vmatprep.mubr.bf16.mxu0 %v692
    %1078 = vmatmul.mubr.bf16.gmra.mrb[0].mxu0 %v691
    %v1079 = vpop.f32.mrb[0].mxu0
    %v1080 = vadd.f32 0.0, %v1079
    %v1081 = vpop.f32.mrb[0].mxu0
    %v1082 = vpop.f32.mrb[0].mxu0
    %v1083 = vadd.f32 0.0, %v1082
    %v1084 = vpop.f32.mrb[0].mxu0
    %1085 = vmatprep.mubr.bf16.mxu0 %v694
    %1086 = vmatmul.mubr.bf16.gmra.mrb[0].mxu0 %v693
    %v1087 = vpop.f32.mrb[0].mxu0
    %v1088 = vadd.f32 0.0, %v1087
    %v1089 = vpop.f32.mrb[0].mxu0
    %v1090 = vpop.f32.mrb[0].mxu0
    %v1091 = vadd.f32 0.0, %v1090
    %v1092 = vpop.f32.mrb[0].mxu0
    %1093 = vmatprep.mubr.bf16.mxu0 %v696
    %1094 = vmatmul.mubr.bf16.gmra.mrb[0].mxu0 %v695
    %v1095 = vpop.f32.mrb[0].mxu0
    %v1096 = vadd.f32 0.0, %v1095
    %v1097 = vpop.f32.mrb[0].mxu0
    %v1098 = vpop.f32.mrb[0].mxu0
    %v1099 = vadd.f32 0.0, %v1098
    %v1100 = vpop.f32.mrb[0].mxu0
    %1101 = vmatprep.mubr.bf16.mxu0 %v698
    %1102 = vmatmul.mubr.bf16.gmra.mrb[0].mxu0 %v697
    %v1103 = vpop.f32.mrb[0].mxu0
    %v1104 = vadd.f32 0.0, %v1103
    %v1105 = vpop.f32.mrb[0].mxu0
    %v1106 = vpop.f32.mrb[0].mxu0
    %v1107 = vadd.f32 0.0, %v1106
    %v1108 = vpop.f32.mrb[0].mxu0
    %1109 = vmatprep.mubr.bf16.mxu0 %v700
    %1110 = vmatmul.mubr.bf16.gmra.mrb[0].mxu0 %v699
    %v1111 = vpop.f32.mrb[0].mxu0
    %v1112 = vadd.f32 0.0, %v1111
    %v1113 = vpop.f32.mrb[0].mxu0
    %v1114 = vpop.f32.mrb[0].mxu0
    %v1115 = vadd.f32 0.0, %v1114
    %v1116 = vpop.f32.mrb[0].mxu0
    %1117 = vmatprep.mubr.bf16.mxu0 %v702
    %1118 = vmatmul.mubr.bf16.gmra.mrb[0].mxu0 %v701
    %v1119 = vpop.f32.mrb[0].mxu0
    %v1120 = vadd.f32 0.0, %v1119
    %v1121 = vpop.f32.mrb[0].mxu0
    %v1122 = vpop.f32.mrb[0].mxu0
    %v1123 = vadd.f32 0.0, %v1122
    %v1124 = vpop.f32.mrb[0].mxu0
    %1125 = vmatprep.mubr.bf16.mxu0 %v704
    %1126 = vmatmul.mubr.bf16.gmra.mrb[0].mxu0 %v703
    %v1127 = vpop.f32.mrb[0].mxu0
    %v1128 = vadd.f32 0.0, %v1127
    %v1129 = vpop.f32.mrb[0].mxu0
    %v1130 = vpop.f32.mrb[0].mxu0
    %v1131 = vadd.f32 0.0, %v1130
    %v1132 = vpop.f32.mrb[0].mxu0
    %1133 = vmatprep.mubr.bf16.mxu0 %v706
    %1134 = vmatmul.mubr.bf16.gmra.mrb[0].mxu0 %v705
    %v1135 = vpop.f32.mrb[0].mxu0
    %v1136 = vadd.f32 0.0, %v1135
    %v1137 = vpop.f32.mrb[0].mxu0
    %v1138 = vpop.f32.mrb[0].mxu0
    %v1139 = vadd.f32 0.0, %v1138
    %v1140 = vpop.f32.mrb[0].mxu0
    %1141 = vmatprep.mubr.bf16.mxu0 %v708
    %1142 = vmatmul.mubr.bf16.gmra.mrb[0].mxu0 %v707
    %v1143 = vpop.f32.mrb[0].mxu0
    %v1144 = vadd.f32 0.0, %v1143
    %v1145 = vpop.f32.mrb[0].mxu0
    %v1146 = vpop.f32.mrb[0].mxu0
    %v1147 = vadd.f32 0.0, %v1146
    %v1148 = vpop.f32.mrb[0].mxu0
    %1149 = vmatprep.mubr.bf16.mxu0 %v710
    %1150 = vmatmul.mubr.bf16.gmra.mrb[0].mxu0 %v709
    %v1151 = vpop.f32.mrb[0].mxu0
    %v1152 = vadd.f32 0.0, %v1151
    %v1153 = vpop.f32.mrb[0].mxu0
    %v1154 = vpop.f32.mrb[0].mxu0
    %v1155 = vadd.f32 0.0, %v1154
    %v1156 = vpop.f32.mrb[0].mxu0
    %1157 = vmatprep.mubr.bf16.mxu0 %v712
    %1158 = vmatmul.mubr.bf16.gmra.mrb[0].mxu0 %v711
    %v1159 = vpop.f32.mrb[0].mxu0
    %v1160 = vadd.f32 0.0, %v1159
    %v1161 = vpop.f32.mrb[0].mxu0
    %v1162 = vpop.f32.mrb[0].mxu0
    %v1163 = vadd.f32 0.0, %v1162
    %v1164 = vpop.f32.mrb[0].mxu0
    %1165 = vmatprep.mubr.bf16.mxu0 %v714
    %1166 = vmatmul.mubr.bf16.gmra.mrb[0].mxu0 %v713
    %v1167 = vpop.f32.mrb[0].mxu0
    %v1168 = vadd.f32 0.0, %v1167
    %v1169 = vpop.f32.mrb[0].mxu0
    %v1170 = vpop.f32.mrb[0].mxu0
    %v1171 = vadd.f32 0.0, %v1170
    %v1172 = vpop.f32.mrb[0].mxu0
    %1173 = vmatprep.mubr.bf16.mxu0 %v716
    %1174 = vmatmul.mubr.bf16.gmra.mrb[0].mxu0 %v715
    %v1175 = vpop.f32.mrb[0].mxu0
    %v1176 = vadd.f32 0.0, %v1175
    %v1177 = vpop.f32.mrb[0].mxu0
    %v1178 = vpop.f32.mrb[0].mxu0
    %v1179 = vadd.f32 0.0, %v1178
    %v1180 = vpop.f32.mrb[0].mxu0
    %1181 = vmatprep.mubr.bf16.mxu0 %v718
    %1182 = vmatmul.mubr.bf16.gmra.mrb[0].mxu0 %v717
    %v1183 = vpop.f32.mrb[0].mxu0
    %v1184 = vadd.f32 0.0, %v1183
    %v1185 = vpop.f32.mrb[0].mxu0
    %v1186 = vpop.f32.mrb[0].mxu0
    %v1187 = vadd.f32 0.0, %v1186
    %v1188 = vpop.f32.mrb[0].mxu0
    %1189 = vmatprep.mubr.bf16.mxu0 %v720
    %1190 = vmatmul.mubr.bf16.gmra.mrb[0].mxu0 %v719
    %v1191 = vpop.f32.mrb[0].mxu0
    %v1192 = vadd.f32 0.0, %v1191
    %v1193 = vpop.f32.mrb[0].mxu0
    %v1194 = vpop.f32.mrb[0].mxu0
    %v1195 = vadd.f32 0.0, %v1194
    %v1196 = vpop.f32.mrb[0].mxu0
    %1197 = vmatprep.mubr.bf16.mxu0 %v722
    %1198 = vmatmul.mubr.bf16.gmra.mrb[0].mxu0 %v721
    %v1199 = vpop.f32.mrb[0].mxu0
    %v1200 = vadd.f32 0.0, %v1199
    %v1201 = vpop.f32.mrb[0].mxu0
    %v1202 = vpop.f32.mrb[0].mxu0
    %v1203 = vadd.f32 0.0, %v1202
    %v1204 = vpop.f32.mrb[0].mxu0
    %1205 = vmatprep.mubr.bf16.mxu0 %v724
    %1206 = vmatmul.mubr.bf16.gmra.mrb[0].mxu0 %v723
    %v1207 = vpop.f32.mrb[0].mxu0
    %v1208 = vadd.f32 0.0, %v1207
    %v1209 = vpop.f32.mrb[0].mxu0
    %v1210 = vpop.f32.mrb[0].mxu0
    %v1211 = vadd.f32 0.0, %v1210
    %v1212 = vpop.f32.mrb[0].mxu0
    %1213 = vmatprep.mubr.bf16.mxu0 %v726
    %1214 = vmatmul.mubr.bf16.gmra.mrb[0].mxu0 %v725
    %v1215 = vpop.f32.mrb[0].mxu0
    %v1216 = vadd.f32 0.0, %v1215
    %v1217 = vpop.f32.mrb[0].mxu0
    %v1218 = vpop.f32.mrb[0].mxu0
    %v1219 = vadd.f32 0.0, %v1218
    %v1220 = vpop.f32.mrb[0].mxu0
    %1221 = vmatprep.mubr.bf16.mxu0 %v728
    %1222 = vmatmul.mubr.bf16.gmra.mrb[0].mxu0 %v727
    %v1223 = vpop.f32.mrb[0].mxu0
    %v1224 = vadd.f32 0.0, %v1223
    %v1225 = vpop.f32.mrb[0].mxu0
    %v1226 = vpop.f32.mrb[0].mxu0
    %v1227 = vadd.f32 0.0, %v1226
    %v1228 = vpop.f32.mrb[0].mxu0
    %1229 = vmatprep.mubr.bf16.mxu0 %v730
    %1230 = vmatmul.mubr.bf16.gmra.mrb[0].mxu0 %v729
    %v1231 = vpop.f32.mrb[0].mxu0
    %v1232 = vadd.f32 0.0, %v1231
    %v1233 = vpop.f32.mrb[0].mxu0
    %v1234 = vpop.f32.mrb[0].mxu0
    %v1235 = vadd.f32 0.0, %v1234
    %v1236 = vpop.f32.mrb[0].mxu0
    %1237 = vmatprep.mubr.bf16.mxu0 %v732
    %1238 = vmatmul.mubr.bf16.gmra.mrb[0].mxu0 %v731
    %v1239 = vpop.f32.mrb[0].mxu0
    %v1240 = vadd.f32 0.0, %v1239
    %v1241 = vpop.f32.mrb[0].mxu0
    %v1242 = vpop.f32.mrb[0].mxu0
    %v1243 = vadd.f32 0.0, %v1242
    %v1244 = vpop.f32.mrb[0].mxu0
    %1245 = vmatprep.mubr.bf16.mxu0 %v734
    %1246 = vmatmul.mubr.bf16.gmra.mrb[0].mxu0 %v733
    %v1247 = vpop.f32.mrb[0].mxu0
    %v1248 = vadd.f32 0.0, %v1247
    %v1249 = vpop.f32.mrb[0].mxu0
    %v1250 = vpop.f32.mrb[0].mxu0
    %v1251 = vadd.f32 0.0, %v1250
    %v1252 = vpop.f32.mrb[0].mxu0
    %1253 = vmatprep.mubr.bf16.mxu0 %v736
    %1254 = vmatmul.mubr.bf16.gmra.mrb[0].mxu0 %v735
    %v1255 = vpop.f32.mrb[0].mxu0
    %v1256 = vadd.f32 0.0, %v1255
    %v1257 = vpop.f32.mrb[0].mxu0
    %v1258 = vpop.f32.mrb[0].mxu0
    %v1259 = vadd.f32 0.0, %v1258
    %v1260 = vpop.f32.mrb[0].mxu0
    %1261 = vmatprep.mubr.bf16.mxu0 %v738
    %1262 = vmatmul.mubr.bf16.gmra.mrb[0].mxu0 %v737
    %v1263 = vpop.f32.mrb[0].mxu0
    %v1264 = vadd.f32 0.0, %v1263
    %v1265 = vpop.f32.mrb[0].mxu0
    %v1266 = vpop.f32.mrb[0].mxu0
    %v1267 = vadd.f32 0.0, %v1266
    %v1268 = vpop.f32.mrb[0].mxu0
    %1269 = vmatprep.mubr.bf16.mxu0 %v740
    %1270 = vmatmul.mubr.bf16.gmra.mrb[0].mxu0 %v739
    %v1271 = vpop.f32.mrb[0].mxu0
    %v1272 = vadd.f32 0.0, %v1271
    %v1273 = vpop.f32.mrb[0].mxu0
    %v1274 = vpop.f32.mrb[0].mxu0
    %v1275 = vadd.f32 0.0, %v1274
    %v1276 = vpop.f32.mrb[0].mxu0
    %1277 = vmatprep.mubr.bf16.mxu0 %v742
    %1278 = vmatmul.mubr.bf16.gmra.mrb[0].mxu0 %v741
    %v1279 = vpop.f32.mrb[0].mxu0
    %v1280 = vadd.f32 0.0, %v1279
    %v1281 = vpop.f32.mrb[0].mxu0
    %v1282 = vpop.f32.mrb[0].mxu0
    %v1283 = vadd.f32 0.0, %v1282
    %v1284 = vpop.f32.mrb[0].mxu0
    %1285 = vmatprep.mubr.bf16.mxu0 %v744
    %1286 = vmatmul.mubr.bf16.gmra.mrb[0].mxu0 %v743
    %v1287 = vpop.f32.mrb[0].mxu0
    %v1288 = vadd.f32 0.0, %v1287
    %v1289 = vpop.f32.mrb[0].mxu0
    %v1290 = vpop.f32.mrb[0].mxu0
    %v1291 = vadd.f32 0.0, %v1290
    %v1292 = vpop.f32.mrb[0].mxu0
    %1293 = vmatprep.mubr.bf16.mxu0 %v746
    %1294 = vmatmul.mubr.bf16.gmra.mrb[0].mxu0 %v745
    %v1295 = vpop.f32.mrb[0].mxu0
    %v1296 = vadd.f32 0.0, %v1295
    %v1297 = vpop.f32.mrb[0].mxu0
    %v1298 = vpop.f32.mrb[0].mxu0
    %v1299 = vadd.f32 0.0, %v1298
    %v1300 = vpop.f32.mrb[0].mxu0
    %1301 = vmatprep.mubr.bf16.mxu0 %v748
    %1302 = vmatmul.mubr.bf16.gmra.mrb[0].mxu0 %v747
    %v1303 = vpop.f32.mrb[0].mxu0
    %v1304 = vadd.f32 0.0, %v1303
    %v1305 = vpop.f32.mrb[0].mxu0
    %v1306 = vpop.f32.mrb[0].mxu0
    %v1307 = vadd.f32 0.0, %v1306
    %v1308 = vpop.f32.mrb[0].mxu0
    %1309 = vmatprep.mubr.bf16.mxu0 %v750
    %1310 = vmatmul.mubr.bf16.gmra.mrb[0].mxu0 %v749
    %v1311 = vpop.f32.mrb[0].mxu0
    %v1312 = vadd.f32 0.0, %v1311
    %v1313 = vpop.f32.mrb[0].mxu0
    %v1314 = vpop.f32.mrb[0].mxu0
    %v1315 = vadd.f32 0.0, %v1314
    %v1316 = vpop.f32.mrb[0].mxu0
    %1317 = vmatprep.mubr.bf16.mxu0 %v752
    %1318 = vmatmul.mubr.bf16.gmra.mrb[0].mxu0 %v751
    %v1319 = vpop.f32.mrb[0].mxu0
    %v1320 = vadd.f32 0.0, %v1319
    %v1321 = vpop.f32.mrb[0].mxu0
    %v1322 = vpop.f32.mrb[0].mxu0
    %v1323 = vadd.f32 0.0, %v1322
    %v1324 = vpop.f32.mrb[0].mxu0
    %1325 = vmatprep.mubr.bf16.mxu0 %v754
    %1326 = vmatmul.mubr.bf16.gmra.mrb[0].mxu0 %v753
    %v1327 = vpop.f32.mrb[0].mxu0
    %v1328 = vadd.f32 0.0, %v1327
    %v1329 = vpop.f32.mrb[0].mxu0
    %v1330 = vpop.f32.mrb[0].mxu0
    %v1331 = vadd.f32 0.0, %v1330
    %v1332 = vpop.f32.mrb[0].mxu0
    %1333 = vmatprep.mubr.bf16.mxu0 %v756
    %1334 = vmatmul.mubr.bf16.gmra.mrb[0].mxu0 %v755
    %v1335 = vpop.f32.mrb[0].mxu0
    %v1336 = vadd.f32 0.0, %v1335
    %v1337 = vpop.f32.mrb[0].mxu0
    %v1338 = vpop.f32.mrb[0].mxu0
    %v1339 = vadd.f32 0.0, %v1338
    %v1340 = vpop.f32.mrb[0].mxu0
    %1341 = vmatprep.mubr.bf16.mxu0 %v758
    %1342 = vmatmul.mubr.bf16.gmra.mrb[0].mxu0 %v757
    %v1343 = vpop.f32.mrb[0].mxu0
    %v1344 = vadd.f32 0.0, %v1343
    %v1345 = vpop.f32.mrb[0].mxu0
    %v1346 = vpop.f32.mrb[0].mxu0
    %v1347 = vadd.f32 0.0, %v1346
    %v1348 = vpop.f32.mrb[0].mxu0
    %1349 = vmatprep.mubr.bf16.mxu0 %v760
    %1350 = vmatmul.mubr.bf16.gmra.mrb[0].mxu0 %v759
    %v1351 = vpop.f32.mrb[0].mxu0
    %v1352 = vadd.f32 0.0, %v1351
    %v1353 = vpop.f32.mrb[0].mxu0
    %v1354 = vpop.f32.mrb[0].mxu0
    %v1355 = vadd.f32 0.0, %v1354
    %v1356 = vpop.f32.mrb[0].mxu0
    %1357 = vmatprep.mubr.bf16.mxu0 %v762
    %1358 = vmatmul.mubr.bf16.gmra.mrb[0].mxu0 %v761
    %v1359 = vpop.f32.mrb[0].mxu0
    %v1360 = vadd.f32 0.0, %v1359
    %v1361 = vpop.f32.mrb[0].mxu0
    %v1362 = vpop.f32.mrb[0].mxu0
    %v1363 = vadd.f32 0.0, %v1362
    %v1364 = vpop.f32.mrb[0].mxu0
    %1365 = vmatprep.mubr.bf16.mxu0 %v764
    %1366 = vmatmul.mubr.bf16.gmra.mrb[0].mxu0 %v763
    %v1367 = vpop.f32.mrb[0].mxu0
    %v1368 = vadd.f32 0.0, %v1367
    %v1369 = vpop.f32.mrb[0].mxu0
    %v1370 = vpop.f32.mrb[0].mxu0
    %v1371 = vadd.f32 0.0, %v1370
    %v1372 = vpop.f32.mrb[0].mxu0
    %1373 = vdwg.mxu0
    %v1374 = vadd.f32 %v253, %v992
    %v1375 = vadd.f32 %v254, %v995
    %v1376 = vadd.f32 %v255, %v1000
    %v1377 = vadd.f32 %v256, %v1003
    %v1378 = vadd.f32 %v257, %v1008
    %v1379 = vadd.f32 %v258, %v1011
    %v1380 = vadd.f32 %v259, %v1016
    %v1381 = vadd.f32 %v260, %v1019
    %v1382 = vadd.f32 %v261, %v1024
    %v1383 = vadd.f32 %v262, %v1027
    %v1384 = vadd.f32 %v263, %v1032
    %v1385 = vadd.f32 %v264, %v1035
    %v1386 = vadd.f32 %v265, %v1040
    %v1387 = vadd.f32 %v266, %v1043
    %v1388 = vadd.f32 %v267, %v1048
    %v1389 = vadd.f32 %v268, %v1051
    %v1390 = vadd.f32 %v269, %v1056
    %v1391 = vadd.f32 %v270, %v1059
    %v1392 = vadd.f32 %v271, %v1064
    %v1393 = vadd.f32 %v272, %v1067
    %v1394 = vadd.f32 %v273, %v1072
    %v1395 = vadd.f32 %v274, %v1075
    %v1396 = vadd.f32 %v275, %v1080
    %v1397 = vadd.f32 %v276, %v1083
    %v1398 = vadd.f32 %v277, %v1088
    %v1399 = vadd.f32 %v278, %v1091
    %v1400 = vadd.f32 %v279, %v1096
    %v1401 = vadd.f32 %v280, %v1099
    %v1402 = vadd.f32 %v281, %v1104
    %v1403 = vadd.f32 %v282, %v1107
    %v1404 = vadd.f32 %v283, %v1112
    %v1405 = vadd.f32 %v284, %v1115
    %v1406 = vadd.f32 %v285, %v1120
    %v1407 = vadd.f32 %v286, %v1123
    %v1408 = vadd.f32 %v287, %v1128
    %v1409 = vadd.f32 %v288, %v1131
    %v1410 = vadd.f32 %v289, %v1136
    %v1411 = vadd.f32 %v290, %v1139
    %v1412 = vadd.f32 %v291, %v1144
    %v1413 = vadd.f32 %v292, %v1147
    %v1414 = vadd.f32 %v293, %v1152
    %v1415 = vadd.f32 %v294, %v1155
    %v1416 = vadd.f32 %v295, %v1160
    %v1417 = vadd.f32 %v296, %v1163
    %v1418 = vadd.f32 %v297, %v1168
    %v1419 = vadd.f32 %v298, %v1171
    %v1420 = vadd.f32 %v299, %v1176
    %v1421 = vadd.f32 %v300, %v1179
    %v1422 = vadd.f32 %v301, %v1184
    %v1423 = vadd.f32 %v302, %v1187
    %v1424 = vadd.f32 %v303, %v1192
    %v1425 = vadd.f32 %v304, %v1195
    %v1426 = vadd.f32 %v305, %v1200
    %v1427 = vadd.f32 %v306, %v1203
    %v1428 = vadd.f32 %v307, %v1208
    %v1429 = vadd.f32 %v308, %v1211
    %v1430 = vadd.f32 %v309, %v1216
    %v1431 = vadd.f32 %v310, %v1219
    %v1432 = vadd.f32 %v311, %v1224
    %v1433 = vadd.f32 %v312, %v1227
    %v1434 = vadd.f32 %v313, %v1232
    %v1435 = vadd.f32 %v314, %v1235
    %v1436 = vadd.f32 %v315, %v1240
    %v1437 = vadd.f32 %v316, %v1243
    %v1438 = vadd.f32 %v317, %v1248
    %v1439 = vadd.f32 %v318, %v1251
    %v1440 = vadd.f32 %v319, %v1256
    %v1441 = vadd.f32 %v320, %v1259
    %v1442 = vadd.f32 %v321, %v1264
    %v1443 = vadd.f32 %v322, %v1267
    %v1444 = vadd.f32 %v323, %v1272
    %v1445 = vadd.f32 %v324, %v1275
    %v1446 = vadd.f32 %v325, %v1280
    %v1447 = vadd.f32 %v326, %v1283
    %v1448 = vadd.f32 %v327, %v1288
    %v1449 = vadd.f32 %v328, %v1291
    %v1450 = vadd.f32 %v329, %v1296
    %v1451 = vadd.f32 %v330, %v1299
    %v1452 = vadd.f32 %v331, %v1304
    %v1453 = vadd.f32 %v332, %v1307
    %v1454 = vadd.f32 %v333, %v1312
    %v1455 = vadd.f32 %v334, %v1315
    %v1456 = vadd.f32 %v335, %v1320
    %v1457 = vadd.f32 %v336, %v1323
    %v1458 = vadd.f32 %v337, %v1328
    %v1459 = vadd.f32 %v338, %v1331
    %v1460 = vadd.f32 %v339, %v1336
    %v1461 = vadd.f32 %v340, %v1339
    %v1462 = vadd.f32 %v341, %v1344
    %v1463 = vadd.f32 %v342, %v1347
    %v1464 = vadd.f32 %v343, %v1352
    %v1465 = vadd.f32 %v344, %v1355
    %v1466 = vadd.f32 %v345, %v1360
    %v1467 = vadd.f32 %v346, %v1363
    %v1468 = vadd.f32 %v347, %v1368
    %v1469 = vadd.f32 %v348, %v1371
    %vm1470 = vcmask 261120
    %1471 = vst.msk [vmem:[#allocation2] sm:$0xff] %vm1470, %v1374
    %1472 = vst.msk [vmem:[#allocation2 + $0x8] sm:$0xff] %vm1470, %v1375
    %1473 = vst.msk [vmem:[#allocation2 + $0x10] sm:$0xff] %vm1470, %v1376
    %1474 = vst.msk [vmem:[#allocation2 + $0x18] sm:$0xff] %vm1470, %v1377
    %1475 = vst.msk [vmem:[#allocation2 + $0x20] sm:$0xff] %vm1470, %v1378
    %1476 = vst.msk [vmem:[#allocation2 + $0x28] sm:$0xff] %vm1470, %v1379
    %1477 = vst.msk [vmem:[#allocation2 + $0x30] sm:$0xff] %vm1470, %v1380
    %1478 = vst.msk [vmem:[#allocation2 + $0x38] sm:$0xff] %vm1470, %v1381
    %1479 = vst.msk [vmem:[#allocation2 + $0x40] sm:$0xff] %vm1470, %v1382
    %1480 = vst.msk [vmem:[#allocation2 + $0x48] sm:$0xff] %vm1470, %v1383
    %1481 = vst.msk [vmem:[#allocation2 + $0x50] sm:$0xff] %vm1470, %v1384
    %1482 = vst.msk [vmem:[#allocation2 + $0x58] sm:$0xff] %vm1470, %v1385
    %1483 = vst.msk [vmem:[#allocation2 + $0x60] sm:$0xff] %vm1470, %v1386
    %1484 = vst.msk [vmem:[#allocation2 + $0x68] sm:$0xff] %vm1470, %v1387
    %1485 = vst.msk [vmem:[#allocation2 + $0x70] sm:$0xff] %vm1470, %v1388
    %1486 = vst.msk [vmem:[#allocation2 + $0x78] sm:$0xff] %vm1470, %v1389
    %1487 = vst.msk [vmem:[#allocation2 + $0x80] sm:$0xff] %vm1470, %v1390
    %1488 = vst.msk [vmem:[#allocation2 + $0x88] sm:$0xff] %vm1470, %v1391
    %1489 = vst.msk [vmem:[#allocation2 + $0x90] sm:$0xff] %vm1470, %v1392
    %1490 = vst.msk [vmem:[#allocation2 + $0x98] sm:$0xff] %vm1470, %v1393
    %1491 = vst.msk [vmem:[#allocation2 + $0xa0] sm:$0xff] %vm1470, %v1394
    %1492 = vst.msk [vmem:[#allocation2 + $0xa8] sm:$0xff] %vm1470, %v1395
    %1493 = vst.msk [vmem:[#allocation2 + $0xb0] sm:$0xff] %vm1470, %v1396
    %1494 = vst.msk [vmem:[#allocation2 + $0xb8] sm:$0xff] %vm1470, %v1397
    %1495 = vst.msk [vmem:[#allocation2 + $0xc0] sm:$0xff] %vm1470, %v1398
    %1496 = vst.msk [vmem:[#allocation2 + $0xc8] sm:$0xff] %vm1470, %v1399
    %1497 = vst.msk [vmem:[#allocation2 + $0xd0] sm:$0xff] %vm1470, %v1400
    %1498 = vst.msk [vmem:[#allocation2 + $0xd8] sm:$0xff] %vm1470, %v1401
    %1499 = vst.msk [vmem:[#allocation2 + $0xe0] sm:$0xff] %vm1470, %v1402
    %1500 = vst.msk [vmem:[#allocation2 + $0xe8] sm:$0xff] %vm1470, %v1403
    %1501 = vst.msk [vmem:[#allocation2 + $0xf0] sm:$0xff] %vm1470, %v1404
    %1502 = vst.msk [vmem:[#allocation2 + $0xf8] sm:$0xff] %vm1470, %v1405
    %1503 = vst.msk [vmem:[#allocation2 + $0x100] sm:$0xff] %vm1470, %v1406
    %1504 = vst.msk [vmem:[#allocation2 + $0x108] sm:$0xff] %vm1470, %v1407
    %1505 = vst.msk [vmem:[#allocation2 + $0x110] sm:$0xff] %vm1470, %v1408
    %1506 = vst.msk [vmem:[#allocation2 + $0x118] sm:$0xff] %vm1470, %v1409
    %1507 = vst.msk [vmem:[#allocation2 + $0x120] sm:$0xff] %vm1470, %v1410
    %1508 = vst.msk [vmem:[#allocation2 + $0x128] sm:$0xff] %vm1470, %v1411
    %1509 = vst.msk [vmem:[#allocation2 + $0x130] sm:$0xff] %vm1470, %v1412
    %1510 = vst.msk [vmem:[#allocation2 + $0x138] sm:$0xff] %vm1470, %v1413
    %1511 = vst.msk [vmem:[#allocation2 + $0x140] sm:$0xff] %vm1470, %v1414
    %1512 = vst.msk [vmem:[#allocation2 + $0x148] sm:$0xff] %vm1470, %v1415
    %1513 = vst.msk [vmem:[#allocation2 + $0x150] sm:$0xff] %vm1470, %v1416
    %1514 = vst.msk [vmem:[#allocation2 + $0x158] sm:$0xff] %vm1470, %v1417
    %1515 = vst.msk [vmem:[#allocation2 + $0x160] sm:$0xff] %vm1470, %v1418
    %1516 = vst.msk [vmem:[#allocation2 + $0x168] sm:$0xff] %vm1470, %v1419
    %1517 = vst.msk [vmem:[#allocation2 + $0x170] sm:$0xff] %vm1470, %v1420
    %1518 = vst.msk [vmem:[#allocation2 + $0x178] sm:$0xff] %vm1470, %v1421
    %1519 = vst.msk [vmem:[#allocation2 + $0x180] sm:$0xff] %vm1470, %v1422
    %1520 = vst.msk [vmem:[#allocation2 + $0x188] sm:$0xff] %vm1470, %v1423
    %1521 = vst.msk [vmem:[#allocation2 + $0x190] sm:$0xff] %vm1470, %v1424
    %1522 = vst.msk [vmem:[#allocation2 + $0x198] sm:$0xff] %vm1470, %v1425
    %1523 = vst.msk [vmem:[#allocation2 + $0x1a0] sm:$0xff] %vm1470, %v1426
    %1524 = vst.msk [vmem:[#allocation2 + $0x1a8] sm:$0xff] %vm1470, %v1427
    %1525 = vst.msk [vmem:[#allocation2 + $0x1b0] sm:$0xff] %vm1470, %v1428
    %1526 = vst.msk [vmem:[#allocation2 + $0x1b8] sm:$0xff] %vm1470, %v1429
    %1527 = vst.msk [vmem:[#allocation2 + $0x1c0] sm:$0xff] %vm1470, %v1430
    %1528 = vst.msk [vmem:[#allocation2 + $0x1c8] sm:$0xff] %vm1470, %v1431
    %1529 = vst.msk [vmem:[#allocation2 + $0x1d0] sm:$0xff] %vm1470, %v1432
    %1530 = vst.msk [vmem:[#allocation2 + $0x1d8] sm:$0xff] %vm1470, %v1433
    %1531 = vst.msk [vmem:[#allocation2 + $0x1e0] sm:$0xff] %vm1470, %v1434
    %1532 = vst.msk [vmem:[#allocation2 + $0x1e8] sm:$0xff] %vm1470, %v1435
    %1533 = vst.msk [vmem:[#allocation2 + $0x1f0] sm:$0xff] %vm1470, %v1436
    %1534 = vst.msk [vmem:[#allocation2 + $0x1f8] sm:$0xff] %vm1470, %v1437
    %1535 = vst.msk [vmem:[#allocation2 + $0x200] sm:$0xff] %vm1470, %v1438
    %1536 = vst.msk [vmem:[#allocation2 + $0x208] sm:$0xff] %vm1470, %v1439
    %1537 = vst.msk [vmem:[#allocation2 + $0x210] sm:$0xff] %vm1470, %v1440
    %1538 = vst.msk [vmem:[#allocation2 + $0x218] sm:$0xff] %vm1470, %v1441
    %1539 = vst.msk [vmem:[#allocation2 + $0x220] sm:$0xff] %vm1470, %v1442
    %1540 = vst.msk [vmem:[#allocation2 + $0x228] sm:$0xff] %vm1470, %v1443
    %1541 = vst.msk [vmem:[#allocation2 + $0x230] sm:$0xff] %vm1470, %v1444
    %1542 = vst.msk [vmem:[#allocation2 + $0x238] sm:$0xff] %vm1470, %v1445
    %1543 = vst.msk [vmem:[#allocation2 + $0x240] sm:$0xff] %vm1470, %v1446
    %1544 = vst.msk [vmem:[#allocation2 + $0x248] sm:$0xff] %vm1470, %v1447
    %1545 = vst.msk [vmem:[#allocation2 + $0x250] sm:$0xff] %vm1470, %v1448
    %1546 = vst.msk [vmem:[#allocation2 + $0x258] sm:$0xff] %vm1470, %v1449
    %1547 = vst.msk [vmem:[#allocation2 + $0x260] sm:$0xff] %vm1470, %v1450
    %1548 = vst.msk [vmem:[#allocation2 + $0x268] sm:$0xff] %vm1470, %v1451
    %1549 = vst.msk [vmem:[#allocation2 + $0x270] sm:$0xff] %vm1470, %v1452
    %1550 = vst.msk [vmem:[#allocation2 + $0x278] sm:$0xff] %vm1470, %v1453
    %1551 = vst.msk [vmem:[#allocation2 + $0x280] sm:$0xff] %vm1470, %v1454
    %1552 = vst.msk [vmem:[#allocation2 + $0x288] sm:$0xff] %vm1470, %v1455
    %1553 = vst.msk [vmem:[#allocation2 + $0x290] sm:$0xff] %vm1470, %v1456
    %1554 = vst.msk [vmem:[#allocation2 + $0x298] sm:$0xff] %vm1470, %v1457
    %1555 = vst.msk [vmem:[#allocation2 + $0x2a0] sm:$0xff] %vm1470, %v1458
    %1556 = vst.msk [vmem:[#allocation2 + $0x2a8] sm:$0xff] %vm1470, %v1459
    %1557 = vst.msk [vmem:[#allocation2 + $0x2b0] sm:$0xff] %vm1470, %v1460
    %1558 = vst.msk [vmem:[#allocation2 + $0x2b8] sm:$0xff] %vm1470, %v1461
    %1559 = vst.msk [vmem:[#allocation2 + $0x2c0] sm:$0xff] %vm1470, %v1462
    %1560 = vst.msk [vmem:[#allocation2 + $0x2c8] sm:$0xff] %vm1470, %v1463
    %1561 = vst.msk [vmem:[#allocation2 + $0x2d0] sm:$0xff] %vm1470, %v1464
    %1562 = vst.msk [vmem:[#allocation2 + $0x2d8] sm:$0xff] %vm1470, %v1465
    %1563 = vst.msk [vmem:[#allocation2 + $0x2e0] sm:$0xff] %vm1470, %v1466
    %1564 = vst.msk [vmem:[#allocation2 + $0x2e8] sm:$0xff] %vm1470, %v1467
    %1565 = vst.msk [vmem:[#allocation2 + $0x2f0] sm:$0xff] %vm1470, %v1468
    %1566 = vst.msk [vmem:[#allocation2 + $0x2f8] sm:$0xff] %vm1470, %v1469
    // Predicated region
    $region58: #{tpu_custom_call.1} parent=1 // pred_check
      %p1567 = pneg %p56
    $region59: #{tpu_custom_call.1} parent=1 // pred_check_branch
      %1569 = sbr.rel (%p1567) target = $region61
    $region60: #{tpu_custom_call.1} parent=1 // pred_region
      %v1570 = vld [vmem:[%s0] sm:$0xf]
      %v1571 = vld [vmem:[%s0 + $0x4] sm:$0xf]
      %v1572 = vld [vmem:[%s0 + $0x8] sm:$0xf]
      %v1573 = vld [vmem:[%s0 + $0xc] sm:$0xf]
      %v1574 = vld [vmem:[%s0 + $0x10] sm:$0xf]
      %v1575 = vld [vmem:[%s0 + $0x14] sm:$0xf]
      %v1576 = vld [vmem:[%s0 + $0x18] sm:$0xf]
      %v1577 = vld [vmem:[%s0 + $0x1c] sm:$0xf]
      %v1578 = vld [vmem:[%s0 + $0x20] sm:$0xf]
      %v1579 = vld [vmem:[%s0 + $0x24] sm:$0xf]
      %v1580 = vld [vmem:[%s0 + $0x28] sm:$0xf]
      %v1581 = vld [vmem:[%s0 + $0x2c] sm:$0xf]
      %v1582 = vld [vmem:[%s0 + $0x30] sm:$0xf]
      %v1583 = vld [vmem:[%s0 + $0x34] sm:$0xf]
      %v1584 = vld [vmem:[%s0 + $0x38] sm:$0xf]
      %v1585 = vld [vmem:[%s0 + $0x3c] sm:$0xf]
      %v1586 = vld [vmem:[%s0 + $0x40] sm:$0xf]
      %v1587 = vld [vmem:[%s0 + $0x44] sm:$0xf]
      %v1588 = vld [vmem:[%s0 + $0x48] sm:$0xf]
      %v1589 = vld [vmem:[%s0 + $0x4c] sm:$0xf]
      %v1590 = vld [vmem:[%s0 + $0x50] sm:$0xf]
      %v1591 = vld [vmem:[%s0 + $0x54] sm:$0xf]
      %v1592 = vld [vmem:[%s0 + $0x58] sm:$0xf]
      %v1593 = vld [vmem:[%s0 + $0x5c] sm:$0xf]
      %v1594 = vld [vmem:[%s0 + $0x60] sm:$0xf]
      %v1595 = vld [vmem:[%s0 + $0x64] sm:$0xf]
      %v1596 = vld [vmem:[%s0 + $0x68] sm:$0xf]
      %v1597 = vld [vmem:[%s0 + $0x6c] sm:$0xf]
      %v1598 = vld [vmem:[%s0 + $0x70] sm:$0xf]
      %v1599 = vld [vmem:[%s0 + $0x74] sm:$0xf]
      %v1600 = vld [vmem:[%s0 + $0x78] sm:$0xf]
      %v1601 = vld [vmem:[%s0 + $0x7c] sm:$0xf]
      %v1602 = vunpack.c.l.bf16 %v1570
      %v1603 = vunpack.c.l.bf16 %v1571
      %v1604 = vunpack.c.l.bf16 %v1572
      %v1605 = vunpack.c.l.bf16 %v1573
      %v1606 = vunpack.c.l.bf16 %v1574
      %v1607 = vunpack.c.l.bf16 %v1575
      %v1608 = vunpack.c.l.bf16 %v1576
      %v1609 = vunpack.c.l.bf16 %v1577
      %v1610 = vunpack.c.l.bf16 %v1578
      %v1611 = vunpack.c.l.bf16 %v1579
      %v1612 = vunpack.c.l.bf16 %v1580
      %v1613 = vunpack.c.l.bf16 %v1581
      %v1614 = vunpack.c.l.bf16 %v1582
      %v1615 = vunpack.c.l.bf16 %v1583
      %v1616 = vunpack.c.l.bf16 %v1584
      %v1617 = vunpack.c.l.bf16 %v1585
      %v1618 = vunpack.c.l.bf16 %v1586
      %v1619 = vunpack.c.l.bf16 %v1587
      %v1620 = vunpack.c.l.bf16 %v1588
      %v1621 = vunpack.c.l.bf16 %v1589
      %v1622 = vunpack.c.l.bf16 %v1590
      %v1623 = vunpack.c.l.bf16 %v1591
      %v1624 = vunpack.c.l.bf16 %v1592
      %v1625 = vunpack.c.l.bf16 %v1593
      %v1626 = vunpack.c.l.bf16 %v1594
      %v1627 = vunpack.c.l.bf16 %v1595
      %v1628 = vunpack.c.l.bf16 %v1596
      %v1629 = vunpack.c.l.bf16 %v1597
      %v1630 = vunpack.c.l.bf16 %v1598
      %v1631 = vunpack.c.l.bf16 %v1599
      %v1632 = vunpack.c.l.bf16 %v1600
      %v1633 = vunpack.c.l.bf16 %v1601
      %v1634 = vld [vmem:[%s4] sm:$0xf]
      %v1635 = vld [vmem:[%s4 + $0x4] sm:$0xf]
      %v1636 = vld [vmem:[%s4 + $0x8] sm:$0xf]
      %v1637 = vld [vmem:[%s4 + $0xc] sm:$0xf]
      %v1638 = vld [vmem:[%s5] sm:$0x1]
      %v1640 = vlaneseq
      %v1641 = vshrl.u32 %v1640, 7
      %v1642 = vsub.s32 0, %v1641
      %v1643 = vrot.slane %v1638, %v1642
      %v1677 = vunpack.c.l.b16 %v1570
      %v1678 = vunpack.c.l.b16 %v1571
      %v1679 = vunpack.c.l.b16 %v1572
      %v1680 = vunpack.c.l.b16 %v1573
      %v1681 = vunpack.c.l.b16 %v1574
      %v1682 = vunpack.c.l.b16 %v1575
      %v1683 = vunpack.c.l.b16 %v1576
      %v1684 = vunpack.c.l.b16 %v1577
      %v1685 = vunpack.c.l.b16 %v1578
      %v1686 = vunpack.c.l.b16 %v1579
      %v1687 = vunpack.c.l.b16 %v1580
      %v1688 = vunpack.c.l.b16 %v1581
      %v1689 = vunpack.c.l.b16 %v1582
      %v1690 = vunpack.c.l.b16 %v1583
      %v1691 = vunpack.c.l.b16 %v1584
      %v1692 = vunpack.c.l.b16 %v1585
      %v1693 = vunpack.c.l.b16 %v1586
      %v1694 = vunpack.c.l.b16 %v1587
      %v1695 = vunpack.c.l.b16 %v1588
      %v1696 = vunpack.c.l.b16 %v1589
      %v1697 = vunpack.c.l.b16 %v1590
      %v1698 = vunpack.c.l.b16 %v1591
      %v1699 = vunpack.c.l.b16 %v1592
      %v1700 = vunpack.c.l.b16 %v1593
      %v1701 = vunpack.c.l.b16 %v1594
      %v1702 = vunpack.c.l.b16 %v1595
      %v1703 = vunpack.c.l.b16 %v1596
      %v1704 = vunpack.c.l.b16 %v1597
      %v1705 = vunpack.c.l.b16 %v1598
      %v1706 = vunpack.c.l.b16 %v1599
      %v1707 = vunpack.c.l.b16 %v1600
      %v1708 = vunpack.c.l.b16 %v1601
      %v1709 = vpack.c.b16 %v1678, %v1677
      %v1710 = vpack.c.b16 %v1680, %v1679
      %v1711 = vpack.c.b16 %v1682, %v1681
      %v1712 = vpack.c.b16 %v1684, %v1683
      %v1713 = vpack.c.b16 %v1686, %v1685
      %v1714 = vpack.c.b16 %v1688, %v1687
      %v1715 = vpack.c.b16 %v1690, %v1689
      %v1716 = vpack.c.b16 %v1692, %v1691
      %v1717 = vpack.c.b16 %v1694, %v1693
      %v1718 = vpack.c.b16 %v1696, %v1695
      %v1719 = vpack.c.b16 %v1698, %v1697
      %v1720 = vpack.c.b16 %v1700, %v1699
      %v1721 = vpack.c.b16 %v1702, %v1701
      %v1722 = vpack.c.b16 %v1704, %v1703
      %v1723 = vpack.c.b16 %v1706, %v1705
      %v1724 = vpack.c.b16 %v1708, %v1707
      %v1729 = vunpack.c.l.b16 %v1634
      %v1730 = vunpack.c.l.b16 %v1635
      %v1731 = vunpack.c.l.b16 %v1636
      %v1732 = vunpack.c.l.b16 %v1637
      %v1733 = vpack.c.b16 %v1730, %v1729
      %v1734 = vpack.c.b16 %v1732, %v1731
      %v1738 = vsel %vm1470, %v1709, 0
      %v1741 = vsel %vm1470, %v1710, 0
      %v1744 = vsel %vm1470, %v1711, 0
      %v1747 = vsel %vm1470, %v1712, 0
      %v1750 = vsel %vm1470, %v1713, 0
      %v1753 = vsel %vm1470, %v1714, 0
      %v1756 = vsel %vm1470, %v1715, 0
      %v1759 = vsel %vm1470, %v1716, 0
      %v1762 = vsel %vm1470, %v1717, 0
      %v1765 = vsel %vm1470, %v1718, 0
      %v1768 = vsel %vm1470, %v1719, 0
      %v1771 = vsel %vm1470, %v1720, 0
      %v1774 = vsel %vm1470, %v1721, 0
      %v1777 = vsel %vm1470, %v1722, 0
      %v1780 = vsel %vm1470, %v1723, 0
      %v1783 = vsel %vm1470, %v1724, 0
      %1785 = vmatprep.subr.bf16.mxu0 0
      %1786 = vmatpush1.bf16.msra.mxu0 %v1733
      %1787 = vmatprep.subr.bf16.mxu0 0
      %1788 = vmatpush1.bf16.msra.mxu0 %v1734
      %1789 = vmatprep.subr.bf16.mxu0 0
      %1790 = vmatpush1.bf16.msra.mxu0 0
      %1791 = vmatprep.subr.bf16.mxu0 0
      %1792 = vmatpush1.bf16.msra.mxu0 0
      %1793 = vmatprep.subr.bf16.mxu0 0
      %1794 = vmatpush1.bf16.msra.mxu0 0
      %1795 = vmatprep.subr.bf16.mxu0 0
      %1796 = vmatpush1.bf16.msra.mxu0 0
      %1797 = vmatprep.subr.bf16.mxu0 0
      %1798 = vmatpush1.bf16.msra.mxu0 0
      %1799 = vmatprep.subr.bf16.mxu0 0
      %1800 = vmatpush1.bf16.msra.mxu0 0
      %1801 = vmatprep.subr.bf16.mxu0 0
      %1802 = vmatpush1.bf16.msra.mxu0 0
      %1803 = vmatprep.subr.bf16.mxu0 0
      %1804 = vmatpush1.bf16.msra.mxu0 0
      %1805 = vmatprep.subr.bf16.mxu0 0
      %1806 = vmatpush1.bf16.msra.mxu0 0
      %1807 = vmatprep.subr.bf16.mxu0 0
      %1808 = vmatpush1.bf16.msra.mxu0 0
      %1809 = vmatprep.subr.bf16.mxu0 0
      %1810 = vmatpush1.bf16.msra.mxu0 0
      %1811 = vmatprep.subr.bf16.mxu0 0
      %1812 = vmatpush1.bf16.msra.mxu0 0
      %1813 = vmatprep.subr.bf16.mxu0 0
      %1814 = vmatpush1.bf16.msra.mxu0 0
      %1815 = vmatprep.subr.bf16.mxu0 0
      %1816 = vmatpush1.bf16.msra.mxu0 0
      %1817 = vmatprep.mubr.bf16.mxu0 0
      %1818 = vmatmul.mubr.bf16.gmra.mrb[0].mxu0 %v1738
      %v1819 = vpop.f32.mrb[0].mxu0
      %v1820 = vadd.f32 %v1643, %v1819
      %v1821 = vpop.f32.mrb[0].mxu0
      %v1822 = vpop.f32.mrb[0].mxu0
      %v1823 = vadd.f32 %v1643, %v1822
      %v1824 = vpop.f32.mrb[0].mxu0
      %1825 = vmatprep.mubr.bf16.mxu0 0
      %1826 = vmatmul.mubr.bf16.gmra.mrb[0].mxu0 %v1741
      %v1827 = vpop.f32.mrb[0].mxu0
      %v1828 = vadd.f32 %v1643, %v1827
      %v1829 = vpop.f32.mrb[0].mxu0
      %v1830 = vpop.f32.mrb[0].mxu0
      %v1831 = vadd.f32 %v1643, %v1830
      %v1832 = vpop.f32.mrb[0].mxu0
      %1833 = vmatprep.mubr.bf16.mxu0 0
      %1834 = vmatmul.mubr.bf16.gmra.mrb[0].mxu0 %v1744
      %v1835 = vpop.f32.mrb[0].mxu0
      %v1836 = vadd.f32 %v1643, %v1835
      %v1837 = vpop.f32.mrb[0].mxu0
      %v1838 = vpop.f32.mrb[0].mxu0
      %v1839 = vadd.f32 %v1643, %v1838
      %v1840 = vpop.f32.mrb[0].mxu0
      %1841 = vmatprep.mubr.bf16.mxu0 0
      %1842 = vmatmul.mubr.bf16.gmra.mrb[0].mxu0 %v1747
      %v1843 = vpop.f32.mrb[0].mxu0
      %v1844 = vadd.f32 %v1643, %v1843
      %v1845 = vpop.f32.mrb[0].mxu0
      %v1846 = vpop.f32.mrb[0].mxu0
      %v1847 = vadd.f32 %v1643, %v1846
      %v1848 = vpop.f32.mrb[0].mxu0
      %1849 = vmatprep.mubr.bf16.mxu0 0
      %1850 = vmatmul.mubr.bf16.gmra.mrb[0].mxu0 %v1750
      %v1851 = vpop.f32.mrb[0].mxu0
      %v1852 = vadd.f32 %v1643, %v1851
      %v1853 = vpop.f32.mrb[0].mxu0
      %v1854 = vpop.f32.mrb[0].mxu0
      %v1855 = vadd.f32 %v1643, %v1854
      %v1856 = vpop.f32.mrb[0].mxu0
      %1857 = vmatprep.mubr.bf16.mxu0 0
      %1858 = vmatmul.mubr.bf16.gmra.mrb[0].mxu0 %v1753
      %v1859 = vpop.f32.mrb[0].mxu0
      %v1860 = vadd.f32 %v1643, %v1859
      %v1861 = vpop.f32.mrb[0].mxu0
      %v1862 = vpop.f32.mrb[0].mxu0
      %v1863 = vadd.f32 %v1643, %v1862
      %v1864 = vpop.f32.mrb[0].mxu0
      %1865 = vmatprep.mubr.bf16.mxu0 0
      %1866 = vmatmul.mubr.bf16.gmra.mrb[0].mxu0 %v1756
      %v1867 = vpop.f32.mrb[0].mxu0
      %v1868 = vadd.f32 %v1643, %v1867
      %v1869 = vpop.f32.mrb[0].mxu0
      %v1870 = vpop.f32.mrb[0].mxu0
      %v1871 = vadd.f32 %v1643, %v1870
      %v1872 = vpop.f32.mrb[0].mxu0
      %1873 = vmatprep.mubr.bf16.mxu0 0
      %1874 = vmatmul.mubr.bf16.gmra.mrb[0].mxu0 %v1759
      %v1875 = vpop.f32.mrb[0].mxu0
      %v1876 = vadd.f32 %v1643, %v1875
      %v1877 = vpop.f32.mrb[0].mxu0
      %v1878 = vpop.f32.mrb[0].mxu0
      %v1879 = vadd.f32 %v1643, %v1878
      %v1880 = vpop.f32.mrb[0].mxu0
      %1881 = vmatprep.mubr.bf16.mxu0 0
      %1882 = vmatmul.mubr.bf16.gmra.mrb[0].mxu0 %v1762
      %v1883 = vpop.f32.mrb[0].mxu0
      %v1884 = vadd.f32 %v1643, %v1883
      %v1885 = vpop.f32.mrb[0].mxu0
      %v1886 = vpop.f32.mrb[0].mxu0
      %v1887 = vadd.f32 %v1643, %v1886
      %v1888 = vpop.f32.mrb[0].mxu0
      %1889 = vmatprep.mubr.bf16.mxu0 0
      %1890 = vmatmul.mubr.bf16.gmra.mrb[0].mxu0 %v1765
      %v1891 = vpop.f32.mrb[0].mxu0
      %v1892 = vadd.f32 %v1643, %v1891
      %v1893 = vpop.f32.mrb[0].mxu0
      %v1894 = vpop.f32.mrb[0].mxu0
      %v1895 = vadd.f32 %v1643, %v1894
      %v1896 = vpop.f32.mrb[0].mxu0
      %1897 = vmatprep.mubr.bf16.mxu0 0
      %1898 = vmatmul.mubr.bf16.gmra.mrb[0].mxu0 %v1768
      %v1899 = vpop.f32.mrb[0].mxu0
      %v1900 = vadd.f32 %v1643, %v1899
      %v1901 = vpop.f32.mrb[0].mxu0
      %v1902 = vpop.f32.mrb[0].mxu0
      %v1903 = vadd.f32 %v1643, %v1902
      %v1904 = vpop.f32.mrb[0].mxu0
      %1905 = vmatprep.mubr.bf16.mxu0 0
      %1906 = vmatmul.mubr.bf16.gmra.mrb[0].mxu0 %v1771
      %v1907 = vpop.f32.mrb[0].mxu0
      %v1908 = vadd.f32 %v1643, %v1907
      %v1909 = vpop.f32.mrb[0].mxu0
      %v1910 = vpop.f32.mrb[0].mxu0
      %v1911 = vadd.f32 %v1643, %v1910
      %v1912 = vpop.f32.mrb[0].mxu0
      %1913 = vmatprep.mubr.bf16.mxu0 0
      %1914 = vmatmul.mubr.bf16.gmra.mrb[0].mxu0 %v1774
      %v1915 = vpop.f32.mrb[0].mxu0
      %v1916 = vadd.f32 %v1643, %v1915
      %v1917 = vpop.f32.mrb[0].mxu0
      %v1918 = vpop.f32.mrb[0].mxu0
      %v1919 = vadd.f32 %v1643, %v1918
      %v1920 = vpop.f32.mrb[0].mxu0
      %1921 = vmatprep.mubr.bf16.mxu0 0
      %1922 = vmatmul.mubr.bf16.gmra.mrb[0].mxu0 %v1777
      %v1923 = vpop.f32.mrb[0].mxu0
      %v1924 = vadd.f32 %v1643, %v1923
      %v1925 = vpop.f32.mrb[0].mxu0
      %v1926 = vpop.f32.mrb[0].mxu0
      %v1927 = vadd.f32 %v1643, %v1926
      %v1928 = vpop.f32.mrb[0].mxu0
      %1929 = vmatprep.mubr.bf16.mxu0 0
      %1930 = vmatmul.mubr.bf16.gmra.mrb[0].mxu0 %v1780
      %v1931 = vpop.f32.mrb[0].mxu0
      %v1932 = vadd.f32 %v1643, %v1931
      %v1933 = vpop.f32.mrb[0].mxu0
      %v1934 = vpop.f32.mrb[0].mxu0
      %v1935 = vadd.f32 %v1643, %v1934
      %v1936 = vpop.f32.mrb[0].mxu0
      %1937 = vmatprep.mubr.bf16.mxu0 0
      %1938 = vmatmul.mubr.bf16.gmra.mrb[0].mxu0 %v1783
      %v1939 = vpop.f32.mrb[0].mxu0
      %v1940 = vadd.f32 %v1643, %v1939
      %v1941 = vpop.f32.mrb[0].mxu0
      %v1942 = vpop.f32.mrb[0].mxu0
      %v1943 = vadd.f32 %v1643, %v1942
      %v1944 = vpop.f32.mrb[0].mxu0
      %1945 = vdwg.mxu0
      %v1946 = vld [vmem:[#allocation2] sm:$0xff]
      %v1947 = vld [vmem:[#allocation2 + $0x8] sm:$0xff]
      %v1948 = vld [vmem:[#allocation2 + $0x10] sm:$0xff]
      %v1949 = vld [vmem:[#allocation2 + $0x18] sm:$0xff]
      %v1950 = vld [vmem:[#allocation2 + $0x20] sm:$0xff]
      %v1951 = vld [vmem:[#allocation2 + $0x28] sm:$0xff]
      %v1952 = vld [vmem:[#allocation2 + $0x30] sm:$0xff]
      %v1953 = vld [vmem:[#allocation2 + $0x38] sm:$0xff]
      %v1954 = vld [vmem:[#allocation2 + $0x40] sm:$0xff]
      %v1955 = vld [vmem:[#allocation2 + $0x48] sm:$0xff]
      %v1956 = vld [vmem:[#allocation2 + $0x50] sm:$0xff]
      %v1957 = vld [vmem:[#allocation2 + $0x58] sm:$0xff]
      %v1958 = vld [vmem:[#allocation2 + $0x60] sm:$0xff]
      %v1959 = vld [vmem:[#allocation2 + $0x68] sm:$0xff]
      %v1960 = vld [vmem:[#allocation2 + $0x70] sm:$0xff]
      %v1961 = vld [vmem:[#allocation2 + $0x78] sm:$0xff]
      %v1962 = vld [vmem:[#allocation2 + $0x80] sm:$0xff]
      %v1963 = vld [vmem:[#allocation2 + $0x88] sm:$0xff]
      %v1964 = vld [vmem:[#allocation2 + $0x90] sm:$0xff]
      %v1965 = vld [vmem:[#allocation2 + $0x98] sm:$0xff]
      %v1966 = vld [vmem:[#allocation2 + $0xa0] sm:$0xff]
      %v1967 = vld [vmem:[#allocation2 + $0xa8] sm:$0xff]
      %v1968 = vld [vmem:[#allocation2 + $0xb0] sm:$0xff]
      %v1969 = vld [vmem:[#allocation2 + $0xb8] sm:$0xff]
      %v1970 = vld [vmem:[#allocation2 + $0xc0] sm:$0xff]
      %v1971 = vld [vmem:[#allocation2 + $0xc8] sm:$0xff]
      %v1972 = vld [vmem:[#allocation2 + $0xd0] sm:$0xff]
      %v1973 = vld [vmem:[#allocation2 + $0xd8] sm:$0xff]
      %v1974 = vld [vmem:[#allocation2 + $0xe0] sm:$0xff]
      %v1975 = vld [vmem:[#allocation2 + $0xe8] sm:$0xff]
      %v1976 = vld [vmem:[#allocation2 + $0xf0] sm:$0xff]
      %v1977 = vld [vmem:[#allocation2 + $0xf8] sm:$0xff]
      %v1978 = vpack.c.bf16 %v1947, %v1946
      %v1979 = vpack.c.bf16 %v1949, %v1948
      %v1980 = vpack.c.bf16 %v1951, %v1950
      %v1981 = vpack.c.bf16 %v1953, %v1952
      %v1982 = vpack.c.bf16 %v1955, %v1954
      %v1983 = vpack.c.bf16 %v1957, %v1956
      %v1984 = vpack.c.bf16 %v1959, %v1958
      %v1985 = vpack.c.bf16 %v1961, %v1960
      %v1986 = vpack.c.bf16 %v1963, %v1962
      %v1987 = vpack.c.bf16 %v1965, %v1964
      %v1988 = vpack.c.bf16 %v1967, %v1966
      %v1989 = vpack.c.bf16 %v1969, %v1968
      %v1990 = vpack.c.bf16 %v1971, %v1970
      %v1991 = vpack.c.bf16 %v1973, %v1972
      %v1992 = vpack.c.bf16 %v1975, %v1974
      %v1993 = vpack.c.bf16 %v1977, %v1976
      %v1994 = vld [vmem:[%s3] sm:$0xf]
      %v1995 = vld [vmem:[%s3 + $0x4] sm:$0xf]
      %v1996 = vld [vmem:[%s3 + $0x8] sm:$0xf]
      %v1997 = vld [vmem:[%s3 + $0xc] sm:$0xf]
      %v2002 = vunpack.c.l.b16 %v1994
      %v2003 = vunpack.c.l.b16 %v1995
      %v2004 = vunpack.c.l.b16 %v1996
      %v2005 = vunpack.c.l.b16 %v1997
      %v2006 = vpack.c.b16 %v2003, %v2002
      %v2007 = vpack.c.b16 %v2005, %v2004
      %v2011 = vsel %vm1470, %v1978, 0
      %v2014 = vsel %vm1470, %v1979, 0
      %v2017 = vsel %vm1470, %v1980, 0
      %v2020 = vsel %vm1470, %v1981, 0
      %v2023 = vsel %vm1470, %v1982, 0
      %v2026 = vsel %vm1470, %v1983, 0
      %v2029 = vsel %vm1470, %v1984, 0
      %v2032 = vsel %vm1470, %v1985, 0
      %v2035 = vsel %vm1470, %v1986, 0
      %v2038 = vsel %vm1470, %v1987, 0
      %v2041 = vsel %vm1470, %v1988, 0
      %v2044 = vsel %vm1470, %v1989, 0
      %v2047 = vsel %vm1470, %v1990, 0
      %v2050 = vsel %vm1470, %v1991, 0
      %v2053 = vsel %vm1470, %v1992, 0
      %v2056 = vsel %vm1470, %v1993, 0
      %2058 = vmatprep.subr.bf16.mxu0 0
      %2059 = vmatpush1.bf16.msra.mxu0 %v2006
      %2060 = vmatprep.subr.bf16.mxu0 0
      %2061 = vmatpush1.bf16.msra.mxu0 %v2007
      %2062 = vmatprep.subr.bf16.mxu0 0
      %2063 = vmatpush1.bf16.msra.mxu0 0
      %2064 = vmatprep.subr.bf16.mxu0 0
      %2065 = vmatpush1.bf16.msra.mxu0 0
      %2066 = vmatprep.subr.bf16.mxu0 0
      %2067 = vmatpush1.bf16.msra.mxu0 0
      %2068 = vmatprep.subr.bf16.mxu0 0
      %2069 = vmatpush1.bf16.msra.mxu0 0
      %2070 = vmatprep.subr.bf16.mxu0 0
      %2071 = vmatpush1.bf16.msra.mxu0 0
      %2072 = vmatprep.subr.bf16.mxu0 0
      %2073 = vmatpush1.bf16.msra.mxu0 0
      %2074 = vmatprep.subr.bf16.mxu0 0
      %2075 = vmatpush1.bf16.msra.mxu0 0
      %2076 = vmatprep.subr.bf16.mxu0 0
      %2077 = vmatpush1.bf16.msra.mxu0 0
      %2078 = vmatprep.subr.bf16.mxu0 0
      %2079 = vmatpush1.bf16.msra.mxu0 0
      %2080 = vmatprep.subr.bf16.mxu0 0
      %2081 = vmatpush1.bf16.msra.mxu0 0
      %2082 = vmatprep.subr.bf16.mxu0 0
      %2083 = vmatpush1.bf16.msra.mxu0 0
      %2084 = vmatprep.subr.bf16.mxu0 0
      %2085 = vmatpush1.bf16.msra.mxu0 0
      %2086 = vmatprep.subr.bf16.mxu0 0
      %2087 = vmatpush1.bf16.msra.mxu0 0
      %2088 = vmatprep.subr.bf16.mxu0 0
      %2089 = vmatpush1.bf16.msra.mxu0 0
      %2090 = vmatprep.mubr.bf16.mxu0 0
      %2091 = vmatmul.mubr.bf16.gmra.mrb[0].mxu0 %v2011
      %v2092 = vpop.f32.mrb[0].mxu0
      %v2093 = vadd.f32 0.0, %v2092
      %v2094 = vpop.f32.mrb[0].mxu0
      %v2095 = vpop.f32.mrb[0].mxu0
      %v2096 = vadd.f32 0.0, %v2095
      %v2097 = vpop.f32.mrb[0].mxu0
      %2098 = vmatprep.mubr.bf16.mxu0 0
      %2099 = vmatmul.mubr.bf16.gmra.mrb[0].mxu0 %v2014
      %v2100 = vpop.f32.mrb[0].mxu0
      %v2101 = vadd.f32 0.0, %v2100
      %v2102 = vpop.f32.mrb[0].mxu0
      %v2103 = vpop.f32.mrb[0].mxu0
      %v2104 = vadd.f32 0.0, %v2103
      %v2105 = vpop.f32.mrb[0].mxu0
      %2106 = vmatprep.mubr.bf16.mxu0 0
      %2107 = vmatmul.mubr.bf16.gmra.mrb[0].mxu0 %v2017
      %v2108 = vpop.f32.mrb[0].mxu0
      %v2109 = vadd.f32 0.0, %v2108
      %v2110 = vpop.f32.mrb[0].mxu0
      %v2111 = vpop.f32.mrb[0].mxu0
      %v2112 = vadd.f32 0.0, %v2111
      %v2113 = vpop.f32.mrb[0].mxu0
      %2114 = vmatprep.mubr.bf16.mxu0 0
      %2115 = vmatmul.mubr.bf16.gmra.mrb[0].mxu0 %v2020
      %v2116 = vpop.f32.mrb[0].mxu0
      %v2117 = vadd.f32 0.0, %v2116
      %v2118 = vpop.f32.mrb[0].mxu0
      %v2119 = vpop.f32.mrb[0].mxu0
      %v2120 = vadd.f32 0.0, %v2119
      %v2121 = vpop.f32.mrb[0].mxu0
      %2122 = vmatprep.mubr.bf16.mxu0 0
      %2123 = vmatmul.mubr.bf16.gmra.mrb[0].mxu0 %v2023
      %v2124 = vpop.f32.mrb[0].mxu0
      %v2125 = vadd.f32 0.0, %v2124
      %v2126 = vpop.f32.mrb[0].mxu0
      %v2127 = vpop.f32.mrb[0].mxu0
      %v2128 = vadd.f32 0.0, %v2127
      %v2129 = vpop.f32.mrb[0].mxu0
      %2130 = vmatprep.mubr.bf16.mxu0 0
      %2131 = vmatmul.mubr.bf16.gmra.mrb[0].mxu0 %v2026
      %v2132 = vpop.f32.mrb[0].mxu0
      %v2133 = vadd.f32 0.0, %v2132
      %v2134 = vpop.f32.mrb[0].mxu0
      %v2135 = vpop.f32.mrb[0].mxu0
      %v2136 = vadd.f32 0.0, %v2135
      %v2137 = vpop.f32.mrb[0].mxu0
      %2138 = vmatprep.mubr.bf16.mxu0 0
      %2139 = vmatmul.mubr.bf16.gmra.mrb[0].mxu0 %v2029
      %v2140 = vpop.f32.mrb[0].mxu0
      %v2141 = vadd.f32 0.0, %v2140
      %v2142 = vpop.f32.mrb[0].mxu0
      %v2143 = vpop.f32.mrb[0].mxu0
      %v2144 = vadd.f32 0.0, %v2143
      %v2145 = vpop.f32.mrb[0].mxu0
      %2146 = vmatprep.mubr.bf16.mxu0 0
      %2147 = vmatmul.mubr.bf16.gmra.mrb[0].mxu0 %v2032
      %v2148 = vpop.f32.mrb[0].mxu0
      %v2149 = vadd.f32 0.0, %v2148
      %v2150 = vpop.f32.mrb[0].mxu0
      %v2151 = vpop.f32.mrb[0].mxu0
      %v2152 = vadd.f32 0.0, %v2151
      %v2153 = vpop.f32.mrb[0].mxu0
      %2154 = vmatprep.mubr.bf16.mxu0 0
      %2155 = vmatmul.mubr.bf16.gmra.mrb[0].mxu0 %v2035
      %v2156 = vpop.f32.mrb[0].mxu0
      %v2157 = vadd.f32 0.0, %v2156
      %v2158 = vpop.f32.mrb[0].mxu0
      %v2159 = vpop.f32.mrb[0].mxu0
      %v2160 = vadd.f32 0.0, %v2159
      %v2161 = vpop.f32.mrb[0].mxu0
      %2162 = vmatprep.mubr.bf16.mxu0 0
      %2163 = vmatmul.mubr.bf16.gmra.mrb[0].mxu0 %v2038
      %v2164 = vpop.f32.mrb[0].mxu0
      %v2165 = vadd.f32 0.0, %v2164
      %v2166 = vpop.f32.mrb[0].mxu0
      %v2167 = vpop.f32.mrb[0].mxu0
      %v2168 = vadd.f32 0.0, %v2167
      %v2169 = vpop.f32.mrb[0].mxu0
      %2170 = vmatprep.mubr.bf16.mxu0 0
      %2171 = vmatmul.mubr.bf16.gmra.mrb[0].mxu0 %v2041
      %v2172 = vpop.f32.mrb[0].mxu0
      %v2173 = vadd.f32 0.0, %v2172
      %v2174 = vpop.f32.mrb[0].mxu0
      %v2175 = vpop.f32.mrb[0].mxu0
      %v2176 = vadd.f32 0.0, %v2175
      %v2177 = vpop.f32.mrb[0].mxu0
      %2178 = vmatprep.mubr.bf16.mxu0 0
      %2179 = vmatmul.mubr.bf16.gmra.mrb[0].mxu0 %v2044
      %v2180 = vpop.f32.mrb[0].mxu0
      %v2181 = vadd.f32 0.0, %v2180
      %v2182 = vpop.f32.mrb[0].mxu0
      %v2183 = vpop.f32.mrb[0].mxu0
      %v2184 = vadd.f32 0.0, %v2183
      %v2185 = vpop.f32.mrb[0].mxu0
      %2186 = vmatprep.mubr.bf16.mxu0 0
      %2187 = vmatmul.mubr.bf16.gmra.mrb[0].mxu0 %v2047
      %v2188 = vpop.f32.mrb[0].mxu0
      %v2189 = vadd.f32 0.0, %v2188
      %v2190 = vpop.f32.mrb[0].mxu0
      %v2191 = vpop.f32.mrb[0].mxu0
      %v2192 = vadd.f32 0.0, %v2191
      %v2193 = vpop.f32.mrb[0].mxu0
      %2194 = vmatprep.mubr.bf16.mxu0 0
      %2195 = vmatmul.mubr.bf16.gmra.mrb[0].mxu0 %v2050
      %v2196 = vpop.f32.mrb[0].mxu0
      %v2197 = vadd.f32 0.0, %v2196
      %v2198 = vpop.f32.mrb[0].mxu0
      %v2199 = vpop.f32.mrb[0].mxu0
      %v2200 = vadd.f32 0.0, %v2199
      %v2201 = vpop.f32.mrb[0].mxu0
      %2202 = vmatprep.mubr.bf16.mxu0 0
      %2203 = vmatmul.mubr.bf16.gmra.mrb[0].mxu0 %v2053
      %v2204 = vpop.f32.mrb[0].mxu0
      %v2205 = vadd.f32 0.0, %v2204
      %v2206 = vpop.f32.mrb[0].mxu0
      %v2207 = vpop.f32.mrb[0].mxu0
      %v2208 = vadd.f32 0.0, %v2207
      %v2209 = vpop.f32.mrb[0].mxu0
      %2210 = vmatprep.mubr.bf16.mxu0 0
      %2211 = vmatmul.mubr.bf16.gmra.mrb[0].mxu0 %v2056
      %v2212 = vpop.f32.mrb[0].mxu0
      %v2213 = vadd.f32 0.0, %v2212
      %v2214 = vpop.f32.mrb[0].mxu0
      %v2215 = vpop.f32.mrb[0].mxu0
      %v2216 = vadd.f32 0.0, %v2215
      %v2217 = vpop.f32.mrb[0].mxu0
      %2218 = vdwg.mxu0
      %v2219 = vadd.f32 %v1820, %v2093
      %v2220 = vadd.f32 %v1823, %v2096
      %v2221 = vadd.f32 %v1828, %v2101
      %v2222 = vadd.f32 %v1831, %v2104
      %v2223 = vadd.f32 %v1836, %v2109
      %v2224 = vadd.f32 %v1839, %v2112
      %v2225 = vadd.f32 %v1844, %v2117
      %v2226 = vadd.f32 %v1847, %v2120
      %v2227 = vadd.f32 %v1852, %v2125
      %v2228 = vadd.f32 %v1855, %v2128
      %v2229 = vadd.f32 %v1860, %v2133
      %v2230 = vadd.f32 %v1863, %v2136
      %v2231 = vadd.f32 %v1868, %v2141
      %v2232 = vadd.f32 %v1871, %v2144
      %v2233 = vadd.f32 %v1876, %v2149
      %v2234 = vadd.f32 %v1879, %v2152
      %v2235 = vadd.f32 %v1884, %v2157
      %v2236 = vadd.f32 %v1887, %v2160
      %v2237 = vadd.f32 %v1892, %v2165
      %v2238 = vadd.f32 %v1895, %v2168
      %v2239 = vadd.f32 %v1900, %v2173
      %v2240 = vadd.f32 %v1903, %v2176
      %v2241 = vadd.f32 %v1908, %v2181
      %v2242 = vadd.f32 %v1911, %v2184
      %v2243 = vadd.f32 %v1916, %v2189
      %v2244 = vadd.f32 %v1919, %v2192
      %v2245 = vadd.f32 %v1924, %v2197
      %v2246 = vadd.f32 %v1927, %v2200
      %v2247 = vadd.f32 %v1932, %v2205
      %v2248 = vadd.f32 %v1935, %v2208
      %v2249 = vadd.f32 %v1940, %v2213
      %v2250 = vadd.f32 %v1943, %v2216
      %v2251 = vld [vmem:[#allocation2 + $0x100] sm:$0xff]
      %v2252 = vld [vmem:[#allocation2 + $0x108] sm:$0xff]
      %v2253 = vld [vmem:[#allocation2 + $0x110] sm:$0xff]
      %v2254 = vld [vmem:[#allocation2 + $0x118] sm:$0xff]
      %v2255 = vld [vmem:[#allocation2 + $0x120] sm:$0xff]
      %v2256 = vld [vmem:[#allocation2 + $0x128] sm:$0xff]
      %v2257 = vld [vmem:[#allocation2 + $0x130] sm:$0xff]
      %v2258 = vld [vmem:[#allocation2 + $0x138] sm:$0xff]
      %v2259 = vld [vmem:[#allocation2 + $0x140] sm:$0xff]
      %v2260 = vld [vmem:[#allocation2 + $0x148] sm:$0xff]
      %v2261 = vld [vmem:[#allocation2 + $0x150] sm:$0xff]
      %v2262 = vld [vmem:[#allocation2 + $0x158] sm:$0xff]
      %v2263 = vld [vmem:[#allocation2 + $0x160] sm:$0xff]
      %v2264 = vld [vmem:[#allocation2 + $0x168] sm:$0xff]
      %v2265 = vld [vmem:[#allocation2 + $0x170] sm:$0xff]
      %v2266 = vld [vmem:[#allocation2 + $0x178] sm:$0xff]
      %v2267 = vld [vmem:[#allocation2 + $0x180] sm:$0xff]
      %v2268 = vld [vmem:[#allocation2 + $0x188] sm:$0xff]
      %v2269 = vld [vmem:[#allocation2 + $0x190] sm:$0xff]
      %v2270 = vld [vmem:[#allocation2 + $0x198] sm:$0xff]
      %v2271 = vld [vmem:[#allocation2 + $0x1a0] sm:$0xff]
      %v2272 = vld [vmem:[#allocation2 + $0x1a8] sm:$0xff]
      %v2273 = vld [vmem:[#allocation2 + $0x1b0] sm:$0xff]
      %v2274 = vld [vmem:[#allocation2 + $0x1b8] sm:$0xff]
      %v2275 = vld [vmem:[#allocation2 + $0x1c0] sm:$0xff]
      %v2276 = vld [vmem:[#allocation2 + $0x1c8] sm:$0xff]
      %v2277 = vld [vmem:[#allocation2 + $0x1d0] sm:$0xff]
      %v2278 = vld [vmem:[#allocation2 + $0x1d8] sm:$0xff]
      %v2279 = vld [vmem:[#allocation2 + $0x1e0] sm:$0xff]
      %v2280 = vld [vmem:[#allocation2 + $0x1e8] sm:$0xff]
      %v2281 = vld [vmem:[#allocation2 + $0x1f0] sm:$0xff]
      %v2282 = vld [vmem:[#allocation2 + $0x1f8] sm:$0xff]
      %v2283 = vpack.c.bf16 %v2252, %v2251
      %v2284 = vpack.c.bf16 %v2254, %v2253
      %v2285 = vpack.c.bf16 %v2256, %v2255
      %v2286 = vpack.c.bf16 %v2258, %v2257
      %v2287 = vpack.c.bf16 %v2260, %v2259
      %v2288 = vpack.c.bf16 %v2262, %v2261
      %v2289 = vpack.c.bf16 %v2264, %v2263
      %v2290 = vpack.c.bf16 %v2266, %v2265
      %v2291 = vpack.c.bf16 %v2268, %v2267
      %v2292 = vpack.c.bf16 %v2270, %v2269
      %v2293 = vpack.c.bf16 %v2272, %v2271
      %v2294 = vpack.c.bf16 %v2274, %v2273
      %v2295 = vpack.c.bf16 %v2276, %v2275
      %v2296 = vpack.c.bf16 %v2278, %v2277
      %v2297 = vpack.c.bf16 %v2280, %v2279
      %v2298 = vpack.c.bf16 %v2282, %v2281
      %s2299 = scalar_lea.vmem %s3, 16
      %v2300 = vld [vmem:[%s2299] sm:$0xf]
      %v2301 = vld [vmem:[%s2299 + $0x4] sm:$0xf]
      %v2302 = vld [vmem:[%s2299 + $0x8] sm:$0xf]
      %v2303 = vld [vmem:[%s2299 + $0xc] sm:$0xf]
      %v2308 = vunpack.c.l.b16 %v2300
      %v2309 = vunpack.c.l.b16 %v2301
      %v2310 = vunpack.c.l.b16 %v2302
      %v2311 = vunpack.c.l.b16 %v2303
      %v2312 = vpack.c.b16 %v2309, %v2308
      %v2313 = vpack.c.b16 %v2311, %v2310
      %v2317 = vsel %vm1470, %v2283, 0
      %v2320 = vsel %vm1470, %v2284, 0
      %v2323 = vsel %vm1470, %v2285, 0
      %v2326 = vsel %vm1470, %v2286, 0
      %v2329 = vsel %vm1470, %v2287, 0
      %v2332 = vsel %vm1470, %v2288, 0
      %v2335 = vsel %vm1470, %v2289, 0
      %v2338 = vsel %vm1470, %v2290, 0
      %v2341 = vsel %vm1470, %v2291, 0
      %v2344 = vsel %vm1470, %v2292, 0
      %v2347 = vsel %vm1470, %v2293, 0
      %v2350 = vsel %vm1470, %v2294, 0
      %v2353 = vsel %vm1470, %v2295, 0
      %v2356 = vsel %vm1470, %v2296, 0
      %v2359 = vsel %vm1470, %v2297, 0
      %v2362 = vsel %vm1470, %v2298, 0
      %2364 = vmatprep.subr.bf16.mxu0 0
      %2365 = vmatpush1.bf16.msra.mxu0 %v2312
      %2366 = vmatprep.subr.bf16.mxu0 0
      %2367 = vmatpush1.bf16.msra.mxu0 %v2313
      %2368 = vmatprep.subr.bf16.mxu0 0
      %2369 = vmatpush1.bf16.msra.mxu0 0
      %2370 = vmatprep.subr.bf16.mxu0 0
      %2371 = vmatpush1.bf16.msra.mxu0 0
      %2372 = vmatprep.subr.bf16.mxu0 0
      %2373 = vmatpush1.bf16.msra.mxu0 0
      %2374 = vmatprep.subr.bf16.mxu0 0
      %2375 = vmatpush1.bf16.msra.mxu0 0
      %2376 = vmatprep.subr.bf16.mxu0 0
      %2377 = vmatpush1.bf16.msra.mxu0 0
      %2378 = vmatprep.subr.bf16.mxu0 0
      %2379 = vmatpush1.bf16.msra.mxu0 0
      %2380 = vmatprep.subr.bf16.mxu0 0
      %2381 = vmatpush1.bf16.msra.mxu0 0
      %2382 = vmatprep.subr.bf16.mxu0 0
      %2383 = vmatpush1.bf16.msra.mxu0 0
      %2384 = vmatprep.subr.bf16.mxu0 0
      %2385 = vmatpush1.bf16.msra.mxu0 0
      %2386 = vmatprep.subr.bf16.mxu0 0
      %2387 = vmatpush1.bf16.msra.mxu0 0
      %2388 = vmatprep.subr.bf16.mxu0 0
      %2389 = vmatpush1.bf16.msra.mxu0 0
      %2390 = vmatprep.subr.bf16.mxu0 0
      %2391 = vmatpush1.bf16.msra.mxu0 0
      %2392 = vmatprep.subr.bf16.mxu0 0
      %2393 = vmatpush1.bf16.msra.mxu0 0
      %2394 = vmatprep.subr.bf16.mxu0 0
      %2395 = vmatpush1.bf16.msra.mxu0 0
      %2396 = vmatprep.mubr.bf16.mxu0 0
      %2397 = vmatmul.mubr.bf16.gmra.mrb[0].mxu0 %v2317
      %v2398 = vpop.f32.mrb[0].mxu0
      %v2399 = vadd.f32 0.0, %v2398
      %v2400 = vpop.f32.mrb[0].mxu0
      %v2401 = vpop.f32.mrb[0].mxu0
      %v2402 = vadd.f32 0.0, %v2401
      %v2403 = vpop.f32.mrb[0].mxu0
      %2404 = vmatprep.mubr.bf16.mxu0 0
      %2405 = vmatmul.mubr.bf16.gmra.mrb[0].mxu0 %v2320
      %v2406 = vpop.f32.mrb[0].mxu0
      %v2407 = vadd.f32 0.0, %v2406
      %v2408 = vpop.f32.mrb[0].mxu0
      %v2409 = vpop.f32.mrb[0].mxu0
      %v2410 = vadd.f32 0.0, %v2409
      %v2411 = vpop.f32.mrb[0].mxu0
      %2412 = vmatprep.mubr.bf16.mxu0 0
      %2413 = vmatmul.mubr.bf16.gmra.mrb[0].mxu0 %v2323
      %v2414 = vpop.f32.mrb[0].mxu0
      %v2415 = vadd.f32 0.0, %v2414
      %v2416 = vpop.f32.mrb[0].mxu0
      %v2417 = vpop.f32.mrb[0].mxu0
      %v2418 = vadd.f32 0.0, %v2417
      %v2419 = vpop.f32.mrb[0].mxu0
      %2420 = vmatprep.mubr.bf16.mxu0 0
      %2421 = vmatmul.mubr.bf16.gmra.mrb[0].mxu0 %v2326
      %v2422 = vpop.f32.mrb[0].mxu0
      %v2423 = vadd.f32 0.0, %v2422
      %v2424 = vpop.f32.mrb[0].mxu0
      %v2425 = vpop.f32.mrb[0].mxu0
      %v2426 = vadd.f32 0.0, %v2425
      %v2427 = vpop.f32.mrb[0].mxu0
      %2428 = vmatprep.mubr.bf16.mxu0 0
      %2429 = vmatmul.mubr.bf16.gmra.mrb[0].mxu0 %v2329
      %v2430 = vpop.f32.mrb[0].mxu0
      %v2431 = vadd.f32 0.0, %v2430
      %v2432 = vpop.f32.mrb[0].mxu0
      %v2433 = vpop.f32.mrb[0].mxu0
      %v2434 = vadd.f32 0.0, %v2433
      %v2435 = vpop.f32.mrb[0].mxu0
      %2436 = vmatprep.mubr.bf16.mxu0 0
      %2437 = vmatmul.mubr.bf16.gmra.mrb[0].mxu0 %v2332
      %v2438 = vpop.f32.mrb[0].mxu0
      %v2439 = vadd.f32 0.0, %v2438
      %v2440 = vpop.f32.mrb[0].mxu0
      %v2441 = vpop.f32.mrb[0].mxu0
      %v2442 = vadd.f32 0.0, %v2441
      %v2443 = vpop.f32.mrb[0].mxu0
      %2444 = vmatprep.mubr.bf16.mxu0 0
      %2445 = vmatmul.mubr.bf16.gmra.mrb[0].mxu0 %v2335
      %v2446 = vpop.f32.mrb[0].mxu0
      %v2447 = vadd.f32 0.0, %v2446
      %v2448 = vpop.f32.mrb[0].mxu0
      %v2449 = vpop.f32.mrb[0].mxu0
      %v2450 = vadd.f32 0.0, %v2449
      %v2451 = vpop.f32.mrb[0].mxu0
      %2452 = vmatprep.mubr.bf16.mxu0 0
      %2453 = vmatmul.mubr.bf16.gmra.mrb[0].mxu0 %v2338
      %v2454 = vpop.f32.mrb[0].mxu0
      %v2455 = vadd.f32 0.0, %v2454
      %v2456 = vpop.f32.mrb[0].mxu0
      %v2457 = vpop.f32.mrb[0].mxu0
      %v2458 = vadd.f32 0.0, %v2457
      %v2459 = vpop.f32.mrb[0].mxu0
      %2460 = vmatprep.mubr.bf16.mxu0 0
      %2461 = vmatmul.mubr.bf16.gmra.mrb[0].mxu0 %v2341
      %v2462 = vpop.f32.mrb[0].mxu0
      %v2463 = vadd.f32 0.0, %v2462
      %v2464 = vpop.f32.mrb[0].mxu0
      %v2465 = vpop.f32.mrb[0].mxu0
      %v2466 = vadd.f32 0.0, %v2465
      %v2467 = vpop.f32.mrb[0].mxu0
      %2468 = vmatprep.mubr.bf16.mxu0 0
      %2469 = vmatmul.mubr.bf16.gmra.mrb[0].mxu0 %v2344
      %v2470 = vpop.f32.mrb[0].mxu0
      %v2471 = vadd.f32 0.0, %v2470
      %v2472 = vpop.f32.mrb[0].mxu0
      %v2473 = vpop.f32.mrb[0].mxu0
      %v2474 = vadd.f32 0.0, %v2473
      %v2475 = vpop.f32.mrb[0].mxu0
      %2476 = vmatprep.mubr.bf16.mxu0 0
      %2477 = vmatmul.mubr.bf16.gmra.mrb[0].mxu0 %v2347
      %v2478 = vpop.f32.mrb[0].mxu0
      %v2479 = vadd.f32 0.0, %v2478
      %v2480 = vpop.f32.mrb[0].mxu0
      %v2481 = vpop.f32.mrb[0].mxu0
      %v2482 = vadd.f32 0.0, %v2481
      %v2483 = vpop.f32.mrb[0].mxu0
      %2484 = vmatprep.mubr.bf16.mxu0 0
      %2485 = vmatmul.mubr.bf16.gmra.mrb[0].mxu0 %v2350
      %v2486 = vpop.f32.mrb[0].mxu0
      %v2487 = vadd.f32 0.0, %v2486
      %v2488 = vpop.f32.mrb[0].mxu0
      %v2489 = vpop.f32.mrb[0].mxu0
      %v2490 = vadd.f32 0.0, %v2489
      %v2491 = vpop.f32.mrb[0].mxu0
      %2492 = vmatprep.mubr.bf16.mxu0 0
      %2493 = vmatmul.mubr.bf16.gmra.mrb[0].mxu0 %v2353
      %v2494 = vpop.f32.mrb[0].mxu0
      %v2495 = vadd.f32 0.0, %v2494
      %v2496 = vpop.f32.mrb[0].mxu0
      %v2497 = vpop.f32.mrb[0].mxu0
      %v2498 = vadd.f32 0.0, %v2497
      %v2499 = vpop.f32.mrb[0].mxu0
      %2500 = vmatprep.mubr.bf16.mxu0 0
      %2501 = vmatmul.mubr.bf16.gmra.mrb[0].mxu0 %v2356
      %v2502 = vpop.f32.mrb[0].mxu0
      %v2503 = vadd.f32 0.0, %v2502
      %v2504 = vpop.f32.mrb[0].mxu0
      %v2505 = vpop.f32.mrb[0].mxu0
      %v2506 = vadd.f32 0.0, %v2505
      %v2507 = vpop.f32.mrb[0].mxu0
      %2508 = vmatprep.mubr.bf16.mxu0 0
      %2509 = vmatmul.mubr.bf16.gmra.mrb[0].mxu0 %v2359
      %v2510 = vpop.f32.mrb[0].mxu0
      %v2511 = vadd.f32 0.0, %v2510
      %v2512 = vpop.f32.mrb[0].mxu0
      %v2513 = vpop.f32.mrb[0].mxu0
      %v2514 = vadd.f32 0.0, %v2513
      %v2515 = vpop.f32.mrb[0].mxu0
      %2516 = vmatprep.mubr.bf16.mxu0 0
      %2517 = vmatmul.mubr.bf16.gmra.mrb[0].mxu0 %v2362
      %v2518 = vpop.f32.mrb[0].mxu0
      %v2519 = vadd.f32 0.0, %v2518
      %v2520 = vpop.f32.mrb[0].mxu0
      %v2521 = vpop.f32.mrb[0].mxu0
      %v2522 = vadd.f32 0.0, %v2521
      %v2523 = vpop.f32.mrb[0].mxu0
      %2524 = vdwg.mxu0
      %v2525 = vadd.f32 %v2219, %v2399
      %v2526 = vadd.f32 %v2220, %v2402
      %v2527 = vadd.f32 %v2221, %v2407
      %v2528 = vadd.f32 %v2222, %v2410
      %v2529 = vadd.f32 %v2223, %v2415
      %v2530 = vadd.f32 %v2224, %v2418
      %v2531 = vadd.f32 %v2225, %v2423
      %v2532 = vadd.f32 %v2226, %v2426
      %v2533 = vadd.f32 %v2227, %v2431
      %v2534 = vadd.f32 %v2228, %v2434
      %v2535 = vadd.f32 %v2229, %v2439
      %v2536 = vadd.f32 %v2230, %v2442
      %v2537 = vadd.f32 %v2231, %v2447
      %v2538 = vadd.f32 %v2232, %v2450
      %v2539 = vadd.f32 %v2233, %v2455
      %v2540 = vadd.f32 %v2234, %v2458
      %v2541 = vadd.f32 %v2235, %v2463
      %v2542 = vadd.f32 %v2236, %v2466
      %v2543 = vadd.f32 %v2237, %v2471
      %v2544 = vadd.f32 %v2238, %v2474
      %v2545 = vadd.f32 %v2239, %v2479
      %v2546 = vadd.f32 %v2240, %v2482
      %v2547 = vadd.f32 %v2241, %v2487
      %v2548 = vadd.f32 %v2242, %v2490
      %v2549 = vadd.f32 %v2243, %v2495
      %v2550 = vadd.f32 %v2244, %v2498
      %v2551 = vadd.f32 %v2245, %v2503
      %v2552 = vadd.f32 %v2246, %v2506
      %v2553 = vadd.f32 %v2247, %v2511
      %v2554 = vadd.f32 %v2248, %v2514
      %v2555 = vadd.f32 %v2249, %v2519
      %v2556 = vadd.f32 %v2250, %v2522
      %v2557 = vld [vmem:[#allocation2 + $0x200] sm:$0xff]
      %v2558 = vld [vmem:[#allocation2 + $0x208] sm:$0xff]
      %v2559 = vld [vmem:[#allocation2 + $0x210] sm:$0xff]
      %v2560 = vld [vmem:[#allocation2 + $0x218] sm:$0xff]
      %v2561 = vld [vmem:[#allocation2 + $0x220] sm:$0xff]
      %v2562 = vld [vmem:[#allocation2 + $0x228] sm:$0xff]
      %v2563 = vld [vmem:[#allocation2 + $0x230] sm:$0xff]
      %v2564 = vld [vmem:[#allocation2 + $0x238] sm:$0xff]
      %v2565 = vld [vmem:[#allocation2 + $0x240] sm:$0xff]
      %v2566 = vld [vmem:[#allocation2 + $0x248] sm:$0xff]
      %v2567 = vld [vmem:[#allocation2 + $0x250] sm:$0xff]
      %v2568 = vld [vmem:[#allocation2 + $0x258] sm:$0xff]
      %v2569 = vld [vmem:[#allocation2 + $0x260] sm:$0xff]
      %v2570 = vld [vmem:[#allocation2 + $0x268] sm:$0xff]
      %v2571 = vld [vmem:[#allocation2 + $0x270] sm:$0xff]
      %v2572 = vld [vmem:[#allocation2 + $0x278] sm:$0xff]
      %v2573 = vld [vmem:[#allocation2 + $0x280] sm:$0xff]
      %v2574 = vld [vmem:[#allocation2 + $0x288] sm:$0xff]
      %v2575 = vld [vmem:[#allocation2 + $0x290] sm:$0xff]
      %v2576 = vld [vmem:[#allocation2 + $0x298] sm:$0xff]
      %v2577 = vld [vmem:[#allocation2 + $0x2a0] sm:$0xff]
      %v2578 = vld [vmem:[#allocation2 + $0x2a8] sm:$0xff]
      %v2579 = vld [vmem:[#allocation2 + $0x2b0] sm:$0xff]
      %v2580 = vld [vmem:[#allocation2 + $0x2b8] sm:$0xff]
      %v2581 = vld [vmem:[#allocation2 + $0x2c0] sm:$0xff]
      %v2582 = vld [vmem:[#allocation2 + $0x2c8] sm:$0xff]
      %v2583 = vld [vmem:[#allocation2 + $0x2d0] sm:$0xff]
      %v2584 = vld [vmem:[#allocation2 + $0x2d8] sm:$0xff]
      %v2585 = vld [vmem:[#allocation2 + $0x2e0] sm:$0xff]
      %v2586 = vld [vmem:[#allocation2 + $0x2e8] sm:$0xff]
      %v2587 = vld [vmem:[#allocation2 + $0x2f0] sm:$0xff]
      %v2588 = vld [vmem:[#allocation2 + $0x2f8] sm:$0xff]
      %v2589 = vpack.c.bf16 %v2558, %v2557
      %v2590 = vpack.c.bf16 %v2560, %v2559
      %v2591 = vpack.c.bf16 %v2562, %v2561
      %v2592 = vpack.c.bf16 %v2564, %v2563
      %v2593 = vpack.c.bf16 %v2566, %v2565
      %v2594 = vpack.c.bf16 %v2568, %v2567
      %v2595 = vpack.c.bf16 %v2570, %v2569
      %v2596 = vpack.c.bf16 %v2572, %v2571
      %v2597 = vpack.c.bf16 %v2574, %v2573
      %v2598 = vpack.c.bf16 %v2576, %v2575
      %v2599 = vpack.c.bf16 %v2578, %v2577
      %v2600 = vpack.c.bf16 %v2580, %v2579
      %v2601 = vpack.c.bf16 %v2582, %v2581
      %v2602 = vpack.c.bf16 %v2584, %v2583
      %v2603 = vpack.c.bf16 %v2586, %v2585
      %v2604 = vpack.c.bf16 %v2588, %v2587
      %s2605 = scalar_lea.vmem %s3, 32
      %v2606 = vld [vmem:[%s2605] sm:$0xf]
      %v2607 = vld [vmem:[%s2605 + $0x4] sm:$0xf]
      %v2608 = vld [vmem:[%s2605 + $0x8] sm:$0xf]
      %v2609 = vld [vmem:[%s2605 + $0xc] sm:$0xf]
      %v2614 = vunpack.c.l.b16 %v2606
      %v2615 = vunpack.c.l.b16 %v2607
      %v2616 = vunpack.c.l.b16 %v2608
      %v2617 = vunpack.c.l.b16 %v2609
      %v2618 = vpack.c.b16 %v2615, %v2614
      %v2619 = vpack.c.b16 %v2617, %v2616
      %v2623 = vsel %vm1470, %v2589, 0
      %v2626 = vsel %vm1470, %v2590, 0
      %v2629 = vsel %vm1470, %v2591, 0
      %v2632 = vsel %vm1470, %v2592, 0
      %v2635 = vsel %vm1470, %v2593, 0
      %v2638 = vsel %vm1470, %v2594, 0
      %v2641 = vsel %vm1470, %v2595, 0
      %v2644 = vsel %vm1470, %v2596, 0
      %v2647 = vsel %vm1470, %v2597, 0
      %v2650 = vsel %vm1470, %v2598, 0
      %v2653 = vsel %vm1470, %v2599, 0
      %v2656 = vsel %vm1470, %v2600, 0
      %v2659 = vsel %vm1470, %v2601, 0
      %v2662 = vsel %vm1470, %v2602, 0
      %v2665 = vsel %vm1470, %v2603, 0
      %v2668 = vsel %vm1470, %v2604, 0
      %2670 = vmatprep.subr.bf16.mxu0 0
      %2671 = vmatpush1.bf16.msra.mxu0 %v2618
      %2672 = vmatprep.subr.bf16.mxu0 0
      %2673 = vmatpush1.bf16.msra.mxu0 %v2619
      %2674 = vmatprep.subr.bf16.mxu0 0
      %2675 = vmatpush1.bf16.msra.mxu0 0
      %2676 = vmatprep.subr.bf16.mxu0 0
      %2677 = vmatpush1.bf16.msra.mxu0 0
      %2678 = vmatprep.subr.bf16.mxu0 0
      %2679 = vmatpush1.bf16.msra.mxu0 0
      %2680 = vmatprep.subr.bf16.mxu0 0
      %2681 = vmatpush1.bf16.msra.mxu0 0
      %2682 = vmatprep.subr.bf16.mxu0 0
      %2683 = vmatpush1.bf16.msra.mxu0 0
      %2684 = vmatprep.subr.bf16.mxu0 0
      %2685 = vmatpush1.bf16.msra.mxu0 0
      %2686 = vmatprep.subr.bf16.mxu0 0
      %2687 = vmatpush1.bf16.msra.mxu0 0
      %2688 = vmatprep.subr.bf16.mxu0 0
      %2689 = vmatpush1.bf16.msra.mxu0 0
      %2690 = vmatprep.subr.bf16.mxu0 0
      %2691 = vmatpush1.bf16.msra.mxu0 0
      %2692 = vmatprep.subr.bf16.mxu0 0
      %2693 = vmatpush1.bf16.msra.mxu0 0
      %2694 = vmatprep.subr.bf16.mxu0 0
      %2695 = vmatpush1.bf16.msra.mxu0 0
      %2696 = vmatprep.subr.bf16.mxu0 0
      %2697 = vmatpush1.bf16.msra.mxu0 0
      %2698 = vmatprep.subr.bf16.mxu0 0
      %2699 = vmatpush1.bf16.msra.mxu0 0
      %2700 = vmatprep.subr.bf16.mxu0 0
      %2701 = vmatpush1.bf16.msra.mxu0 0
      %2702 = vmatprep.mubr.bf16.mxu0 0
      %2703 = vmatmul.mubr.bf16.gmra.mrb[0].mxu0 %v2623
      %v2704 = vpop.f32.mrb[0].mxu0
      %v2705 = vadd.f32 0.0, %v2704
      %v2706 = vpop.f32.mrb[0].mxu0
      %v2707 = vpop.f32.mrb[0].mxu0
      %v2708 = vadd.f32 0.0, %v2707
      %v2709 = vpop.f32.mrb[0].mxu0
      %2710 = vmatprep.mubr.bf16.mxu0 0
      %2711 = vmatmul.mubr.bf16.gmra.mrb[0].mxu0 %v2626
      %v2712 = vpop.f32.mrb[0].mxu0
      %v2713 = vadd.f32 0.0, %v2712
      %v2714 = vpop.f32.mrb[0].mxu0
      %v2715 = vpop.f32.mrb[0].mxu0
      %v2716 = vadd.f32 0.0, %v2715
      %v2717 = vpop.f32.mrb[0].mxu0
      %2718 = vmatprep.mubr.bf16.mxu0 0
      %2719 = vmatmul.mubr.bf16.gmra.mrb[0].mxu0 %v2629
      %v2720 = vpop.f32.mrb[0].mxu0
      %v2721 = vadd.f32 0.0, %v2720
      %v2722 = vpop.f32.mrb[0].mxu0
      %v2723 = vpop.f32.mrb[0].mxu0
      %v2724 = vadd.f32 0.0, %v2723
      %v2725 = vpop.f32.mrb[0].mxu0
      %2726 = vmatprep.mubr.bf16.mxu0 0
      %2727 = vmatmul.mubr.bf16.gmra.mrb[0].mxu0 %v2632
      %v2728 = vpop.f32.mrb[0].mxu0
      %v2729 = vadd.f32 0.0, %v2728
      %v2730 = vpop.f32.mrb[0].mxu0
      %v2731 = vpop.f32.mrb[0].mxu0
      %v2732 = vadd.f32 0.0, %v2731
      %v2733 = vpop.f32.mrb[0].mxu0
      %2734 = vmatprep.mubr.bf16.mxu0 0
      %2735 = vmatmul.mubr.bf16.gmra.mrb[0].mxu0 %v2635
      %v2736 = vpop.f32.mrb[0].mxu0
      %v2737 = vadd.f32 0.0, %v2736
      %v2738 = vpop.f32.mrb[0].mxu0
      %v2739 = vpop.f32.mrb[0].mxu0
      %v2740 = vadd.f32 0.0, %v2739
      %v2741 = vpop.f32.mrb[0].mxu0
      %2742 = vmatprep.mubr.bf16.mxu0 0
      %2743 = vmatmul.mubr.bf16.gmra.mrb[0].mxu0 %v2638
      %v2744 = vpop.f32.mrb[0].mxu0
      %v2745 = vadd.f32 0.0, %v2744
      %v2746 = vpop.f32.mrb[0].mxu0
      %v2747 = vpop.f32.mrb[0].mxu0
      %v2748 = vadd.f32 0.0, %v2747
      %v2749 = vpop.f32.mrb[0].mxu0
      %2750 = vmatprep.mubr.bf16.mxu0 0
      %2751 = vmatmul.mubr.bf16.gmra.mrb[0].mxu0 %v2641
      %v2752 = vpop.f32.mrb[0].mxu0
      %v2753 = vadd.f32 0.0, %v2752
      %v2754 = vpop.f32.mrb[0].mxu0
      %v2755 = vpop.f32.mrb[0].mxu0
      %v2756 = vadd.f32 0.0, %v2755
      %v2757 = vpop.f32.mrb[0].mxu0
      %2758 = vmatprep.mubr.bf16.mxu0 0
      %2759 = vmatmul.mubr.bf16.gmra.mrb[0].mxu0 %v2644
      %v2760 = vpop.f32.mrb[0].mxu0
      %v2761 = vadd.f32 0.0, %v2760
      %v2762 = vpop.f32.mrb[0].mxu0
      %v2763 = vpop.f32.mrb[0].mxu0
      %v2764 = vadd.f32 0.0, %v2763
      %v2765 = vpop.f32.mrb[0].mxu0
      %2766 = vmatprep.mubr.bf16.mxu0 0
      %2767 = vmatmul.mubr.bf16.gmra.mrb[0].mxu0 %v2647
      %v2768 = vpop.f32.mrb[0].mxu0
      %v2769 = vadd.f32 0.0, %v2768
      %v2770 = vpop.f32.mrb[0].mxu0
      %v2771 = vpop.f32.mrb[0].mxu0
      %v2772 = vadd.f32 0.0, %v2771
      %v2773 = vpop.f32.mrb[0].mxu0
      %2774 = vmatprep.mubr.bf16.mxu0 0
      %2775 = vmatmul.mubr.bf16.gmra.mrb[0].mxu0 %v2650
      %v2776 = vpop.f32.mrb[0].mxu0
      %v2777 = vadd.f32 0.0, %v2776
      %v2778 = vpop.f32.mrb[0].mxu0
      %v2779 = vpop.f32.mrb[0].mxu0
      %v2780 = vadd.f32 0.0, %v2779
      %v2781 = vpop.f32.mrb[0].mxu0
      %2782 = vmatprep.mubr.bf16.mxu0 0
      %2783 = vmatmul.mubr.bf16.gmra.mrb[0].mxu0 %v2653
      %v2784 = vpop.f32.mrb[0].mxu0
      %v2785 = vadd.f32 0.0, %v2784
      %v2786 = vpop.f32.mrb[0].mxu0
      %v2787 = vpop.f32.mrb[0].mxu0
      %v2788 = vadd.f32 0.0, %v2787
      %v2789 = vpop.f32.mrb[0].mxu0
      %2790 = vmatprep.mubr.bf16.mxu0 0
      %2791 = vmatmul.mubr.bf16.gmra.mrb[0].mxu0 %v2656
      %v2792 = vpop.f32.mrb[0].mxu0
      %v2793 = vadd.f32 0.0, %v2792
      %v2794 = vpop.f32.mrb[0].mxu0
      %v2795 = vpop.f32.mrb[0].mxu0
      %v2796 = vadd.f32 0.0, %v2795
      %v2797 = vpop.f32.mrb[0].mxu0
      %2798 = vmatprep.mubr.bf16.mxu0 0
      %2799 = vmatmul.mubr.bf16.gmra.mrb[0].mxu0 %v2659
      %v2800 = vpop.f32.mrb[0].mxu0
      %v2801 = vadd.f32 0.0, %v2800
      %v2802 = vpop.f32.mrb[0].mxu0
      %v2803 = vpop.f32.mrb[0].mxu0
      %v2804 = vadd.f32 0.0, %v2803
      %v2805 = vpop.f32.mrb[0].mxu0
      %2806 = vmatprep.mubr.bf16.mxu0 0
      %2807 = vmatmul.mubr.bf16.gmra.mrb[0].mxu0 %v2662
      %v2808 = vpop.f32.mrb[0].mxu0
      %v2809 = vadd.f32 0.0, %v2808
      %v2810 = vpop.f32.mrb[0].mxu0
      %v2811 = vpop.f32.mrb[0].mxu0
      %v2812 = vadd.f32 0.0, %v2811
      %v2813 = vpop.f32.mrb[0].mxu0
      %2814 = vmatprep.mubr.bf16.mxu0 0
      %2815 = vmatmul.mubr.bf16.gmra.mrb[0].mxu0 %v2665
      %v2816 = vpop.f32.mrb[0].mxu0
      %v2817 = vadd.f32 0.0, %v2816
      %v2818 = vpop.f32.mrb[0].mxu0
      %v2819 = vpop.f32.mrb[0].mxu0
      %v2820 = vadd.f32 0.0, %v2819
      %v2821 = vpop.f32.mrb[0].mxu0
      %2822 = vmatprep.mubr.bf16.mxu0 0
      %2823 = vmatmul.mubr.bf16.gmra.mrb[0].mxu0 %v2668
      %v2824 = vpop.f32.mrb[0].mxu0
      %v2825 = vadd.f32 0.0, %v2824
      %v2826 = vpop.f32.mrb[0].mxu0
      %v2827 = vpop.f32.mrb[0].mxu0
      %v2828 = vadd.f32 0.0, %v2827
      %v2829 = vpop.f32.mrb[0].mxu0
      %2830 = vdwg.mxu0
      %v2831 = vadd.f32 %v2525, %v2705
      %v2832 = vadd.f32 %v2526, %v2708
      %v2833 = vadd.f32 %v2527, %v2713
      %v2834 = vadd.f32 %v2528, %v2716
      %v2835 = vadd.f32 %v2529, %v2721
      %v2836 = vadd.f32 %v2530, %v2724
      %v2837 = vadd.f32 %v2531, %v2729
      %v2838 = vadd.f32 %v2532, %v2732
      %v2839 = vadd.f32 %v2533, %v2737
      %v2840 = vadd.f32 %v2534, %v2740
      %v2841 = vadd.f32 %v2535, %v2745
      %v2842 = vadd.f32 %v2536, %v2748
      %v2843 = vadd.f32 %v2537, %v2753
      %v2844 = vadd.f32 %v2538, %v2756
      %v2845 = vadd.f32 %v2539, %v2761
      %v2846 = vadd.f32 %v2540, %v2764
      %v2847 = vadd.f32 %v2541, %v2769
      %v2848 = vadd.f32 %v2542, %v2772
      %v2849 = vadd.f32 %v2543, %v2777
      %v2850 = vadd.f32 %v2544, %v2780
      %v2851 = vadd.f32 %v2545, %v2785
      %v2852 = vadd.f32 %v2546, %v2788
      %v2853 = vadd.f32 %v2547, %v2793
      %v2854 = vadd.f32 %v2548, %v2796
      %v2855 = vadd.f32 %v2549, %v2801
      %v2856 = vadd.f32 %v2550, %v2804
      %v2857 = vadd.f32 %v2551, %v2809
      %v2858 = vadd.f32 %v2552, %v2812
      %v2859 = vadd.f32 %v2553, %v2817
      %v2860 = vadd.f32 %v2554, %v2820
      %v2861 = vadd.f32 %v2555, %v2825
      %v2862 = vadd.f32 %v2556, %v2828
      %v2863 = vadd.f32 %v2831, %v1602
      %v2864 = vadd.f32 %v2832, %v1603
      %v2865 = vadd.f32 %v2833, %v1604
      %v2866 = vadd.f32 %v2834, %v1605
      %v2867 = vadd.f32 %v2835, %v1606
      %v2868 = vadd.f32 %v2836, %v1607
      %v2869 = vadd.f32 %v2837, %v1608
      %v2870 = vadd.f32 %v2838, %v1609
      %v2871 = vadd.f32 %v2839, %v1610
      %v2872 = vadd.f32 %v2840, %v1611
      %v2873 = vadd.f32 %v2841, %v1612
      %v2874 = vadd.f32 %v2842, %v1613
      %v2875 = vadd.f32 %v2843, %v1614
      %v2876 = vadd.f32 %v2844, %v1615
      %v2877 = vadd.f32 %v2845, %v1616
      %v2878 = vadd.f32 %v2846, %v1617
      %v2879 = vadd.f32 %v2847, %v1618
      %v2880 = vadd.f32 %v2848, %v1619
      %v2881 = vadd.f32 %v2849, %v1620
      %v2882 = vadd.f32 %v2850, %v1621
      %v2883 = vadd.f32 %v2851, %v1622
      %v2884 = vadd.f32 %v2852, %v1623
      %v2885 = vadd.f32 %v2853, %v1624
      %v2886 = vadd.f32 %v2854, %v1625
      %v2887 = vadd.f32 %v2855, %v1626
      %v2888 = vadd.f32 %v2856, %v1627
      %v2889 = vadd.f32 %v2857, %v1628
      %v2890 = vadd.f32 %v2858, %v1629
      %v2891 = vadd.f32 %v2859, %v1630
      %v2892 = vadd.f32 %v2860, %v1631
      %v2893 = vadd.f32 %v2861, %v1632
      %v2894 = vadd.f32 %v2862, %v1633
      %v2895 = vpack.c.bf16 %v2864, %v2863
      %v2896 = vpack.c.bf16 %v2866, %v2865
      %v2897 = vpack.c.bf16 %v2868, %v2867
      %v2898 = vpack.c.bf16 %v2870, %v2869
      %v2899 = vpack.c.bf16 %v2872, %v2871
      %v2900 = vpack.c.bf16 %v2874, %v2873
      %v2901 = vpack.c.bf16 %v2876, %v2875
      %v2902 = vpack.c.bf16 %v2878, %v2877
      %v2903 = vpack.c.bf16 %v2880, %v2879
      %v2904 = vpack.c.bf16 %v2882, %v2881
      %v2905 = vpack.c.bf16 %v2884, %v2883
      %v2906 = vpack.c.bf16 %v2886, %v2885
      %v2907 = vpack.c.bf16 %v2888, %v2887
      %v2908 = vpack.c.bf16 %v2890, %v2889
      %v2909 = vpack.c.bf16 %v2892, %v2891
      %v2910 = vpack.c.bf16 %v2894, %v2893
      %v2911 = vld [vmem:[%s6] sm:$0xf]
      %v2912 = vld [vmem:[%s6 + $0x4] sm:$0xf]
      %v2913 = vld [vmem:[%s6 + $0x8] sm:$0xf]
      %v2914 = vld [vmem:[%s6 + $0xc] sm:$0xf]
      %v2915 = vld [vmem:[%s7] sm:$0x1]
      %v2917 = vlaneseq
      %v2918 = vshrl.u32 %v2917, 7
      %v2919 = vsub.s32 0, %v2918
      %v2920 = vrot.slane %v2915, %v2919
      %v2926 = vunpack.c.l.b16 %v2911
      %v2927 = vunpack.c.l.b16 %v2912
      %v2928 = vunpack.c.l.b16 %v2913
      %v2929 = vunpack.c.l.b16 %v2914
      %v2930 = vpack.c.b16 %v2927, %v2926
      %v2931 = vpack.c.b16 %v2929, %v2928
      %v2935 = vsel %vm1470, %v2895, 0
      %v2938 = vsel %vm1470, %v2896, 0
      %v2941 = vsel %vm1470, %v2897, 0
      %v2944 = vsel %vm1470, %v2898, 0
      %v2947 = vsel %vm1470, %v2899, 0
      %v2950 = vsel %vm1470, %v2900, 0
      %v2953 = vsel %vm1470, %v2901, 0
      %v2956 = vsel %vm1470, %v2902, 0
      %v2959 = vsel %vm1470, %v2903, 0
      %v2962 = vsel %vm1470, %v2904, 0
      %v2965 = vsel %vm1470, %v2905, 0
      %v2968 = vsel %vm1470, %v2906, 0
      %v2971 = vsel %vm1470, %v2907, 0
      %v2974 = vsel %vm1470, %v2908, 0
      %v2977 = vsel %vm1470, %v2909, 0
      %v2980 = vsel %vm1470, %v2910, 0
      %2982 = vmatprep.subr.bf16.mxu0 0
      %2983 = vmatpush1.bf16.msra.mxu0 %v2930
      %2984 = vmatprep.subr.bf16.mxu0 0
      %2985 = vmatpush1.bf16.msra.mxu0 %v2931
      %2986 = vmatprep.subr.bf16.mxu0 0
      %2987 = vmatpush1.bf16.msra.mxu0 0
      %2988 = vmatprep.subr.bf16.mxu0 0
      %2989 = vmatpush1.bf16.msra.mxu0 0
      %2990 = vmatprep.subr.bf16.mxu0 0
      %2991 = vmatpush1.bf16.msra.mxu0 0
      %2992 = vmatprep.subr.bf16.mxu0 0
      %2993 = vmatpush1.bf16.msra.mxu0 0
      %2994 = vmatprep.subr.bf16.mxu0 0
      %2995 = vmatpush1.bf16.msra.mxu0 0
      %2996 = vmatprep.subr.bf16.mxu0 0
      %2997 = vmatpush1.bf16.msra.mxu0 0
      %2998 = vmatprep.subr.bf16.mxu0 0
      %2999 = vmatpush1.bf16.msra.mxu0 0
      %3000 = vmatprep.subr.bf16.mxu0 0
      %3001 = vmatpush1.bf16.msra.mxu0 0
      %3002 = vmatprep.subr.bf16.mxu0 0
      %3003 = vmatpush1.bf16.msra.mxu0 0
      %3004 = vmatprep.subr.bf16.mxu0 0
      %3005 = vmatpush1.bf16.msra.mxu0 0
      %3006 = vmatprep.subr.bf16.mxu0 0
      %3007 = vmatpush1.bf16.msra.mxu0 0
      %3008 = vmatprep.subr.bf16.mxu0 0
      %3009 = vmatpush1.bf16.msra.mxu0 0
      %3010 = vmatprep.subr.bf16.mxu0 0
      %3011 = vmatpush1.bf16.msra.mxu0 0
      %3012 = vmatprep.subr.bf16.mxu0 0
      %3013 = vmatpush1.bf16.msra.mxu0 0
      %3014 = vmatprep.mubr.bf16.mxu0 0
      %3015 = vmatmul.mubr.bf16.gmra.mrb[0].mxu0 %v2935
      %v3016 = vpop.f32.mrb[0].mxu0
      %v3017 = vadd.f32 %v2920, %v3016
      %v3018 = vpop.f32.mrb[0].mxu0
      %v3019 = vpop.f32.mrb[0].mxu0
      %v3020 = vadd.f32 %v2920, %v3019
      %v3021 = vpop.f32.mrb[0].mxu0
      %3022 = vmatprep.mubr.bf16.mxu0 0
      %3023 = vmatmul.mubr.bf16.gmra.mrb[0].mxu0 %v2938
      %v3024 = vpop.f32.mrb[0].mxu0
      %v3025 = vadd.f32 %v2920, %v3024
      %v3026 = vpop.f32.mrb[0].mxu0
      %v3027 = vpop.f32.mrb[0].mxu0
      %v3028 = vadd.f32 %v2920, %v3027
      %v3029 = vpop.f32.mrb[0].mxu0
      %3030 = vmatprep.mubr.bf16.mxu0 0
      %3031 = vmatmul.mubr.bf16.gmra.mrb[0].mxu0 %v2941
      %v3032 = vpop.f32.mrb[0].mxu0
      %v3033 = vadd.f32 %v2920, %v3032
      %v3034 = vpop.f32.mrb[0].mxu0
      %v3035 = vpop.f32.mrb[0].mxu0
      %v3036 = vadd.f32 %v2920, %v3035
      %v3037 = vpop.f32.mrb[0].mxu0
      %3038 = vmatprep.mubr.bf16.mxu0 0
      %3039 = vmatmul.mubr.bf16.gmra.mrb[0].mxu0 %v2944
      %v3040 = vpop.f32.mrb[0].mxu0
      %v3041 = vadd.f32 %v2920, %v3040
      %v3042 = vpop.f32.mrb[0].mxu0
      %v3043 = vpop.f32.mrb[0].mxu0
      %v3044 = vadd.f32 %v2920, %v3043
      %v3045 = vpop.f32.mrb[0].mxu0
      %3046 = vmatprep.mubr.bf16.mxu0 0
      %3047 = vmatmul.mubr.bf16.gmra.mrb[0].mxu0 %v2947
      %v3048 = vpop.f32.mrb[0].mxu0
      %v3049 = vadd.f32 %v2920, %v3048
      %v3050 = vpop.f32.mrb[0].mxu0
      %v3051 = vpop.f32.mrb[0].mxu0
      %v3052 = vadd.f32 %v2920, %v3051
      %v3053 = vpop.f32.mrb[0].mxu0
      %3054 = vmatprep.mubr.bf16.mxu0 0
      %3055 = vmatmul.mubr.bf16.gmra.mrb[0].mxu0 %v2950
      %v3056 = vpop.f32.mrb[0].mxu0
      %v3057 = vadd.f32 %v2920, %v3056
      %v3058 = vpop.f32.mrb[0].mxu0
      %v3059 = vpop.f32.mrb[0].mxu0
      %v3060 = vadd.f32 %v2920, %v3059
      %v3061 = vpop.f32.mrb[0].mxu0
      %3062 = vmatprep.mubr.bf16.mxu0 0
      %3063 = vmatmul.mubr.bf16.gmra.mrb[0].mxu0 %v2953
      %v3064 = vpop.f32.mrb[0].mxu0
      %v3065 = vadd.f32 %v2920, %v3064
      %v3066 = vpop.f32.mrb[0].mxu0
      %v3067 = vpop.f32.mrb[0].mxu0
      %v3068 = vadd.f32 %v2920, %v3067
      %v3069 = vpop.f32.mrb[0].mxu0
      %3070 = vmatprep.mubr.bf16.mxu0 0
      %3071 = vmatmul.mubr.bf16.gmra.mrb[0].mxu0 %v2956
      %v3072 = vpop.f32.mrb[0].mxu0
      %v3073 = vadd.f32 %v2920, %v3072
      %v3074 = vpop.f32.mrb[0].mxu0
      %v3075 = vpop.f32.mrb[0].mxu0
      %v3076 = vadd.f32 %v2920, %v3075
      %v3077 = vpop.f32.mrb[0].mxu0
      %3078 = vmatprep.mubr.bf16.mxu0 0
      %3079 = vmatmul.mubr.bf16.gmra.mrb[0].mxu0 %v2959
      %v3080 = vpop.f32.mrb[0].mxu0
      %v3081 = vadd.f32 %v2920, %v3080
      %v3082 = vpop.f32.mrb[0].mxu0
      %v3083 = vpop.f32.mrb[0].mxu0
      %v3084 = vadd.f32 %v2920, %v3083
      %v3085 = vpop.f32.mrb[0].mxu0
      %3086 = vmatprep.mubr.bf16.mxu0 0
      %3087 = vmatmul.mubr.bf16.gmra.mrb[0].mxu0 %v2962
      %v3088 = vpop.f32.mrb[0].mxu0
      %v3089 = vadd.f32 %v2920, %v3088
      %v3090 = vpop.f32.mrb[0].mxu0
      %v3091 = vpop.f32.mrb[0].mxu0
      %v3092 = vadd.f32 %v2920, %v3091
      %v3093 = vpop.f32.mrb[0].mxu0
      %3094 = vmatprep.mubr.bf16.mxu0 0
      %3095 = vmatmul.mubr.bf16.gmra.mrb[0].mxu0 %v2965
      %v3096 = vpop.f32.mrb[0].mxu0
      %v3097 = vadd.f32 %v2920, %v3096
      %v3098 = vpop.f32.mrb[0].mxu0
      %v3099 = vpop.f32.mrb[0].mxu0
      %v3100 = vadd.f32 %v2920, %v3099
      %v3101 = vpop.f32.mrb[0].mxu0
      %3102 = vmatprep.mubr.bf16.mxu0 0
      %3103 = vmatmul.mubr.bf16.gmra.mrb[0].mxu0 %v2968
      %v3104 = vpop.f32.mrb[0].mxu0
      %v3105 = vadd.f32 %v2920, %v3104
      %v3106 = vpop.f32.mrb[0].mxu0
      %v3107 = vpop.f32.mrb[0].mxu0
      %v3108 = vadd.f32 %v2920, %v3107
      %v3109 = vpop.f32.mrb[0].mxu0
      %3110 = vmatprep.mubr.bf16.mxu0 0
      %3111 = vmatmul.mubr.bf16.gmra.mrb[0].mxu0 %v2971
      %v3112 = vpop.f32.mrb[0].mxu0
      %v3113 = vadd.f32 %v2920, %v3112
      %v3114 = vpop.f32.mrb[0].mxu0
      %v3115 = vpop.f32.mrb[0].mxu0
      %v3116 = vadd.f32 %v2920, %v3115
      %v3117 = vpop.f32.mrb[0].mxu0
      %3118 = vmatprep.mubr.bf16.mxu0 0
      %3119 = vmatmul.mubr.bf16.gmra.mrb[0].mxu0 %v2974
      %v3120 = vpop.f32.mrb[0].mxu0
      %v3121 = vadd.f32 %v2920, %v3120
      %v3122 = vpop.f32.mrb[0].mxu0
      %v3123 = vpop.f32.mrb[0].mxu0
      %v3124 = vadd.f32 %v2920, %v3123
      %v3125 = vpop.f32.mrb[0].mxu0
      %3126 = vmatprep.mubr.bf16.mxu0 0
      %3127 = vmatmul.mubr.bf16.gmra.mrb[0].mxu0 %v2977
      %v3128 = vpop.f32.mrb[0].mxu0
      %v3129 = vadd.f32 %v2920, %v3128
      %v3130 = vpop.f32.mrb[0].mxu0
      %v3131 = vpop.f32.mrb[0].mxu0
      %v3132 = vadd.f32 %v2920, %v3131
      %v3133 = vpop.f32.mrb[0].mxu0
      %3134 = vmatprep.mubr.bf16.mxu0 0
      %3135 = vmatmul.mubr.bf16.gmra.mrb[0].mxu0 %v2980
      %v3136 = vpop.f32.mrb[0].mxu0
      %v3137 = vadd.f32 %v2920, %v3136
      %v3138 = vpop.f32.mrb[0].mxu0
      %v3139 = vpop.f32.mrb[0].mxu0
      %v3140 = vadd.f32 %v2920, %v3139
      %v3141 = vpop.f32.mrb[0].mxu0
      %3142 = vdwg.mxu0
      %v3143 = vmax.f32 %v3017, 0.0
      %v3144 = vmax.f32 %v3020, 0.0
      %v3145 = vmax.f32 %v3025, 0.0
      %v3146 = vmax.f32 %v3028, 0.0
      %v3147 = vmax.f32 %v3033, 0.0
      %v3148 = vmax.f32 %v3036, 0.0
      %v3149 = vmax.f32 %v3041, 0.0
      %v3150 = vmax.f32 %v3044, 0.0
      %v3151 = vmax.f32 %v3049, 0.0
      %v3152 = vmax.f32 %v3052, 0.0
      %v3153 = vmax.f32 %v3057, 0.0
      %v3154 = vmax.f32 %v3060, 0.0
      %v3155 = vmax.f32 %v3065, 0.0
      %v3156 = vmax.f32 %v3068, 0.0
      %v3157 = vmax.f32 %v3073, 0.0
      %v3158 = vmax.f32 %v3076, 0.0
      %v3159 = vmax.f32 %v3081, 0.0
      %v3160 = vmax.f32 %v3084, 0.0
      %v3161 = vmax.f32 %v3089, 0.0
      %v3162 = vmax.f32 %v3092, 0.0
      %v3163 = vmax.f32 %v3097, 0.0
      %v3164 = vmax.f32 %v3100, 0.0
      %v3165 = vmax.f32 %v3105, 0.0
      %v3166 = vmax.f32 %v3108, 0.0
      %v3167 = vmax.f32 %v3113, 0.0
      %v3168 = vmax.f32 %v3116, 0.0
      %v3169 = vmax.f32 %v3121, 0.0
      %v3170 = vmax.f32 %v3124, 0.0
      %v3171 = vmax.f32 %v3129, 0.0
      %v3172 = vmax.f32 %v3132, 0.0
      %v3173 = vmax.f32 %v3137, 0.0
      %v3174 = vmax.f32 %v3140, 0.0
      %v3175 = vpack.c.bf16 %v3144, %v3143
      %v3176 = vpack.c.bf16 %v3146, %v3145
      %v3177 = vpack.c.bf16 %v3148, %v3147
      %v3178 = vpack.c.bf16 %v3150, %v3149
      %v3179 = vpack.c.bf16 %v3152, %v3151
      %v3180 = vpack.c.bf16 %v3154, %v3153
      %v3181 = vpack.c.bf16 %v3156, %v3155
      %v3182 = vpack.c.bf16 %v3158, %v3157
      %v3183 = vpack.c.bf16 %v3160, %v3159
      %v3184 = vpack.c.bf16 %v3162, %v3161
      %v3185 = vpack.c.bf16 %v3164, %v3163
      %v3186 = vpack.c.bf16 %v3166, %v3165
      %v3187 = vpack.c.bf16 %v3168, %v3167
      %v3188 = vpack.c.bf16 %v3170, %v3169
      %v3189 = vpack.c.bf16 %v3172, %v3171
      %v3190 = vpack.c.bf16 %v3174, %v3173
      %v3191 = vld [vmem:[%s8] sm:$0xf]
      %v3192 = vld [vmem:[%s8 + $0x4] sm:$0xf]
      %v3193 = vld [vmem:[%s9] sm:$0x1]
      %v3195 = vlaneseq
      %v3196 = vshrl.u32 %v3195, 7
      %v3197 = vsub.s32 0, %v3196
      %v3198 = vrot.slane %v3193, %v3197
      %v3202 = vunpack.c.l.b16 %v3191
      %v3203 = vunpack.c.l.b16 %v3192
      %v3204 = vpack.c.b16 %v3203, %v3202
      %vm3206 = vcmask 130048
      %v3208 = vsel %vm3206, %v3175, 0
      %v3211 = vsel %vm3206, %v3176, 0
      %v3214 = vsel %vm3206, %v3177, 0
      %v3217 = vsel %vm3206, %v3178, 0
      %v3220 = vsel %vm3206, %v3179, 0
      %v3223 = vsel %vm3206, %v3180, 0
      %v3226 = vsel %vm3206, %v3181, 0
      %v3229 = vsel %vm3206, %v3182, 0
      %v3232 = vsel %vm3206, %v3183, 0
      %v3235 = vsel %vm3206, %v3184, 0
      %v3238 = vsel %vm3206, %v3185, 0
      %v3241 = vsel %vm3206, %v3186, 0
      %v3244 = vsel %vm3206, %v3187, 0
      %v3247 = vsel %vm3206, %v3188, 0
      %v3250 = vsel %vm3206, %v3189, 0
      %v3253 = vsel %vm3206, %v3190, 0
      %3255 = vmatprep.subr.bf16.mxu0 0
      %3256 = vmatpush1.bf16.msra.mxu0 %v3204
      %3257 = vmatprep.subr.bf16.mxu0 0
      %3258 = vmatpush1.bf16.msra.mxu0 0
      %3259 = vmatprep.subr.bf16.mxu0 0
      %3260 = vmatpush1.bf16.msra.mxu0 0
      %3261 = vmatprep.subr.bf16.mxu0 0
      %3262 = vmatpush1.bf16.msra.mxu0 0
      %3263 = vmatprep.subr.bf16.mxu0 0
      %3264 = vmatpush1.bf16.msra.mxu0 0
      %3265 = vmatprep.subr.bf16.mxu0 0
      %3266 = vmatpush1.bf16.msra.mxu0 0
      %3267 = vmatprep.subr.bf16.mxu0 0
      %3268 = vmatpush1.bf16.msra.mxu0 0
      %3269 = vmatprep.subr.bf16.mxu0 0
      %3270 = vmatpush1.bf16.msra.mxu0 0
      %3271 = vmatprep.subr.bf16.mxu0 0
      %3272 = vmatpush1.bf16.msra.mxu0 0
      %3273 = vmatprep.subr.bf16.mxu0 0
      %3274 = vmatpush1.bf16.msra.mxu0 0
      %3275 = vmatprep.subr.bf16.mxu0 0
      %3276 = vmatpush1.bf16.msra.mxu0 0
      %3277 = vmatprep.subr.bf16.mxu0 0
      %3278 = vmatpush1.bf16.msra.mxu0 0
      %3279 = vmatprep.subr.bf16.mxu0 0
      %3280 = vmatpush1.bf16.msra.mxu0 0
      %3281 = vmatprep.subr.bf16.mxu0 0
      %3282 = vmatpush1.bf16.msra.mxu0 0
      %3283 = vmatprep.subr.bf16.mxu0 0
      %3284 = vmatpush1.bf16.msra.mxu0 0
      %3285 = vmatprep.subr.bf16.mxu0 0
      %3286 = vmatpush1.bf16.msra.mxu0 0
      %3287 = vmatprep.mubr.bf16.mxu0 0
      %3288 = vmatmul.mubr.bf16.gmra.mrb[0].mxu0 %v3208
      %v3289 = vpop.f32.mrb[0].mxu0
      %v3290 = vadd.f32 %v3198, %v3289
      %v3291 = vpop.f32.mrb[0].mxu0
      %v3292 = vpop.f32.mrb[0].mxu0
      %v3293 = vadd.f32 %v3198, %v3292
      %v3294 = vpop.f32.mrb[0].mxu0
      %3295 = vmatprep.mubr.bf16.mxu0 0
      %3296 = vmatmul.mubr.bf16.gmra.mrb[0].mxu0 %v3211
      %v3297 = vpop.f32.mrb[0].mxu0
      %v3298 = vadd.f32 %v3198, %v3297
      %v3299 = vpop.f32.mrb[0].mxu0
      %v3300 = vpop.f32.mrb[0].mxu0
      %v3301 = vadd.f32 %v3198, %v3300
      %v3302 = vpop.f32.mrb[0].mxu0
      %3303 = vmatprep.mubr.bf16.mxu0 0
      %3304 = vmatmul.mubr.bf16.gmra.mrb[0].mxu0 %v3214
      %v3305 = vpop.f32.mrb[0].mxu0
      %v3306 = vadd.f32 %v3198, %v3305
      %v3307 = vpop.f32.mrb[0].mxu0
      %v3308 = vpop.f32.mrb[0].mxu0
      %v3309 = vadd.f32 %v3198, %v3308
      %v3310 = vpop.f32.mrb[0].mxu0
      %3311 = vmatprep.mubr.bf16.mxu0 0
      %3312 = vmatmul.mubr.bf16.gmra.mrb[0].mxu0 %v3217
      %v3313 = vpop.f32.mrb[0].mxu0
      %v3314 = vadd.f32 %v3198, %v3313
      %v3315 = vpop.f32.mrb[0].mxu0
      %v3316 = vpop.f32.mrb[0].mxu0
      %v3317 = vadd.f32 %v3198, %v3316
      %v3318 = vpop.f32.mrb[0].mxu0
      %3319 = vmatprep.mubr.bf16.mxu0 0
      %3320 = vmatmul.mubr.bf16.gmra.mrb[0].mxu0 %v3220
      %v3321 = vpop.f32.mrb[0].mxu0
      %v3322 = vadd.f32 %v3198, %v3321
      %v3323 = vpop.f32.mrb[0].mxu0
      %v3324 = vpop.f32.mrb[0].mxu0
      %v3325 = vadd.f32 %v3198, %v3324
      %v3326 = vpop.f32.mrb[0].mxu0
      %3327 = vmatprep.mubr.bf16.mxu0 0
      %3328 = vmatmul.mubr.bf16.gmra.mrb[0].mxu0 %v3223
      %v3329 = vpop.f32.mrb[0].mxu0
      %v3330 = vadd.f32 %v3198, %v3329
      %v3331 = vpop.f32.mrb[0].mxu0
      %v3332 = vpop.f32.mrb[0].mxu0
      %v3333 = vadd.f32 %v3198, %v3332
      %v3334 = vpop.f32.mrb[0].mxu0
      %3335 = vmatprep.mubr.bf16.mxu0 0
      %3336 = vmatmul.mubr.bf16.gmra.mrb[0].mxu0 %v3226
      %v3337 = vpop.f32.mrb[0].mxu0
      %v3338 = vadd.f32 %v3198, %v3337
      %v3339 = vpop.f32.mrb[0].mxu0
      %v3340 = vpop.f32.mrb[0].mxu0
      %v3341 = vadd.f32 %v3198, %v3340
      %v3342 = vpop.f32.mrb[0].mxu0
      %3343 = vmatprep.mubr.bf16.mxu0 0
      %3344 = vmatmul.mubr.bf16.gmra.mrb[0].mxu0 %v3229
      %v3345 = vpop.f32.mrb[0].mxu0
      %v3346 = vadd.f32 %v3198, %v3345
      %v3347 = vpop.f32.mrb[0].mxu0
      %v3348 = vpop.f32.mrb[0].mxu0
      %v3349 = vadd.f32 %v3198, %v3348
      %v3350 = vpop.f32.mrb[0].mxu0
      %3351 = vmatprep.mubr.bf16.mxu0 0
      %3352 = vmatmul.mubr.bf16.gmra.mrb[0].mxu0 %v3232
      %v3353 = vpop.f32.mrb[0].mxu0
      %v3354 = vadd.f32 %v3198, %v3353
      %v3355 = vpop.f32.mrb[0].mxu0
      %v3356 = vpop.f32.mrb[0].mxu0
      %v3357 = vadd.f32 %v3198, %v3356
      %v3358 = vpop.f32.mrb[0].mxu0
      %3359 = vmatprep.mubr.bf16.mxu0 0
      %3360 = vmatmul.mubr.bf16.gmra.mrb[0].mxu0 %v3235
      %v3361 = vpop.f32.mrb[0].mxu0
      %v3362 = vadd.f32 %v3198, %v3361
      %v3363 = vpop.f32.mrb[0].mxu0
      %v3364 = vpop.f32.mrb[0].mxu0
      %v3365 = vadd.f32 %v3198, %v3364
      %v3366 = vpop.f32.mrb[0].mxu0
      %3367 = vmatprep.mubr.bf16.mxu0 0
      %3368 = vmatmul.mubr.bf16.gmra.mrb[0].mxu0 %v3238
      %v3369 = vpop.f32.mrb[0].mxu0
      %v3370 = vadd.f32 %v3198, %v3369
      %v3371 = vpop.f32.mrb[0].mxu0
      %v3372 = vpop.f32.mrb[0].mxu0
      %v3373 = vadd.f32 %v3198, %v3372
      %v3374 = vpop.f32.mrb[0].mxu0
      %3375 = vmatprep.mubr.bf16.mxu0 0
      %3376 = vmatmul.mubr.bf16.gmra.mrb[0].mxu0 %v3241
      %v3377 = vpop.f32.mrb[0].mxu0
      %v3378 = vadd.f32 %v3198, %v3377
      %v3379 = vpop.f32.mrb[0].mxu0
      %v3380 = vpop.f32.mrb[0].mxu0
      %v3381 = vadd.f32 %v3198, %v3380
      %v3382 = vpop.f32.mrb[0].mxu0
      %3383 = vmatprep.mubr.bf16.mxu0 0
      %3384 = vmatmul.mubr.bf16.gmra.mrb[0].mxu0 %v3244
      %v3385 = vpop.f32.mrb[0].mxu0
      %v3386 = vadd.f32 %v3198, %v3385
      %v3387 = vpop.f32.mrb[0].mxu0
      %v3388 = vpop.f32.mrb[0].mxu0
      %v3389 = vadd.f32 %v3198, %v3388
      %v3390 = vpop.f32.mrb[0].mxu0
      %3391 = vmatprep.mubr.bf16.mxu0 0
      %3392 = vmatmul.mubr.bf16.gmra.mrb[0].mxu0 %v3247
      %v3393 = vpop.f32.mrb[0].mxu0
      %v3394 = vadd.f32 %v3198, %v3393
      %v3395 = vpop.f32.mrb[0].mxu0
      %v3396 = vpop.f32.mrb[0].mxu0
      %v3397 = vadd.f32 %v3198, %v3396
      %v3398 = vpop.f32.mrb[0].mxu0
      %3399 = vmatprep.mubr.bf16.mxu0 0
      %3400 = vmatmul.mubr.bf16.gmra.mrb[0].mxu0 %v3250
      %v3401 = vpop.f32.mrb[0].mxu0
      %v3402 = vadd.f32 %v3198, %v3401
      %v3403 = vpop.f32.mrb[0].mxu0
      %v3404 = vpop.f32.mrb[0].mxu0
      %v3405 = vadd.f32 %v3198, %v3404
      %v3406 = vpop.f32.mrb[0].mxu0
      %3407 = vmatprep.mubr.bf16.mxu0 0
      %3408 = vmatmul.mubr.bf16.gmra.mrb[0].mxu0 %v3253
      %v3409 = vpop.f32.mrb[0].mxu0
      %v3410 = vadd.f32 %v3198, %v3409
      %v3411 = vpop.f32.mrb[0].mxu0
      %v3412 = vpop.f32.mrb[0].mxu0
      %v3413 = vadd.f32 %v3198, %v3412
      %v3414 = vpop.f32.mrb[0].mxu0
      %3415 = vdwg.mxu0
      %v3416 = vadd.f32 %v3290, %v2863
      %v3417 = vadd.f32 %v3293, %v2864
      %v3418 = vadd.f32 %v3298, %v2865
      %v3419 = vadd.f32 %v3301, %v2866
      %v3420 = vadd.f32 %v3306, %v2867
      %v3421 = vadd.f32 %v3309, %v2868
      %v3422 = vadd.f32 %v3314, %v2869
      %v3423 = vadd.f32 %v3317, %v2870
      %v3424 = vadd.f32 %v3322, %v2871
      %v3425 = vadd.f32 %v3325, %v2872
      %v3426 = vadd.f32 %v3330, %v2873
      %v3427 = vadd.f32 %v3333, %v2874
      %v3428 = vadd.f32 %v3338, %v2875
      %v3429 = vadd.f32 %v3341, %v2876
      %v3430 = vadd.f32 %v3346, %v2877
      %v3431 = vadd.f32 %v3349, %v2878
      %v3432 = vadd.f32 %v3354, %v2879
      %v3433 = vadd.f32 %v3357, %v2880
      %v3434 = vadd.f32 %v3362, %v2881
      %v3435 = vadd.f32 %v3365, %v2882
      %v3436 = vadd.f32 %v3370, %v2883
      %v3437 = vadd.f32 %v3373, %v2884
      %v3438 = vadd.f32 %v3378, %v2885
      %v3439 = vadd.f32 %v3381, %v2886
      %v3440 = vadd.f32 %v3386, %v2887
      %v3441 = vadd.f32 %v3389, %v2888
      %v3442 = vadd.f32 %v3394, %v2889
      %v3443 = vadd.f32 %v3397, %v2890
      %v3444 = vadd.f32 %v3402, %v2891
      %v3445 = vadd.f32 %v3405, %v2892
      %v3446 = vadd.f32 %v3410, %v2893
      %v3447 = vadd.f32 %v3413, %v2894
      %v3448 = vpack.c.bf16 %v3417, %v3416
      %v3449 = vpack.c.bf16 %v3419, %v3418
      %v3450 = vpack.c.bf16 %v3421, %v3420
      %v3451 = vpack.c.bf16 %v3423, %v3422
      %v3452 = vpack.c.bf16 %v3425, %v3424
      %v3453 = vpack.c.bf16 %v3427, %v3426
      %v3454 = vpack.c.bf16 %v3429, %v3428
      %v3455 = vpack.c.bf16 %v3431, %v3430
      %v3456 = vpack.c.bf16 %v3433, %v3432
      %v3457 = vpack.c.bf16 %v3435, %v3434
      %v3458 = vpack.c.bf16 %v3437, %v3436
      %v3459 = vpack.c.bf16 %v3439, %v3438
      %v3460 = vpack.c.bf16 %v3441, %v3440
      %v3461 = vpack.c.bf16 %v3443, %v3442
      %v3462 = vpack.c.bf16 %v3445, %v3444
      %v3463 = vpack.c.bf16 %v3447, %v3446
      %v3464 = vld [vmem:[%s10] sm:$0xf]
      %v3465 = vld [vmem:[%s10 + $0x4] sm:$0xf]
      %v3466 = vld [vmem:[%s10 + $0x8] sm:$0xf]
      %v3467 = vld [vmem:[%s10 + $0xc] sm:$0xf]
      %v3468 = vld [vmem:[%s11] sm:$0x1]
      %v3470 = vlaneseq
      %v3471 = vshrl.u32 %v3470, 7
      %v3472 = vsub.s32 0, %v3471
      %v3473 = vrot.slane %v3468, %v3472
      %v3479 = vunpack.c.l.b16 %v3464
      %v3480 = vunpack.c.l.b16 %v3465
      %v3481 = vunpack.c.l.b16 %v3466
      %v3482 = vunpack.c.l.b16 %v3467
      %v3483 = vpack.c.b16 %v3480, %v3479
      %v3484 = vpack.c.b16 %v3482, %v3481
      %v3488 = vsel %vm1470, %v3448, 0
      %v3491 = vsel %vm1470, %v3449, 0
      %v3494 = vsel %vm1470, %v3450, 0
      %v3497 = vsel %vm1470, %v3451, 0
      %v3500 = vsel %vm1470, %v3452, 0
      %v3503 = vsel %vm1470, %v3453, 0
      %v3506 = vsel %vm1470, %v3454, 0
      %v3509 = vsel %vm1470, %v3455, 0
      %v3512 = vsel %vm1470, %v3456, 0
      %v3515 = vsel %vm1470, %v3457, 0
      %v3518 = vsel %vm1470, %v3458, 0
      %v3521 = vsel %vm1470, %v3459, 0
      %v3524 = vsel %vm1470, %v3460, 0
      %v3527 = vsel %vm1470, %v3461, 0
      %v3530 = vsel %vm1470, %v3462, 0
      %v3533 = vsel %vm1470, %v3463, 0
      %3535 = vmatprep.subr.bf16.mxu0 0
      %3536 = vmatpush1.bf16.msra.mxu0 %v3483
      %3537 = vmatprep.subr.bf16.mxu0 0
      %3538 = vmatpush1.bf16.msra.mxu0 %v3484
      %3539 = vmatprep.subr.bf16.mxu0 0
      %3540 = vmatpush1.bf16.msra.mxu0 0
      %3541 = vmatprep.subr.bf16.mxu0 0
      %3542 = vmatpush1.bf16.msra.mxu0 0
      %3543 = vmatprep.subr.bf16.mxu0 0
      %3544 = vmatpush1.bf16.msra.mxu0 0
      %3545 = vmatprep.subr.bf16.mxu0 0
      %3546 = vmatpush1.bf16.msra.mxu0 0
      %3547 = vmatprep.subr.bf16.mxu0 0
      %3548 = vmatpush1.bf16.msra.mxu0 0
      %3549 = vmatprep.subr.bf16.mxu0 0
      %3550 = vmatpush1.bf16.msra.mxu0 0
      %3551 = vmatprep.subr.bf16.mxu0 0
      %3552 = vmatpush1.bf16.msra.mxu0 0
      %3553 = vmatprep.subr.bf16.mxu0 0
      %3554 = vmatpush1.bf16.msra.mxu0 0
      %3555 = vmatprep.subr.bf16.mxu0 0
      %3556 = vmatpush1.bf16.msra.mxu0 0
      %3557 = vmatprep.subr.bf16.mxu0 0
      %3558 = vmatpush1.bf16.msra.mxu0 0
      %3559 = vmatprep.subr.bf16.mxu0 0
      %3560 = vmatpush1.bf16.msra.mxu0 0
      %3561 = vmatprep.subr.bf16.mxu0 0
      %3562 = vmatpush1.bf16.msra.mxu0 0
      %3563 = vmatprep.subr.bf16.mxu0 0
      %3564 = vmatpush1.bf16.msra.mxu0 0
      %3565 = vmatprep.subr.bf16.mxu0 0
      %3566 = vmatpush1.bf16.msra.mxu0 0
      %3567 = vmatprep.mubr.bf16.mxu0 0
      %3568 = vmatmul.mubr.bf16.gmra.mrb[0].mxu0 %v3488
      %v3569 = vpop.f32.mrb[0].mxu0
      %v3570 = vadd.f32 %v3473, %v3569
      %v3571 = vpop.f32.mrb[0].mxu0
      %v3572 = vpop.f32.mrb[0].mxu0
      %v3573 = vadd.f32 %v3473, %v3572
      %v3574 = vpop.f32.mrb[0].mxu0
      %3575 = vmatprep.mubr.bf16.mxu0 0
      %3576 = vmatmul.mubr.bf16.gmra.mrb[0].mxu0 %v3491
      %v3577 = vpop.f32.mrb[0].mxu0
      %v3578 = vadd.f32 %v3473, %v3577
      %v3579 = vpop.f32.mrb[0].mxu0
      %v3580 = vpop.f32.mrb[0].mxu0
      %v3581 = vadd.f32 %v3473, %v3580
      %v3582 = vpop.f32.mrb[0].mxu0
      %3583 = vmatprep.mubr.bf16.mxu0 0
      %3584 = vmatmul.mubr.bf16.gmra.mrb[0].mxu0 %v3494
      %v3585 = vpop.f32.mrb[0].mxu0
      %v3586 = vadd.f32 %v3473, %v3585
      %v3587 = vpop.f32.mrb[0].mxu0
      %v3588 = vpop.f32.mrb[0].mxu0
      %v3589 = vadd.f32 %v3473, %v3588
      %v3590 = vpop.f32.mrb[0].mxu0
      %3591 = vmatprep.mubr.bf16.mxu0 0
      %3592 = vmatmul.mubr.bf16.gmra.mrb[0].mxu0 %v3497
      %v3593 = vpop.f32.mrb[0].mxu0
      %v3594 = vadd.f32 %v3473, %v3593
      %v3595 = vpop.f32.mrb[0].mxu0
      %v3596 = vpop.f32.mrb[0].mxu0
      %v3597 = vadd.f32 %v3473, %v3596
      %v3598 = vpop.f32.mrb[0].mxu0
      %3599 = vmatprep.mubr.bf16.mxu0 0
      %3600 = vmatmul.mubr.bf16.gmra.mrb[0].mxu0 %v3500
      %v3601 = vpop.f32.mrb[0].mxu0
      %v3602 = vadd.f32 %v3473, %v3601
      %v3603 = vpop.f32.mrb[0].mxu0
      %v3604 = vpop.f32.mrb[0].mxu0
      %v3605 = vadd.f32 %v3473, %v3604
      %v3606 = vpop.f32.mrb[0].mxu0
      %3607 = vmatprep.mubr.bf16.mxu0 0
      %3608 = vmatmul.mubr.bf16.gmra.mrb[0].mxu0 %v3503
      %v3609 = vpop.f32.mrb[0].mxu0
      %v3610 = vadd.f32 %v3473, %v3609
      %v3611 = vpop.f32.mrb[0].mxu0
      %v3612 = vpop.f32.mrb[0].mxu0
      %v3613 = vadd.f32 %v3473, %v3612
      %v3614 = vpop.f32.mrb[0].mxu0
      %3615 = vmatprep.mubr.bf16.mxu0 0
      %3616 = vmatmul.mubr.bf16.gmra.mrb[0].mxu0 %v3506
      %v3617 = vpop.f32.mrb[0].mxu0
      %v3618 = vadd.f32 %v3473, %v3617
      %v3619 = vpop.f32.mrb[0].mxu0
      %v3620 = vpop.f32.mrb[0].mxu0
      %v3621 = vadd.f32 %v3473, %v3620
      %v3622 = vpop.f32.mrb[0].mxu0
      %3623 = vmatprep.mubr.bf16.mxu0 0
      %3624 = vmatmul.mubr.bf16.gmra.mrb[0].mxu0 %v3509
      %v3625 = vpop.f32.mrb[0].mxu0
      %v3626 = vadd.f32 %v3473, %v3625
      %v3627 = vpop.f32.mrb[0].mxu0
      %v3628 = vpop.f32.mrb[0].mxu0
      %v3629 = vadd.f32 %v3473, %v3628
      %v3630 = vpop.f32.mrb[0].mxu0
      %3631 = vmatprep.mubr.bf16.mxu0 0
      %3632 = vmatmul.mubr.bf16.gmra.mrb[0].mxu0 %v3512
      %v3633 = vpop.f32.mrb[0].mxu0
      %v3634 = vadd.f32 %v3473, %v3633
      %v3635 = vpop.f32.mrb[0].mxu0
      %v3636 = vpop.f32.mrb[0].mxu0
      %v3637 = vadd.f32 %v3473, %v3636
      %v3638 = vpop.f32.mrb[0].mxu0
      %3639 = vmatprep.mubr.bf16.mxu0 0
      %3640 = vmatmul.mubr.bf16.gmra.mrb[0].mxu0 %v3515
      %v3641 = vpop.f32.mrb[0].mxu0
      %v3642 = vadd.f32 %v3473, %v3641
      %v3643 = vpop.f32.mrb[0].mxu0
      %v3644 = vpop.f32.mrb[0].mxu0
      %v3645 = vadd.f32 %v3473, %v3644
      %v3646 = vpop.f32.mrb[0].mxu0
      %3647 = vmatprep.mubr.bf16.mxu0 0
      %3648 = vmatmul.mubr.bf16.gmra.mrb[0].mxu0 %v3518
      %v3649 = vpop.f32.mrb[0].mxu0
      %v3650 = vadd.f32 %v3473, %v3649
      %v3651 = vpop.f32.mrb[0].mxu0
      %v3652 = vpop.f32.mrb[0].mxu0
      %v3653 = vadd.f32 %v3473, %v3652
      %v3654 = vpop.f32.mrb[0].mxu0
      %3655 = vmatprep.mubr.bf16.mxu0 0
      %3656 = vmatmul.mubr.bf16.gmra.mrb[0].mxu0 %v3521
      %v3657 = vpop.f32.mrb[0].mxu0
      %v3658 = vadd.f32 %v3473, %v3657
      %v3659 = vpop.f32.mrb[0].mxu0
      %v3660 = vpop.f32.mrb[0].mxu0
      %v3661 = vadd.f32 %v3473, %v3660
      %v3662 = vpop.f32.mrb[0].mxu0
      %3663 = vmatprep.mubr.bf16.mxu0 0
      %3664 = vmatmul.mubr.bf16.gmra.mrb[0].mxu0 %v3524
      %v3665 = vpop.f32.mrb[0].mxu0
      %v3666 = vadd.f32 %v3473, %v3665
      %v3667 = vpop.f32.mrb[0].mxu0
      %v3668 = vpop.f32.mrb[0].mxu0
      %v3669 = vadd.f32 %v3473, %v3668
      %v3670 = vpop.f32.mrb[0].mxu0
      %3671 = vmatprep.mubr.bf16.mxu0 0
      %3672 = vmatmul.mubr.bf16.gmra.mrb[0].mxu0 %v3527
      %v3673 = vpop.f32.mrb[0].mxu0
      %v3674 = vadd.f32 %v3473, %v3673
      %v3675 = vpop.f32.mrb[0].mxu0
      %v3676 = vpop.f32.mrb[0].mxu0
      %v3677 = vadd.f32 %v3473, %v3676
      %v3678 = vpop.f32.mrb[0].mxu0
      %3679 = vmatprep.mubr.bf16.mxu0 0
      %3680 = vmatmul.mubr.bf16.gmra.mrb[0].mxu0 %v3530
      %v3681 = vpop.f32.mrb[0].mxu0
      %v3682 = vadd.f32 %v3473, %v3681
      %v3683 = vpop.f32.mrb[0].mxu0
      %v3684 = vpop.f32.mrb[0].mxu0
      %v3685 = vadd.f32 %v3473, %v3684
      %v3686 = vpop.f32.mrb[0].mxu0
      %3687 = vmatprep.mubr.bf16.mxu0 0
      %3688 = vmatmul.mubr.bf16.gmra.mrb[0].mxu0 %v3533
      %v3689 = vpop.f32.mrb[0].mxu0
      %v3690 = vadd.f32 %v3473, %v3689
      %v3691 = vpop.f32.mrb[0].mxu0
      %v3692 = vpop.f32.mrb[0].mxu0
      %v3693 = vadd.f32 %v3473, %v3692
      %v3694 = vpop.f32.mrb[0].mxu0
      %3695 = vdwg.mxu0
      %v3696 = vpack.c.bf16 %v3573, %v3570
      %v3697 = vpack.c.bf16 %v3581, %v3578
      %v3698 = vpack.c.bf16 %v3589, %v3586
      %v3699 = vpack.c.bf16 %v3597, %v3594
      %v3700 = vpack.c.bf16 %v3605, %v3602
      %v3701 = vpack.c.bf16 %v3613, %v3610
      %v3702 = vpack.c.bf16 %v3621, %v3618
      %v3703 = vpack.c.bf16 %v3629, %v3626
      %v3704 = vpack.c.bf16 %v3637, %v3634
      %v3705 = vpack.c.bf16 %v3645, %v3642
      %v3706 = vpack.c.bf16 %v3653, %v3650
      %v3707 = vpack.c.bf16 %v3661, %v3658
      %v3708 = vpack.c.bf16 %v3669, %v3666
      %v3709 = vpack.c.bf16 %v3677, %v3674
      %v3710 = vpack.c.bf16 %v3685, %v3682
      %v3711 = vpack.c.bf16 %v3693, %v3690
      %v3728 = vunpack.c.l.b16 %v3696
      %v3729 = vunpack.c.h.b16 %v3696
      %v3730 = vunpack.c.l.b16 %v3697
      %v3731 = vunpack.c.h.b16 %v3697
      %v3732 = vunpack.c.l.b16 %v3698
      %v3733 = vunpack.c.h.b16 %v3698
      %v3734 = vunpack.c.l.b16 %v3699
      %v3735 = vunpack.c.h.b16 %v3699
      %v3736 = vunpack.c.l.b16 %v3700
      %v3737 = vunpack.c.h.b16 %v3700
      %v3738 = vunpack.c.l.b16 %v3701
      %v3739 = vunpack.c.h.b16 %v3701
      %v3740 = vunpack.c.l.b16 %v3702
      %v3741 = vunpack.c.h.b16 %v3702
      %v3742 = vunpack.c.l.b16 %v3703
      %v3743 = vunpack.c.h.b16 %v3703
      %v3744 = vunpack.c.l.b16 %v3704
      %v3745 = vunpack.c.h.b16 %v3704
      %v3746 = vunpack.c.l.b16 %v3705
      %v3747 = vunpack.c.h.b16 %v3705
      %v3748 = vunpack.c.l.b16 %v3706
      %v3749 = vunpack.c.h.b16 %v3706
      %v3750 = vunpack.c.l.b16 %v3707
      %v3751 = vunpack.c.h.b16 %v3707
      %v3752 = vunpack.c.l.b16 %v3708
      %v3753 = vunpack.c.h.b16 %v3708
      %v3754 = vunpack.c.l.b16 %v3709
      %v3755 = vunpack.c.h.b16 %v3709
      %v3756 = vunpack.c.l.b16 %v3710
      %v3757 = vunpack.c.h.b16 %v3710
      %v3758 = vunpack.c.l.b16 %v3711
      %v3759 = vunpack.c.h.b16 %v3711
      %v3760 = vpack.c.b16 %v3728, %v3728
      %v3761 = vpack.c.b16 %v3729, %v3729
      %v3762 = vpack.c.b16 %v3730, %v3730
      %v3763 = vpack.c.b16 %v3731, %v3731
      %v3764 = vpack.c.b16 %v3732, %v3732
      %v3765 = vpack.c.b16 %v3733, %v3733
      %v3766 = vpack.c.b16 %v3734, %v3734
      %v3767 = vpack.c.b16 %v3735, %v3735
      %v3768 = vpack.c.b16 %v3736, %v3736
      %v3769 = vpack.c.b16 %v3737, %v3737
      %v3770 = vpack.c.b16 %v3738, %v3738
      %v3771 = vpack.c.b16 %v3739, %v3739
      %v3772 = vpack.c.b16 %v3740, %v3740
      %v3773 = vpack.c.b16 %v3741, %v3741
      %v3774 = vpack.c.b16 %v3742, %v3742
      %v3775 = vpack.c.b16 %v3743, %v3743
      %v3776 = vpack.c.b16 %v3744, %v3744
      %v3777 = vpack.c.b16 %v3745, %v3745
      %v3778 = vpack.c.b16 %v3746, %v3746
      %v3779 = vpack.c.b16 %v3747, %v3747
      %v3780 = vpack.c.b16 %v3748, %v3748
      %v3781 = vpack.c.b16 %v3749, %v3749
      %v3782 = vpack.c.b16 %v3750, %v3750
      %v3783 = vpack.c.b16 %v3751, %v3751
      %v3784 = vpack.c.b16 %v3752, %v3752
      %v3785 = vpack.c.b16 %v3753, %v3753
      %v3786 = vpack.c.b16 %v3754, %v3754
      %v3787 = vpack.c.b16 %v3755, %v3755
      %v3788 = vpack.c.b16 %v3756, %v3756
      %v3789 = vpack.c.b16 %v3757, %v3757
      %v3790 = vpack.c.b16 %v3758, %v3758
      %v3791 = vpack.c.b16 %v3759, %v3759
      %vm3824 = vcmask 519168
      %3825 = vst.msk [vmem:[%s12] sm:$0xf] %vm3824, %v3760
      %3826 = vst.msk [vmem:[%s12 + $0x4] sm:$0xf] %vm3824, %v3761
      %3827 = vst.msk [vmem:[%s12 + $0x8] sm:$0xf] %vm3824, %v3762
      %3828 = vst.msk [vmem:[%s12 + $0xc] sm:$0xf] %vm3824, %v3763
      %3829 = vst.msk [vmem:[%s12 + $0x10] sm:$0xf] %vm3824, %v3764
      %3830 = vst.msk [vmem:[%s12 + $0x14] sm:$0xf] %vm3824, %v3765
      %3831 = vst.msk [vmem:[%s12 + $0x18] sm:$0xf] %vm3824, %v3766
      %3832 = vst.msk [vmem:[%s12 + $0x1c] sm:$0xf] %vm3824, %v3767
      %3833 = vst.msk [vmem:[%s12 + $0x20] sm:$0xf] %vm3824, %v3768
      %3834 = vst.msk [vmem:[%s12 + $0x24] sm:$0xf] %vm3824, %v3769
      %3835 = vst.msk [vmem:[%s12 + $0x28] sm:$0xf] %vm3824, %v3770
      %3836 = vst.msk [vmem:[%s12 + $0x2c] sm:$0xf] %vm3824, %v3771
      %3837 = vst.msk [vmem:[%s12 + $0x30] sm:$0xf] %vm3824, %v3772
      %3838 = vst.msk [vmem:[%s12 + $0x34] sm:$0xf] %vm3824, %v3773
      %3839 = vst.msk [vmem:[%s12 + $0x38] sm:$0xf] %vm3824, %v3774
      %3840 = vst.msk [vmem:[%s12 + $0x3c] sm:$0xf] %vm3824, %v3775
      %3841 = vst.msk [vmem:[%s12 + $0x40] sm:$0xf] %vm3824, %v3776
      %3842 = vst.msk [vmem:[%s12 + $0x44] sm:$0xf] %vm3824, %v3777
      %3843 = vst.msk [vmem:[%s12 + $0x48] sm:$0xf] %vm3824, %v3778
      %3844 = vst.msk [vmem:[%s12 + $0x4c] sm:$0xf] %vm3824, %v3779
      %3845 = vst.msk [vmem:[%s12 + $0x50] sm:$0xf] %vm3824, %v3780
      %3846 = vst.msk [vmem:[%s12 + $0x54] sm:$0xf] %vm3824, %v3781
      %3847 = vst.msk [vmem:[%s12 + $0x58] sm:$0xf] %vm3824, %v3782
      %3848 = vst.msk [vmem:[%s12 + $0x5c] sm:$0xf] %vm3824, %v3783
      %3849 = vst.msk [vmem:[%s12 + $0x60] sm:$0xf] %vm3824, %v3784
      %3850 = vst.msk [vmem:[%s12 + $0x64] sm:$0xf] %vm3824, %v3785
      %3851 = vst.msk [vmem:[%s12 + $0x68] sm:$0xf] %vm3824, %v3786
      %3852 = vst.msk [vmem:[%s12 + $0x6c] sm:$0xf] %vm3824, %v3787
      %3853 = vst.msk [vmem:[%s12 + $0x70] sm:$0xf] %vm3824, %v3788
      %3854 = vst.msk [vmem:[%s12 + $0x74] sm:$0xf] %vm3824, %v3789
      %3855 = vst.msk [vmem:[%s12 + $0x78] sm:$0xf] %vm3824, %v3790
      %3856 = vst.msk [vmem:[%s12 + $0x7c] sm:$0xf] %vm3824, %v3791
    $region61: #{tpu_custom_call.1} parent=1 // pred_fallthru
      _
    // Predicated region
    $region62: #{tpu_custom_call.1} parent=1 // pred_check
      _
    $region63: #{tpu_custom_call.1} parent=1 // pred_check_branch
      %3858 = sbr.rel (0) target = $region65
    $region64: #{tpu_custom_call.1} parent=1 // pred_region
      _
    $region65: #{tpu_custom_call.1} parent=1 // pred_fallthru
      _
    // Predicated region
    $region66: #{tpu_custom_call.1} parent=1 // pred_check
      _
    $region67: #{tpu_custom_call.1} parent=1 // pred_check_branch
      %3860 = sbr.rel (0) target = $region69
    $region68: #{tpu_custom_call.1} parent=1 // pred_region
      _
    $region69: #{tpu_custom_call.1} parent=1 // pred_fallthru
      _
    %3861 = vsyncpa [#allocation4], 1

</llo_original>
